<compile_context>
chip_gen: v5e
topology: v5e:2x2
jax: 0.10.0
libtpu: 0.0.40
codegen_flags: <defaults>
</compile_context>

<pallas_src>
import numpy as np
import jax
import jax.numpy as jnp
from jax import lax
from jax.experimental import pallas as pl
from jax.experimental.pallas import tpu as pltpu


# ----------------------------------------------------------------------------
# Config (depth = len(down_ch) + 1 = 2)
# ----------------------------------------------------------------------------
CFG = dict(
    in_ch=4, first_ch=8, down_ch=[16], middle_ch=32, up_ch=[16], last_ch=8,
    mode=["bilinear", "bilinear"],
    in_drop_value=0, down_drop_values=[0, 0], up_drop_values=[0, 0],
)

_LANE = 128   # TPU lane width
_SUB = 8      # TPU sublane width


def _round_up(v, m):
    return -(-v // m) * m


def _level_dims(cfg, n, h0, w0):
    """[(H, W, L_pad)] per UNet level (0 = full resolution)."""
    depth = len(cfg["down_ch"]) + 1
    dims = []
    h, w = h0, w0
    for _ in range(depth + 1):
        dims.append((h, w, _round_up(n * h * w, _LANE)))
        h //= 2
        w //= 2
    return dims


# ----------------------------------------------------------------------------
# Host-side constant builders (interp / pooling matrices, boundary masks)
# ----------------------------------------------------------------------------
def _interp_matrix_1d(out_size, in_size):
    """1-D PyTorch F.interpolate 'bilinear' with align_corners=True."""
    m = np.zeros((out_size, in_size), np.float32)
    if in_size == 1 or out_size == 1:
        m[:, 0] = 1.0   # TODO(synk): degenerate sizes not exercised by config.
        return m
    coords = np.arange(out_size, dtype=np.float64) * (in_size - 1) / (out_size - 1)
    lo = np.clip(np.floor(coords).astype(np.int64), 0, in_size - 2)
    frac = (coords - lo).astype(np.float32)
    m[np.arange(out_size), lo] = 1.0 - frac
    m[np.arange(out_size), lo + 1] += frac
    return m


def _tap_masks(n, h, w, l_pad):
    """(9, L) 0/1 masks: is tap (dy,dx) in-bounds at flattened lane (n,y,x)."""
    l = np.arange(l_pad)
    x = l % w
    y = (l // w) % h
    masks = np.zeros((9, l_pad), np.float32)
    for k in range(9):
        dy, dx = divmod(k, 3)
        yy, xx = y + dy - 1, x + dx - 1
        masks[k] = ((yy >= 0) & (yy < h) & (xx >= 0) & (xx < w)).astype(np.float32)
    return masks


def _pool_select_matrix(n, h, w, l_in_pad, l_out_pad):
    """(L_in, L_out) 0/1 matrix selecting the top-left lane of each 2x2 window."""
    ho, wo = h // 2, w // 2
    s = np.zeros((l_in_pad, l_out_pad), np.float32)
    for b in range(n):
        for yo in range(ho):
            for xo in range(wo):
                s[b * h * w + 2 * yo * w + 2 * xo,
                  b * ho * wo + yo * wo + xo] = 1.0
    return s


def _upsample_matrix(n, h_in, w_in, h_out, w_out, l_in_pad, l_out_pad):
    """(L_in, L_out) block-diagonal bilinear (align_corners=True) operator."""
    blk = np.kron(_interp_matrix_1d(h_out, h_in),
                  _interp_matrix_1d(w_out, w_in)).T   # (h_in*w_in, h_out*w_out)
    u = np.zeros((l_in_pad, l_out_pad), np.float32)
    for b in range(n):
        u[b * h_in * w_in:(b + 1) * h_in * w_in,
          b * h_out * w_out:(b + 1) * h_out * w_out] = blk
    return u


# ----------------------------------------------------------------------------
# Parameters (deterministic synthetic init, PyTorch layouts: OIHW conv weights)
# ----------------------------------------------------------------------------
def _conv_bn_params(key, cin, cout):
    kw, kg, kb, km, kv = jax.random.split(key, 5)
    w = jax.random.normal(kw, (cout, cin, 3, 3), jnp.float32) / np.sqrt(9.0 * cin)
    gamma = 1.0 + 0.1 * jax.random.normal(kg, (cout,), jnp.float32)
    beta = 0.1 * jax.random.normal(kb, (cout,), jnp.float32)
    mean = 0.1 * jax.random.normal(km, (cout,), jnp.float32)
    var = 1.0 + 0.1 * jnp.abs(jax.random.normal(kv, (cout,), jnp.float32))
    scale = gamma / jnp.sqrt(var + 1e-5)      # folded eval-mode BatchNorm
    shift = beta - mean * scale
    return {"w": w, "scale": scale, "shift": shift}


def _double_conv_params(key, cin, cout):
    k1, k2 = jax.random.split(key)
    return (_conv_bn_params(k1, cin, cout), _conv_bn_params(k2, cout, cout))


def init_params(key, cfg):
    down_chnls = [cfg["first_ch"]] + cfg["down_ch"] + [cfg["middle_ch"]]
    up_chnls = [cfg["middle_ch"]] + cfg["up_ch"] + [cfg["last_ch"]]
    skip_chnls = cfg["down_ch"][::-1] + [cfg["first_ch"]]
    depth = len(down_chnls) - 1
    keys = iter(jax.random.split(key, 2 * depth + 4))
    return {
        "in_dc": _double_conv_params(next(keys), cfg["in_ch"], cfg["first_ch"]),
        "down_dcs": [_double_conv_params(next(keys), down_chnls[i], down_chnls[i + 1])
                     for i in range(depth)],
        "up_dcs": [_double_conv_params(next(keys), up_chnls[i] + skip_chnls[i],
                                       up_chnls[i + 1])
                   for i in range(depth)],
        "final_w": 0.3 * jax.random.normal(next(keys), (1, cfg["last_ch"]), jnp.float32),
        "final_b": 0.1 * jax.random.normal(next(keys), (1,), jnp.float32),
    }


# ----------------------------------------------------------------------------
# Kernel-layout parameter preparation (host side, done once)
# ----------------------------------------------------------------------------
def _wflat(w_oihw, cin_pad=None):
    """PyTorch OIHW (Cout,Cin,3,3) -> (Cout, 9*Cin), tap-major / channel-minor,
    matching the in-kernel im2col row order (row = (dy*3+dx)*Cin + c)."""
    cout, cin = w_oihw.shape[:2]
    w = jnp.transpose(w_oihw, (0, 2, 3, 1))               # (Cout, 3, 3, Cin)
    if cin_pad is not None and cin_pad > cin:
        w = jnp.pad(w, ((0, 0), (0, 0), (0, 0), (0, cin_pad - cin)))
    return w.reshape(cout, -1)


def _col(v):
    return v.reshape(-1, 1)


def build_kernel_inputs(params, cfg, n, h0, w0):
    dims = _level_dims(cfg, n, h0, w0)
    depth = len(dims) - 1
    cin_pad = _round_up(cfg["in_ch"], _SUB)
    up_chnls = [cfg["middle_ch"]] + cfg["up_ch"] + [cfg["last_ch"]]

    arrs = {}
    for lvl, (h, w, l_pad) in enumerate(dims):
        arrs[f"M{lvl}"] = jnp.asarray(_tap_masks(n, h, w, l_pad))
    for i in range(depth):
        h, w, l_in = dims[i]
        arrs[f"S{i}"] = jnp.asarray(_pool_select_matrix(n, h, w, l_in, dims[i + 1][2]))
    for i in range(depth):
        hs, ws, ls = dims[depth - i]
        hd, wd, ld = dims[depth - i - 1]
        arrs[f"U{i}"] = jnp.asarray(_upsample_matrix(n, hs, ws, hd, wd, ls, ld))

    def put_dc(prefix, dc, cin_pad_first=None, split_first=None):
        c1, c2 = dc
        if split_first is None:
            arrs[f"{prefix}_w1"] = _wflat(c1["w"], cin_pad_first)
        else:  # decoder: split along Cin so torch.cat is never materialised
            arrs[f"{prefix}_w1u"] = _wflat(c1["w"][:, :split_first])
            arrs[f"{prefix}_w1s"] = _wflat(c1["w"][:, split_first:])
        arrs[f"{prefix}_s1"] = _col(c1["scale"])
        arrs[f"{prefix}_b1"] = _col(c1["shift"])
        arrs[f"{prefix}_w2"] = _wflat(c2["w"])
        arrs[f"{prefix}_s2"] = _col(c2["scale"])
        arrs[f"{prefix}_b2"] = _col(c2["shift"])

    put_dc("in", params["in_dc"], cin_pad_first=cin_pad)
    for i, dc in enumerate(params["down_dcs"]):
        put_dc(f"down{i}", dc)
    for i, dc in enumerate(params["up_dcs"]):
        put_dc(f"up{i}", dc, split_first=up_chnls[i])
    arrs["fin_w"] = params["final_w"]
    arrs["fin_b"] = params["final_b"].reshape(1, 1)
    return arrs


# ----------------------------------------------------------------------------
# The fused Pallas kernel
# ----------------------------------------------------------------------------
def make_kernel(names, dims):
    depth = len(dims) - 1

    def kernel(*refs):
        *ins, out_ref = refs
        r = dict(zip(names, ins))

        def gshift(a, s, l_pad):
            """b[:, l] = a[:, (l + s) mod L]   (static lane rotation on the XLU)."""
            amt = (-s) % l_pad
            if amt == 0:
                return a
            return pltpu.roll(a, shift=amt, axis=1)

        def conv_bn_relu(pieces, sname, bname, level):
            """3x3 conv (pad=1) + folded BN + ReLU as one K=9*Cin im2col matmul
            per piece; several pieces sum into the same output (decoder concat)."""
            _, w_img, l_pad = dims[level]
            mref = r[f"M{level}"]
            acc = None
            for act, wname in pieces:
                taps = []
                for k in range(9):
                    dy, dx = divmod(k, 3)
                    s = (dy - 1) * w_img + (dx - 1)
                    taps.append(gshift(act, s, l_pad) * mref[k:k + 1, :])
                patches = jnp.concatenate(taps, axis=0)        # (9*C, L)
                part = jnp.dot(r[wname][...], patches,
                               preferred_element_type=jnp.float32)
                acc = part if acc is None else acc + part
            y = acc * r[sname][...] + r[bname][...]            # (Cout, 1) broadcast
            return jnp.maximum(y, 0.0)

        def double_conv(prefix, first_pieces, level):
            h = conv_bn_relu(first_pieces, f"{prefix}_s1", f"{prefix}_b1", level)
            return conv_bn_relu([(h, f"{prefix}_w2")],
                                f"{prefix}_s2", f"{prefix}_b2", level)

        def maxpool2x2(act, level):
            """2x2/2 max pool: 3 lane rotations + max, then one selection matmul."""
            _, w_img, l_pad = dims[level]
            m = act
            for s in (1, w_img, w_img + 1):
                m = jnp.maximum(m, gshift(act, s, l_pad))
            return jnp.dot(m, r[f"S{level}"][...],
                           preferred_element_type=jnp.float32)

        # ------------------------------ encoder ------------------------------
        x = double_conv("in", [(r["x"][...], "in_w1")], 0)
        skips = []
        for i in range(depth):
            skips.append((x, i))
            x = maxpool2x2(x, i)
            x = double_conv(f"down{i}", [(x, f"down{i}_w1")], i + 1)
        skips = skips[::-1]

        # ------------------------------ decoder ------------------------------
        for i in range(depth):
            skip, lvl = skips[i]
            up = jnp.dot(x, r[f"U{i}"][...], preferred_element_type=jnp.float32)
            x = double_conv(f"up{i}",
                            [(up, f"up{i}_w1u"), (skip, f"up{i}_w1s")], lvl)

        # -------------------- final 1x1 conv (+bias), lane-dense -------------
        out_ref[...] = (jnp.dot(r["fin_w"][...], x,
                                preferred_element_type=jnp.float32)
                        + r["fin_b"][...])

    return kernel


# ----------------------------------------------------------------------------
# Public forward pass (matches MultiDepthUnet.forward(x, computed=False))
# ----------------------------------------------------------------------------
def multi_depth_unet_forward(kernel_inputs, x_nchw, cfg=CFG):
    n, cin, h0, w0 = x_nchw.shape
    dims = _level_dims(cfg, n, h0, w0)
    l0 = dims[0][2]
    cin_pad = _round_up(cin, _SUB)

    # NCHW -> lane-dense (C, N*H*W); pad channels to a sublane multiple.
    xf = jnp.transpose(x_nchw, (1, 0, 2, 3)).reshape(cin, n * h0 * w0)
    xf = jnp.pad(xf.astype(jnp.float32),
                 ((0, cin_pad - cin), (0, l0 - n * h0 * w0)))

    arrays = dict(kernel_inputs)
    arrays["x"] = xf
    names = sorted(arrays.keys())

    y = pl.pallas_call(
        make_kernel(names, dims),
        out_shape=jax.ShapeDtypeStruct((1, l0), jnp.float32),
        in_specs=[pl.BlockSpec(memory_space=pltpu.MemorySpace.VMEM)
                  for _ in names],
        out_specs=pl.BlockSpec(memory_space=pltpu.MemorySpace.VMEM),
    )(*(arrays[k] for k in names))

    return y[:, :n * h0 * w0].reshape(n, h0, w0)[:, None, :, :]


# ----------------------------------------------------------------------------
# Pure-JAX reference of the eval-mode PyTorch module (for in-script validation)
# ----------------------------------------------------------------------------
def reference_forward(params, x):
    hi = lax.Precision.HIGHEST

    def conv_bn_relu(x, p):
        y = lax.conv_general_dilated(
            x, p["w"], (1, 1), "SAME",
            dimension_numbers=("NCHW", "OIHW", "NCHW"), precision=hi)
        y = y * p["scale"][None, :, None, None] + p["shift"][None, :, None, None]
        return jnp.maximum(y, 0.0)

    def double_conv(x, dc):
        return conv_bn_relu(conv_bn_relu(x, dc[0]), dc[1])

    def maxpool(x):
        return lax.reduce_window(x, -jnp.inf, lax.max,
                                 (1, 1, 2, 2), (1, 1, 2, 2), "VALID")

    def upsample(x, hw):
        my = jnp.asarray(_interp_matrix_1d(hw[0], x.shape[2]))
        mx = jnp.asarray(_interp_matrix_1d(hw[1], x.shape[3]))
        return jnp.einsum("nchw,Hh,Ww->ncHW", x, my, mx, precision=hi)

    x = double_conv(x, params["in_dc"])
    skips = []
    for dc in params["down_dcs"]:
        skips.append(x)
        x = double_conv(maxpool(x), dc)
    for dc, skip in zip(params["up_dcs"], skips[::-1]):
        x = double_conv(
            jnp.concatenate([upsample(x, skip.shape[2:]), skip], axis=1), dc)
    return (jnp.einsum("oc,nchw->nohw", params["final_w"], x, precision=hi)
            + params["final_b"][None, :, None, None])


# ----------------------------------------------------------------------------
if __name__ == "__main__":
    key = jax.random.PRNGKey(0)
    kx, kp = jax.random.split(key)
    n, h0, w0 = 2, 16, 16
    x = jax.random.normal(kx, (n, CFG["in_ch"], h0, w0), jnp.float32)
    params = init_params(kp, CFG)
    kernel_inputs = build_kernel_inputs(params, CFG, n, h0, w0)

    fwd = jax.jit(multi_depth_unet_forward)
    out = jax.block_until_ready(fwd(kernel_inputs, x))

    assert out.shape == (n, 1, h0, w0), out.shape
    assert bool(jnp.all(jnp.isfinite(out)))

    ref = jax.block_until_ready(jax.jit(reference_forward)(params, x))
    rel_err = float(jnp.linalg.norm(out - ref) / (jnp.linalg.norm(ref) + 1e-12))
    assert rel_err < 1e-1, f"kernel vs reference mismatch: rel_err={rel_err:.3e}"

    print("KERNEL_OK")
</pallas_src>

<mosaic_0001>
module attributes {stable_mosaic.version = 11 : i64} {
  func.func @kernel(%arg0: memref<9x512xf32, #tpu.memory_space<vmem>>, %arg1: memref<9x128xf32, #tpu.memory_space<vmem>>, %arg2: memref<9x128xf32, #tpu.memory_space<vmem>>, %arg3: memref<512x128xf32, #tpu.memory_space<vmem>>, %arg4: memref<128x128xf32, #tpu.memory_space<vmem>>, %arg5: memref<128x128xf32, #tpu.memory_space<vmem>>, %arg6: memref<128x512xf32, #tpu.memory_space<vmem>>, %arg7: memref<16x1xf32, #tpu.memory_space<vmem>>, %arg8: memref<16x1xf32, #tpu.memory_space<vmem>>, %arg9: memref<16x1xf32, #tpu.memory_space<vmem>>, %arg10: memref<16x1xf32, #tpu.memory_space<vmem>>, %arg11: memref<16x72xf32, #tpu.memory_space<vmem>>, %arg12: memref<16x144xf32, #tpu.memory_space<vmem>>, %arg13: memref<32x1xf32, #tpu.memory_space<vmem>>, %arg14: memref<32x1xf32, #tpu.memory_space<vmem>>, %arg15: memref<32x1xf32, #tpu.memory_space<vmem>>, %arg16: memref<32x1xf32, #tpu.memory_space<vmem>>, %arg17: memref<32x144xf32, #tpu.memory_space<vmem>>, %arg18: memref<32x288xf32, #tpu.memory_space<vmem>>, %arg19: memref<1x1xf32, #tpu.memory_space<vmem>>, %arg20: memref<1x8xf32, #tpu.memory_space<vmem>>, %arg21: memref<8x1xf32, #tpu.memory_space<vmem>>, %arg22: memref<8x1xf32, #tpu.memory_space<vmem>>, %arg23: memref<8x1xf32, #tpu.memory_space<vmem>>, %arg24: memref<8x1xf32, #tpu.memory_space<vmem>>, %arg25: memref<8x72xf32, #tpu.memory_space<vmem>>, %arg26: memref<8x72xf32, #tpu.memory_space<vmem>>, %arg27: memref<16x1xf32, #tpu.memory_space<vmem>>, %arg28: memref<16x1xf32, #tpu.memory_space<vmem>>, %arg29: memref<16x1xf32, #tpu.memory_space<vmem>>, %arg30: memref<16x1xf32, #tpu.memory_space<vmem>>, %arg31: memref<16x144xf32, #tpu.memory_space<vmem>>, %arg32: memref<16x288xf32, #tpu.memory_space<vmem>>, %arg33: memref<16x144xf32, #tpu.memory_space<vmem>>, %arg34: memref<8x1xf32, #tpu.memory_space<vmem>>, %arg35: memref<8x1xf32, #tpu.memory_space<vmem>>, %arg36: memref<8x1xf32, #tpu.memory_space<vmem>>, %arg37: memref<8x1xf32, #tpu.memory_space<vmem>>, %arg38: memref<8x72xf32, #tpu.memory_space<vmem>>, %arg39: memref<8x144xf32, #tpu.memory_space<vmem>>, %arg40: memref<8x72xf32, #tpu.memory_space<vmem>>, %arg41: memref<8x512xf32, #tpu.memory_space<vmem>>, %arg42: memref<1x512xf32, #tpu.memory_space<vmem>>) attributes {dimension_semantics = [], scalar_prefetch = 0 : i64, scratch_operands = 0 : i64, tpu.core_type = #tpu.core_type<tc>} {
    %c0 = arith.constant 0 : index
    %c0_0 = arith.constant 0 : index
    %0 = vector.load %arg41[%c0, %c0_0] : memref<8x512xf32, #tpu.memory_space<vmem>>, vector<8x512xf32>
    %c17_i32 = arith.constant 17 : i32
    %1 = tpu.dynamic_rotate %0 by %c17_i32 dim 1 : vector<8x512xf32>, i32 -> vector<8x512xf32>
    %c0_1 = arith.constant 0 : index
    %c0_2 = arith.constant 0 : index
    %2 = vector.load %arg0[%c0_1, %c0_2] : memref<9x512xf32, #tpu.memory_space<vmem>>, vector<1x512xf32>
    %3 = vector.broadcast %2 : vector<1x512xf32> to vector<8x512xf32>
    %4 = arith.mulf %1, %3 : vector<8x512xf32>
    %c16_i32 = arith.constant 16 : i32
    %5 = tpu.dynamic_rotate %0 by %c16_i32 dim 1 : vector<8x512xf32>, i32 -> vector<8x512xf32>
    %c1 = arith.constant 1 : index
    %c0_3 = arith.constant 0 : index
    %6 = vector.load %arg0[%c1, %c0_3] : memref<9x512xf32, #tpu.memory_space<vmem>>, vector<1x512xf32>
    %7 = vector.broadcast %6 : vector<1x512xf32> to vector<8x512xf32>
    %8 = arith.mulf %5, %7 : vector<8x512xf32>
    %c15_i32 = arith.constant 15 : i32
    %9 = tpu.dynamic_rotate %0 by %c15_i32 dim 1 : vector<8x512xf32>, i32 -> vector<8x512xf32>
    %c2 = arith.constant 2 : index
    %c0_4 = arith.constant 0 : index
    %10 = vector.load %arg0[%c2, %c0_4] : memref<9x512xf32, #tpu.memory_space<vmem>>, vector<1x512xf32>
    %11 = vector.broadcast %10 : vector<1x512xf32> to vector<8x512xf32>
    %12 = arith.mulf %9, %11 : vector<8x512xf32>
    %c1_i32 = arith.constant 1 : i32
    %13 = tpu.dynamic_rotate %0 by %c1_i32 dim 1 : vector<8x512xf32>, i32 -> vector<8x512xf32>
    %c3 = arith.constant 3 : index
    %c0_5 = arith.constant 0 : index
    %14 = vector.load %arg0[%c3, %c0_5] : memref<9x512xf32, #tpu.memory_space<vmem>>, vector<1x512xf32>
    %15 = vector.broadcast %14 : vector<1x512xf32> to vector<8x512xf32>
    %16 = arith.mulf %13, %15 : vector<8x512xf32>
    %c4 = arith.constant 4 : index
    %c0_6 = arith.constant 0 : index
    %17 = vector.load %arg0[%c4, %c0_6] : memref<9x512xf32, #tpu.memory_space<vmem>>, vector<1x512xf32>
    %18 = vector.broadcast %17 : vector<1x512xf32> to vector<8x512xf32>
    %19 = arith.mulf %0, %18 : vector<8x512xf32>
    %c511_i32 = arith.constant 511 : i32
    %20 = tpu.dynamic_rotate %0 by %c511_i32 dim 1 : vector<8x512xf32>, i32 -> vector<8x512xf32>
    %c5 = arith.constant 5 : index
    %c0_7 = arith.constant 0 : index
    %21 = vector.load %arg0[%c5, %c0_7] : memref<9x512xf32, #tpu.memory_space<vmem>>, vector<1x512xf32>
    %22 = vector.broadcast %21 : vector<1x512xf32> to vector<8x512xf32>
    %23 = arith.mulf %20, %22 : vector<8x512xf32>
    %c497_i32 = arith.constant 497 : i32
    %24 = tpu.dynamic_rotate %0 by %c497_i32 dim 1 : vector<8x512xf32>, i32 -> vector<8x512xf32>
    %c6 = arith.constant 6 : index
    %c0_8 = arith.constant 0 : index
    %25 = vector.load %arg0[%c6, %c0_8] : memref<9x512xf32, #tpu.memory_space<vmem>>, vector<1x512xf32>
    %26 = vector.broadcast %25 : vector<1x512xf32> to vector<8x512xf32>
    %27 = arith.mulf %24, %26 : vector<8x512xf32>
    %c496_i32 = arith.constant 496 : i32
    %28 = tpu.dynamic_rotate %0 by %c496_i32 dim 1 : vector<8x512xf32>, i32 -> vector<8x512xf32>
    %c7 = arith.constant 7 : index
    %c0_9 = arith.constant 0 : index
    %29 = vector.load %arg0[%c7, %c0_9] : memref<9x512xf32, #tpu.memory_space<vmem>>, vector<1x512xf32>
    %30 = vector.broadcast %29 : vector<1x512xf32> to vector<8x512xf32>
    %31 = arith.mulf %28, %30 : vector<8x512xf32>
    %c495_i32 = arith.constant 495 : i32
    %32 = tpu.dynamic_rotate %0 by %c495_i32 dim 1 : vector<8x512xf32>, i32 -> vector<8x512xf32>
    %c8 = arith.constant 8 : index
    %c0_10 = arith.constant 0 : index
    %33 = vector.load %arg0[%c8, %c0_10] : memref<9x512xf32, #tpu.memory_space<vmem>>, vector<1x512xf32>
    %34 = vector.broadcast %33 : vector<1x512xf32> to vector<8x512xf32>
    %35 = arith.mulf %32, %34 : vector<8x512xf32>
    %36 = tpu.concatenate %4, %8, %12, %16, %19, %23, %27, %31, %35 in 0 : vector<8x512xf32>, vector<8x512xf32>, vector<8x512xf32>, vector<8x512xf32>, vector<8x512xf32>, vector<8x512xf32>, vector<8x512xf32>, vector<8x512xf32>, vector<8x512xf32> -> vector<72x512xf32>
    %c0_11 = arith.constant 0 : index
    %c0_12 = arith.constant 0 : index
    %37 = vector.load %arg25[%c0_11, %c0_12] : memref<8x72xf32, #tpu.memory_space<vmem>>, vector<8x72xf32>
    %cst = arith.constant dense<0.000000e+00> : vector<8x512xf32>
    %38 = tpu.matmul %37, %36, %cst {dimension_numbers = #tpu.dot_dimension_numbers<[1], [0], [0], [1], [0, 0, 1, 1], [], []>} : vector<8x72xf32>, vector<72x512xf32>, vector<8x512xf32> -> vector<8x512xf32>
    %c0_13 = arith.constant 0 : index
    %c0_14 = arith.constant 0 : index
    %39 = vector.load %arg23[%c0_13, %c0_14] : memref<8x1xf32, #tpu.memory_space<vmem>>, vector<8x1xf32>
    %40 = vector.broadcast %39 : vector<8x1xf32> to vector<8x512xf32>
    %41 = arith.mulf %38, %40 : vector<8x512xf32>
    %c0_15 = arith.constant 0 : index
    %c0_16 = arith.constant 0 : index
    %42 = vector.load %arg21[%c0_15, %c0_16] : memref<8x1xf32, #tpu.memory_space<vmem>>, vector<8x1xf32>
    %43 = vector.broadcast %42 : vector<8x1xf32> to vector<8x512xf32>
    %44 = arith.addf %41, %43 : vector<8x512xf32>
    %cst_17 = arith.constant 0.000000e+00 : f32
    %45 = vector.broadcast %cst_17 : f32 to vector<8x512xf32>
    %46 = arith.maximumf %44, %45 : vector<8x512xf32>
    %c17_i32_18 = arith.constant 17 : i32
    %47 = tpu.dynamic_rotate %46 by %c17_i32_18 dim 1 : vector<8x512xf32>, i32 -> vector<8x512xf32>
    %c0_19 = arith.constant 0 : index
    %c0_20 = arith.constant 0 : index
    %48 = vector.load %arg0[%c0_19, %c0_20] : memref<9x512xf32, #tpu.memory_space<vmem>>, vector<1x512xf32>
    %49 = vector.broadcast %48 : vector<1x512xf32> to vector<8x512xf32>
    %50 = arith.mulf %47, %49 : vector<8x512xf32>
    %c16_i32_21 = arith.constant 16 : i32
    %51 = tpu.dynamic_rotate %46 by %c16_i32_21 dim 1 : vector<8x512xf32>, i32 -> vector<8x512xf32>
    %c1_22 = arith.constant 1 : index
    %c0_23 = arith.constant 0 : index
    %52 = vector.load %arg0[%c1_22, %c0_23] : memref<9x512xf32, #tpu.memory_space<vmem>>, vector<1x512xf32>
    %53 = vector.broadcast %52 : vector<1x512xf32> to vector<8x512xf32>
    %54 = arith.mulf %51, %53 : vector<8x512xf32>
    %c15_i32_24 = arith.constant 15 : i32
    %55 = tpu.dynamic_rotate %46 by %c15_i32_24 dim 1 : vector<8x512xf32>, i32 -> vector<8x512xf32>
    %c2_25 = arith.constant 2 : index
    %c0_26 = arith.constant 0 : index
    %56 = vector.load %arg0[%c2_25, %c0_26] : memref<9x512xf32, #tpu.memory_space<vmem>>, vector<1x512xf32>
    %57 = vector.broadcast %56 : vector<1x512xf32> to vector<8x512xf32>
    %58 = arith.mulf %55, %57 : vector<8x512xf32>
    %c1_i32_27 = arith.constant 1 : i32
    %59 = tpu.dynamic_rotate %46 by %c1_i32_27 dim 1 : vector<8x512xf32>, i32 -> vector<8x512xf32>
    %c3_28 = arith.constant 3 : index
    %c0_29 = arith.constant 0 : index
    %60 = vector.load %arg0[%c3_28, %c0_29] : memref<9x512xf32, #tpu.memory_space<vmem>>, vector<1x512xf32>
    %61 = vector.broadcast %60 : vector<1x512xf32> to vector<8x512xf32>
    %62 = arith.mulf %59, %61 : vector<8x512xf32>
    %c4_30 = arith.constant 4 : index
    %c0_31 = arith.constant 0 : index
    %63 = vector.load %arg0[%c4_30, %c0_31] : memref<9x512xf32, #tpu.memory_space<vmem>>, vector<1x512xf32>
    %64 = vector.broadcast %63 : vector<1x512xf32> to vector<8x512xf32>
    %65 = arith.mulf %46, %64 : vector<8x512xf32>
    %c511_i32_32 = arith.constant 511 : i32
    %66 = tpu.dynamic_rotate %46 by %c511_i32_32 dim 1 : vector<8x512xf32>, i32 -> vector<8x512xf32>
    %c5_33 = arith.constant 5 : index
    %c0_34 = arith.constant 0 : index
    %67 = vector.load %arg0[%c5_33, %c0_34] : memref<9x512xf32, #tpu.memory_space<vmem>>, vector<1x512xf32>
    %68 = vector.broadcast %67 : vector<1x512xf32> to vector<8x512xf32>
    %69 = arith.mulf %66, %68 : vector<8x512xf32>
    %c497_i32_35 = arith.constant 497 : i32
    %70 = tpu.dynamic_rotate %46 by %c497_i32_35 dim 1 : vector<8x512xf32>, i32 -> vector<8x512xf32>
    %c6_36 = arith.constant 6 : index
    %c0_37 = arith.constant 0 : index
    %71 = vector.load %arg0[%c6_36, %c0_37] : memref<9x512xf32, #tpu.memory_space<vmem>>, vector<1x512xf32>
    %72 = vector.broadcast %71 : vector<1x512xf32> to vector<8x512xf32>
    %73 = arith.mulf %70, %72 : vector<8x512xf32>
    %c496_i32_38 = arith.constant 496 : i32
    %74 = tpu.dynamic_rotate %46 by %c496_i32_38 dim 1 : vector<8x512xf32>, i32 -> vector<8x512xf32>
    %c7_39 = arith.constant 7 : index
    %c0_40 = arith.constant 0 : index
    %75 = vector.load %arg0[%c7_39, %c0_40] : memref<9x512xf32, #tpu.memory_space<vmem>>, vector<1x512xf32>
    %76 = vector.broadcast %75 : vector<1x512xf32> to vector<8x512xf32>
    %77 = arith.mulf %74, %76 : vector<8x512xf32>
    %c495_i32_41 = arith.constant 495 : i32
    %78 = tpu.dynamic_rotate %46 by %c495_i32_41 dim 1 : vector<8x512xf32>, i32 -> vector<8x512xf32>
    %c8_42 = arith.constant 8 : index
    %c0_43 = arith.constant 0 : index
    %79 = vector.load %arg0[%c8_42, %c0_43] : memref<9x512xf32, #tpu.memory_space<vmem>>, vector<1x512xf32>
    %80 = vector.broadcast %79 : vector<1x512xf32> to vector<8x512xf32>
    %81 = arith.mulf %78, %80 : vector<8x512xf32>
    %82 = tpu.concatenate %50, %54, %58, %62, %65, %69, %73, %77, %81 in 0 : vector<8x512xf32>, vector<8x512xf32>, vector<8x512xf32>, vector<8x512xf32>, vector<8x512xf32>, vector<8x512xf32>, vector<8x512xf32>, vector<8x512xf32>, vector<8x512xf32> -> vector<72x512xf32>
    %c0_44 = arith.constant 0 : index
    %c0_45 = arith.constant 0 : index
    %83 = vector.load %arg26[%c0_44, %c0_45] : memref<8x72xf32, #tpu.memory_space<vmem>>, vector<8x72xf32>
    %cst_46 = arith.constant dense<0.000000e+00> : vector<8x512xf32>
    %84 = tpu.matmul %83, %82, %cst_46 {dimension_numbers = #tpu.dot_dimension_numbers<[1], [0], [0], [1], [0, 0, 1, 1], [], []>} : vector<8x72xf32>, vector<72x512xf32>, vector<8x512xf32> -> vector<8x512xf32>
    %c0_47 = arith.constant 0 : index
    %c0_48 = arith.constant 0 : index
    %85 = vector.load %arg24[%c0_47, %c0_48] : memref<8x1xf32, #tpu.memory_space<vmem>>, vector<8x1xf32>
    %86 = vector.broadcast %85 : vector<8x1xf32> to vector<8x512xf32>
    %87 = arith.mulf %84, %86 : vector<8x512xf32>
    %c0_49 = arith.constant 0 : index
    %c0_50 = arith.constant 0 : index
    %88 = vector.load %arg22[%c0_49, %c0_50] : memref<8x1xf32, #tpu.memory_space<vmem>>, vector<8x1xf32>
    %89 = vector.broadcast %88 : vector<8x1xf32> to vector<8x512xf32>
    %90 = arith.addf %87, %89 : vector<8x512xf32>
    %cst_51 = arith.constant 0.000000e+00 : f32
    %91 = vector.broadcast %cst_51 : f32 to vector<8x512xf32>
    %92 = arith.maximumf %90, %91 : vector<8x512xf32>
    %c511_i32_52 = arith.constant 511 : i32
    %93 = tpu.dynamic_rotate %92 by %c511_i32_52 dim 1 : vector<8x512xf32>, i32 -> vector<8x512xf32>
    %94 = arith.maximumf %92, %93 : vector<8x512xf32>
    %c496_i32_53 = arith.constant 496 : i32
    %95 = tpu.dynamic_rotate %92 by %c496_i32_53 dim 1 : vector<8x512xf32>, i32 -> vector<8x512xf32>
    %96 = arith.maximumf %94, %95 : vector<8x512xf32>
    %c495_i32_54 = arith.constant 495 : i32
    %97 = tpu.dynamic_rotate %92 by %c495_i32_54 dim 1 : vector<8x512xf32>, i32 -> vector<8x512xf32>
    %98 = arith.maximumf %96, %97 : vector<8x512xf32>
    %c0_55 = arith.constant 0 : index
    %c0_56 = arith.constant 0 : index
    %99 = vector.load %arg3[%c0_55, %c0_56] : memref<512x128xf32, #tpu.memory_space<vmem>>, vector<512x128xf32>
    %cst_57 = arith.constant dense<0.000000e+00> : vector<8x128xf32>
    %100 = tpu.matmul %98, %99, %cst_57 {dimension_numbers = #tpu.dot_dimension_numbers<[1], [0], [0], [1], [0, 0, 1, 1], [], []>} : vector<8x512xf32>, vector<512x128xf32>, vector<8x128xf32> -> vector<8x128xf32>
    %c9_i32 = arith.constant 9 : i32
    %101 = tpu.dynamic_rotate %100 by %c9_i32 dim 1 : vector<8x128xf32>, i32 -> vector<8x128xf32>
    %c0_58 = arith.constant 0 : index
    %c0_59 = arith.constant 0 : index
    %102 = vector.load %arg1[%c0_58, %c0_59] : memref<9x128xf32, #tpu.memory_space<vmem>>, vector<1x128xf32>
    %103 = vector.broadcast %102 : vector<1x128xf32> to vector<8x128xf32>
    %104 = arith.mulf %101, %103 : vector<8x128xf32>
    %c8_i32 = arith.constant 8 : i32
    %105 = tpu.dynamic_rotate %100 by %c8_i32 dim 1 : vector<8x128xf32>, i32 -> vector<8x128xf32>
    %c1_60 = arith.constant 1 : index
    %c0_61 = arith.constant 0 : index
    %106 = vector.load %arg1[%c1_60, %c0_61] : memref<9x128xf32, #tpu.memory_space<vmem>>, vector<1x128xf32>
    %107 = vector.broadcast %106 : vector<1x128xf32> to vector<8x128xf32>
    %108 = arith.mulf %105, %107 : vector<8x128xf32>
    %c7_i32 = arith.constant 7 : i32
    %109 = tpu.dynamic_rotate %100 by %c7_i32 dim 1 : vector<8x128xf32>, i32 -> vector<8x128xf32>
    %c2_62 = arith.constant 2 : index
    %c0_63 = arith.constant 0 : index
    %110 = vector.load %arg1[%c2_62, %c0_63] : memref<9x128xf32, #tpu.memory_space<vmem>>, vector<1x128xf32>
    %111 = vector.broadcast %110 : vector<1x128xf32> to vector<8x128xf32>
    %112 = arith.mulf %109, %111 : vector<8x128xf32>
    %c1_i32_64 = arith.constant 1 : i32
    %113 = tpu.dynamic_rotate %100 by %c1_i32_64 dim 1 : vector<8x128xf32>, i32 -> vector<8x128xf32>
    %c3_65 = arith.constant 3 : index
    %c0_66 = arith.constant 0 : index
    %114 = vector.load %arg1[%c3_65, %c0_66] : memref<9x128xf32, #tpu.memory_space<vmem>>, vector<1x128xf32>
    %115 = vector.broadcast %114 : vector<1x128xf32> to vector<8x128xf32>
    %116 = arith.mulf %113, %115 : vector<8x128xf32>
    %c4_67 = arith.constant 4 : index
    %c0_68 = arith.constant 0 : index
    %117 = vector.load %arg1[%c4_67, %c0_68] : memref<9x128xf32, #tpu.memory_space<vmem>>, vector<1x128xf32>
    %118 = vector.broadcast %117 : vector<1x128xf32> to vector<8x128xf32>
    %119 = arith.mulf %100, %118 : vector<8x128xf32>
    %c127_i32 = arith.constant 127 : i32
    %120 = tpu.dynamic_rotate %100 by %c127_i32 dim 1 : vector<8x128xf32>, i32 -> vector<8x128xf32>
    %c5_69 = arith.constant 5 : index
    %c0_70 = arith.constant 0 : index
    %121 = vector.load %arg1[%c5_69, %c0_70] : memref<9x128xf32, #tpu.memory_space<vmem>>, vector<1x128xf32>
    %122 = vector.broadcast %121 : vector<1x128xf32> to vector<8x128xf32>
    %123 = arith.mulf %120, %122 : vector<8x128xf32>
    %c121_i32 = arith.constant 121 : i32
    %124 = tpu.dynamic_rotate %100 by %c121_i32 dim 1 : vector<8x128xf32>, i32 -> vector<8x128xf32>
    %c6_71 = arith.constant 6 : index
    %c0_72 = arith.constant 0 : index
    %125 = vector.load %arg1[%c6_71, %c0_72] : memref<9x128xf32, #tpu.memory_space<vmem>>, vector<1x128xf32>
    %126 = vector.broadcast %125 : vector<1x128xf32> to vector<8x128xf32>
    %127 = arith.mulf %124, %126 : vector<8x128xf32>
    %c120_i32 = arith.constant 120 : i32
    %128 = tpu.dynamic_rotate %100 by %c120_i32 dim 1 : vector<8x128xf32>, i32 -> vector<8x128xf32>
    %c7_73 = arith.constant 7 : index
    %c0_74 = arith.constant 0 : index
    %129 = vector.load %arg1[%c7_73, %c0_74] : memref<9x128xf32, #tpu.memory_space<vmem>>, vector<1x128xf32>
    %130 = vector.broadcast %129 : vector<1x128xf32> to vector<8x128xf32>
    %131 = arith.mulf %128, %130 : vector<8x128xf32>
    %c119_i32 = arith.constant 119 : i32
    %132 = tpu.dynamic_rotate %100 by %c119_i32 dim 1 : vector<8x128xf32>, i32 -> vector<8x128xf32>
    %c8_75 = arith.constant 8 : index
    %c0_76 = arith.constant 0 : index
    %133 = vector.load %arg1[%c8_75, %c0_76] : memref<9x128xf32, #tpu.memory_space<vmem>>, vector<1x128xf32>
    %134 = vector.broadcast %133 : vector<1x128xf32> to vector<8x128xf32>
    %135 = arith.mulf %132, %134 : vector<8x128xf32>
    %136 = tpu.concatenate %104, %108, %112, %116, %119, %123, %127, %131, %135 in 0 : vector<8x128xf32>, vector<8x128xf32>, vector<8x128xf32>, vector<8x128xf32>, vector<8x128xf32>, vector<8x128xf32>, vector<8x128xf32>, vector<8x128xf32>, vector<8x128xf32> -> vector<72x128xf32>
    %c0_77 = arith.constant 0 : index
    %c0_78 = arith.constant 0 : index
    %137 = vector.load %arg11[%c0_77, %c0_78] : memref<16x72xf32, #tpu.memory_space<vmem>>, vector<16x72xf32>
    %cst_79 = arith.constant dense<0.000000e+00> : vector<16x128xf32>
    %138 = tpu.matmul %137, %136, %cst_79 {dimension_numbers = #tpu.dot_dimension_numbers<[1], [0], [0], [1], [0, 0, 1, 1], [], []>} : vector<16x72xf32>, vector<72x128xf32>, vector<16x128xf32> -> vector<16x128xf32>
    %c0_80 = arith.constant 0 : index
    %c0_81 = arith.constant 0 : index
    %139 = vector.load %arg9[%c0_80, %c0_81] : memref<16x1xf32, #tpu.memory_space<vmem>>, vector<16x1xf32>
    %140 = vector.broadcast %139 : vector<16x1xf32> to vector<16x128xf32>
    %141 = arith.mulf %138, %140 : vector<16x128xf32>
    %c0_82 = arith.constant 0 : index
    %c0_83 = arith.constant 0 : index
    %142 = vector.load %arg7[%c0_82, %c0_83] : memref<16x1xf32, #tpu.memory_space<vmem>>, vector<16x1xf32>
    %143 = vector.broadcast %142 : vector<16x1xf32> to vector<16x128xf32>
    %144 = arith.addf %141, %143 : vector<16x128xf32>
    %cst_84 = arith.constant 0.000000e+00 : f32
    %145 = vector.broadcast %cst_84 : f32 to vector<16x128xf32>
    %146 = arith.maximumf %144, %145 : vector<16x128xf32>
    %c9_i32_85 = arith.constant 9 : i32
    %147 = tpu.dynamic_rotate %146 by %c9_i32_85 dim 1 : vector<16x128xf32>, i32 -> vector<16x128xf32>
    %c0_86 = arith.constant 0 : index
    %c0_87 = arith.constant 0 : index
    %148 = vector.load %arg1[%c0_86, %c0_87] : memref<9x128xf32, #tpu.memory_space<vmem>>, vector<1x128xf32>
    %149 = vector.broadcast %148 : vector<1x128xf32> to vector<16x128xf32>
    %150 = arith.mulf %147, %149 : vector<16x128xf32>
    %c8_i32_88 = arith.constant 8 : i32
    %151 = tpu.dynamic_rotate %146 by %c8_i32_88 dim 1 : vector<16x128xf32>, i32 -> vector<16x128xf32>
    %c1_89 = arith.constant 1 : index
    %c0_90 = arith.constant 0 : index
    %152 = vector.load %arg1[%c1_89, %c0_90] : memref<9x128xf32, #tpu.memory_space<vmem>>, vector<1x128xf32>
    %153 = vector.broadcast %152 : vector<1x128xf32> to vector<16x128xf32>
    %154 = arith.mulf %151, %153 : vector<16x128xf32>
    %c7_i32_91 = arith.constant 7 : i32
    %155 = tpu.dynamic_rotate %146 by %c7_i32_91 dim 1 : vector<16x128xf32>, i32 -> vector<16x128xf32>
    %c2_92 = arith.constant 2 : index
    %c0_93 = arith.constant 0 : index
    %156 = vector.load %arg1[%c2_92, %c0_93] : memref<9x128xf32, #tpu.memory_space<vmem>>, vector<1x128xf32>
    %157 = vector.broadcast %156 : vector<1x128xf32> to vector<16x128xf32>
    %158 = arith.mulf %155, %157 : vector<16x128xf32>
    %c1_i32_94 = arith.constant 1 : i32
    %159 = tpu.dynamic_rotate %146 by %c1_i32_94 dim 1 : vector<16x128xf32>, i32 -> vector<16x128xf32>
    %c3_95 = arith.constant 3 : index
    %c0_96 = arith.constant 0 : index
    %160 = vector.load %arg1[%c3_95, %c0_96] : memref<9x128xf32, #tpu.memory_space<vmem>>, vector<1x128xf32>
    %161 = vector.broadcast %160 : vector<1x128xf32> to vector<16x128xf32>
    %162 = arith.mulf %159, %161 : vector<16x128xf32>
    %c4_97 = arith.constant 4 : index
    %c0_98 = arith.constant 0 : index
    %163 = vector.load %arg1[%c4_97, %c0_98] : memref<9x128xf32, #tpu.memory_space<vmem>>, vector<1x128xf32>
    %164 = vector.broadcast %163 : vector<1x128xf32> to vector<16x128xf32>
    %165 = arith.mulf %146, %164 : vector<16x128xf32>
    %c127_i32_99 = arith.constant 127 : i32
    %166 = tpu.dynamic_rotate %146 by %c127_i32_99 dim 1 : vector<16x128xf32>, i32 -> vector<16x128xf32>
    %c5_100 = arith.constant 5 : index
    %c0_101 = arith.constant 0 : index
    %167 = vector.load %arg1[%c5_100, %c0_101] : memref<9x128xf32, #tpu.memory_space<vmem>>, vector<1x128xf32>
    %168 = vector.broadcast %167 : vector<1x128xf32> to vector<16x128xf32>
    %169 = arith.mulf %166, %168 : vector<16x128xf32>
    %c121_i32_102 = arith.constant 121 : i32
    %170 = tpu.dynamic_rotate %146 by %c121_i32_102 dim 1 : vector<16x128xf32>, i32 -> vector<16x128xf32>
    %c6_103 = arith.constant 6 : index
    %c0_104 = arith.constant 0 : index
    %171 = vector.load %arg1[%c6_103, %c0_104] : memref<9x128xf32, #tpu.memory_space<vmem>>, vector<1x128xf32>
    %172 = vector.broadcast %171 : vector<1x128xf32> to vector<16x128xf32>
    %173 = arith.mulf %170, %172 : vector<16x128xf32>
    %c120_i32_105 = arith.constant 120 : i32
    %174 = tpu.dynamic_rotate %146 by %c120_i32_105 dim 1 : vector<16x128xf32>, i32 -> vector<16x128xf32>
    %c7_106 = arith.constant 7 : index
    %c0_107 = arith.constant 0 : index
    %175 = vector.load %arg1[%c7_106, %c0_107] : memref<9x128xf32, #tpu.memory_space<vmem>>, vector<1x128xf32>
    %176 = vector.broadcast %175 : vector<1x128xf32> to vector<16x128xf32>
    %177 = arith.mulf %174, %176 : vector<16x128xf32>
    %c119_i32_108 = arith.constant 119 : i32
    %178 = tpu.dynamic_rotate %146 by %c119_i32_108 dim 1 : vector<16x128xf32>, i32 -> vector<16x128xf32>
    %c8_109 = arith.constant 8 : index
    %c0_110 = arith.constant 0 : index
    %179 = vector.load %arg1[%c8_109, %c0_110] : memref<9x128xf32, #tpu.memory_space<vmem>>, vector<1x128xf32>
    %180 = vector.broadcast %179 : vector<1x128xf32> to vector<16x128xf32>
    %181 = arith.mulf %178, %180 : vector<16x128xf32>
    %182 = tpu.concatenate %150, %154, %158, %162, %165, %169, %173, %177, %181 in 0 : vector<16x128xf32>, vector<16x128xf32>, vector<16x128xf32>, vector<16x128xf32>, vector<16x128xf32>, vector<16x128xf32>, vector<16x128xf32>, vector<16x128xf32>, vector<16x128xf32> -> vector<144x128xf32>
    %c0_111 = arith.constant 0 : index
    %c0_112 = arith.constant 0 : index
    %183 = vector.load %arg12[%c0_111, %c0_112] : memref<16x144xf32, #tpu.memory_space<vmem>>, vector<16x144xf32>
    %cst_113 = arith.constant dense<0.000000e+00> : vector<16x128xf32>
    %184 = tpu.matmul %183, %182, %cst_113 {dimension_numbers = #tpu.dot_dimension_numbers<[1], [0], [0], [1], [0, 0, 1, 1], [], []>} : vector<16x144xf32>, vector<144x128xf32>, vector<16x128xf32> -> vector<16x128xf32>
    %c0_114 = arith.constant 0 : index
    %c0_115 = arith.constant 0 : index
    %185 = vector.load %arg10[%c0_114, %c0_115] : memref<16x1xf32, #tpu.memory_space<vmem>>, vector<16x1xf32>
    %186 = vector.broadcast %185 : vector<16x1xf32> to vector<16x128xf32>
    %187 = arith.mulf %184, %186 : vector<16x128xf32>
    %c0_116 = arith.constant 0 : index
    %c0_117 = arith.constant 0 : index
    %188 = vector.load %arg8[%c0_116, %c0_117] : memref<16x1xf32, #tpu.memory_space<vmem>>, vector<16x1xf32>
    %189 = vector.broadcast %188 : vector<16x1xf32> to vector<16x128xf32>
    %190 = arith.addf %187, %189 : vector<16x128xf32>
    %cst_118 = arith.constant 0.000000e+00 : f32
    %191 = vector.broadcast %cst_118 : f32 to vector<16x128xf32>
    %192 = arith.maximumf %190, %191 : vector<16x128xf32>
    %c127_i32_119 = arith.constant 127 : i32
    %193 = tpu.dynamic_rotate %192 by %c127_i32_119 dim 1 : vector<16x128xf32>, i32 -> vector<16x128xf32>
    %194 = arith.maximumf %192, %193 : vector<16x128xf32>
    %c120_i32_120 = arith.constant 120 : i32
    %195 = tpu.dynamic_rotate %192 by %c120_i32_120 dim 1 : vector<16x128xf32>, i32 -> vector<16x128xf32>
    %196 = arith.maximumf %194, %195 : vector<16x128xf32>
    %c119_i32_121 = arith.constant 119 : i32
    %197 = tpu.dynamic_rotate %192 by %c119_i32_121 dim 1 : vector<16x128xf32>, i32 -> vector<16x128xf32>
    %198 = arith.maximumf %196, %197 : vector<16x128xf32>
    %c0_122 = arith.constant 0 : index
    %c0_123 = arith.constant 0 : index
    %199 = vector.load %arg4[%c0_122, %c0_123] : memref<128x128xf32, #tpu.memory_space<vmem>>, vector<128x128xf32>
    %cst_124 = arith.constant dense<0.000000e+00> : vector<16x128xf32>
    %200 = tpu.matmul %198, %199, %cst_124 {dimension_numbers = #tpu.dot_dimension_numbers<[1], [0], [0], [1], [0, 0, 1, 1], [], []>} : vector<16x128xf32>, vector<128x128xf32>, vector<16x128xf32> -> vector<16x128xf32>
    %c5_i32 = arith.constant 5 : i32
    %201 = tpu.dynamic_rotate %200 by %c5_i32 dim 1 : vector<16x128xf32>, i32 -> vector<16x128xf32>
    %c0_125 = arith.constant 0 : index
    %c0_126 = arith.constant 0 : index
    %202 = vector.load %arg2[%c0_125, %c0_126] : memref<9x128xf32, #tpu.memory_space<vmem>>, vector<1x128xf32>
    %203 = vector.broadcast %202 : vector<1x128xf32> to vector<16x128xf32>
    %204 = arith.mulf %201, %203 : vector<16x128xf32>
    %c4_i32 = arith.constant 4 : i32
    %205 = tpu.dynamic_rotate %200 by %c4_i32 dim 1 : vector<16x128xf32>, i32 -> vector<16x128xf32>
    %c1_127 = arith.constant 1 : index
    %c0_128 = arith.constant 0 : index
    %206 = vector.load %arg2[%c1_127, %c0_128] : memref<9x128xf32, #tpu.memory_space<vmem>>, vector<1x128xf32>
    %207 = vector.broadcast %206 : vector<1x128xf32> to vector<16x128xf32>
    %208 = arith.mulf %205, %207 : vector<16x128xf32>
    %c3_i32 = arith.constant 3 : i32
    %209 = tpu.dynamic_rotate %200 by %c3_i32 dim 1 : vector<16x128xf32>, i32 -> vector<16x128xf32>
    %c2_129 = arith.constant 2 : index
    %c0_130 = arith.constant 0 : index
    %210 = vector.load %arg2[%c2_129, %c0_130] : memref<9x128xf32, #tpu.memory_space<vmem>>, vector<1x128xf32>
    %211 = vector.broadcast %210 : vector<1x128xf32> to vector<16x128xf32>
    %212 = arith.mulf %209, %211 : vector<16x128xf32>
    %c1_i32_131 = arith.constant 1 : i32
    %213 = tpu.dynamic_rotate %200 by %c1_i32_131 dim 1 : vector<16x128xf32>, i32 -> vector<16x128xf32>
    %c3_132 = arith.constant 3 : index
    %c0_133 = arith.constant 0 : index
    %214 = vector.load %arg2[%c3_132, %c0_133] : memref<9x128xf32, #tpu.memory_space<vmem>>, vector<1x128xf32>
    %215 = vector.broadcast %214 : vector<1x128xf32> to vector<16x128xf32>
    %216 = arith.mulf %213, %215 : vector<16x128xf32>
    %c4_134 = arith.constant 4 : index
    %c0_135 = arith.constant 0 : index
    %217 = vector.load %arg2[%c4_134, %c0_135] : memref<9x128xf32, #tpu.memory_space<vmem>>, vector<1x128xf32>
    %218 = vector.broadcast %217 : vector<1x128xf32> to vector<16x128xf32>
    %219 = arith.mulf %200, %218 : vector<16x128xf32>
    %c127_i32_136 = arith.constant 127 : i32
    %220 = tpu.dynamic_rotate %200 by %c127_i32_136 dim 1 : vector<16x128xf32>, i32 -> vector<16x128xf32>
    %c5_137 = arith.constant 5 : index
    %c0_138 = arith.constant 0 : index
    %221 = vector.load %arg2[%c5_137, %c0_138] : memref<9x128xf32, #tpu.memory_space<vmem>>, vector<1x128xf32>
    %222 = vector.broadcast %221 : vector<1x128xf32> to vector<16x128xf32>
    %223 = arith.mulf %220, %222 : vector<16x128xf32>
    %c125_i32 = arith.constant 125 : i32
    %224 = tpu.dynamic_rotate %200 by %c125_i32 dim 1 : vector<16x128xf32>, i32 -> vector<16x128xf32>
    %c6_139 = arith.constant 6 : index
    %c0_140 = arith.constant 0 : index
    %225 = vector.load %arg2[%c6_139, %c0_140] : memref<9x128xf32, #tpu.memory_space<vmem>>, vector<1x128xf32>
    %226 = vector.broadcast %225 : vector<1x128xf32> to vector<16x128xf32>
    %227 = arith.mulf %224, %226 : vector<16x128xf32>
    %c124_i32 = arith.constant 124 : i32
    %228 = tpu.dynamic_rotate %200 by %c124_i32 dim 1 : vector<16x128xf32>, i32 -> vector<16x128xf32>
    %c7_141 = arith.constant 7 : index
    %c0_142 = arith.constant 0 : index
    %229 = vector.load %arg2[%c7_141, %c0_142] : memref<9x128xf32, #tpu.memory_space<vmem>>, vector<1x128xf32>
    %230 = vector.broadcast %229 : vector<1x128xf32> to vector<16x128xf32>
    %231 = arith.mulf %228, %230 : vector<16x128xf32>
    %c123_i32 = arith.constant 123 : i32
    %232 = tpu.dynamic_rotate %200 by %c123_i32 dim 1 : vector<16x128xf32>, i32 -> vector<16x128xf32>
    %c8_143 = arith.constant 8 : index
    %c0_144 = arith.constant 0 : index
    %233 = vector.load %arg2[%c8_143, %c0_144] : memref<9x128xf32, #tpu.memory_space<vmem>>, vector<1x128xf32>
    %234 = vector.broadcast %233 : vector<1x128xf32> to vector<16x128xf32>
    %235 = arith.mulf %232, %234 : vector<16x128xf32>
    %236 = tpu.concatenate %204, %208, %212, %216, %219, %223, %227, %231, %235 in 0 : vector<16x128xf32>, vector<16x128xf32>, vector<16x128xf32>, vector<16x128xf32>, vector<16x128xf32>, vector<16x128xf32>, vector<16x128xf32>, vector<16x128xf32>, vector<16x128xf32> -> vector<144x128xf32>
    %c0_145 = arith.constant 0 : index
    %c0_146 = arith.constant 0 : index
    %237 = vector.load %arg17[%c0_145, %c0_146] : memref<32x144xf32, #tpu.memory_space<vmem>>, vector<32x144xf32>
    %cst_147 = arith.constant dense<0.000000e+00> : vector<32x128xf32>
    %238 = tpu.matmul %237, %236, %cst_147 {dimension_numbers = #tpu.dot_dimension_numbers<[1], [0], [0], [1], [0, 0, 1, 1], [], []>} : vector<32x144xf32>, vector<144x128xf32>, vector<32x128xf32> -> vector<32x128xf32>
    %c0_148 = arith.constant 0 : index
    %c0_149 = arith.constant 0 : index
    %239 = vector.load %arg15[%c0_148, %c0_149] : memref<32x1xf32, #tpu.memory_space<vmem>>, vector<32x1xf32>
    %240 = vector.broadcast %239 : vector<32x1xf32> to vector<32x128xf32>
    %241 = arith.mulf %238, %240 : vector<32x128xf32>
    %c0_150 = arith.constant 0 : index
    %c0_151 = arith.constant 0 : index
    %242 = vector.load %arg13[%c0_150, %c0_151] : memref<32x1xf32, #tpu.memory_space<vmem>>, vector<32x1xf32>
    %243 = vector.broadcast %242 : vector<32x1xf32> to vector<32x128xf32>
    %244 = arith.addf %241, %243 : vector<32x128xf32>
    %cst_152 = arith.constant 0.000000e+00 : f32
    %245 = vector.broadcast %cst_152 : f32 to vector<32x128xf32>
    %246 = arith.maximumf %244, %245 : vector<32x128xf32>
    %c5_i32_153 = arith.constant 5 : i32
    %247 = tpu.dynamic_rotate %246 by %c5_i32_153 dim 1 : vector<32x128xf32>, i32 -> vector<32x128xf32>
    %c0_154 = arith.constant 0 : index
    %c0_155 = arith.constant 0 : index
    %248 = vector.load %arg2[%c0_154, %c0_155] : memref<9x128xf32, #tpu.memory_space<vmem>>, vector<1x128xf32>
    %249 = vector.broadcast %248 : vector<1x128xf32> to vector<32x128xf32>
    %250 = arith.mulf %247, %249 : vector<32x128xf32>
    %c4_i32_156 = arith.constant 4 : i32
    %251 = tpu.dynamic_rotate %246 by %c4_i32_156 dim 1 : vector<32x128xf32>, i32 -> vector<32x128xf32>
    %c1_157 = arith.constant 1 : index
    %c0_158 = arith.constant 0 : index
    %252 = vector.load %arg2[%c1_157, %c0_158] : memref<9x128xf32, #tpu.memory_space<vmem>>, vector<1x128xf32>
    %253 = vector.broadcast %252 : vector<1x128xf32> to vector<32x128xf32>
    %254 = arith.mulf %251, %253 : vector<32x128xf32>
    %c3_i32_159 = arith.constant 3 : i32
    %255 = tpu.dynamic_rotate %246 by %c3_i32_159 dim 1 : vector<32x128xf32>, i32 -> vector<32x128xf32>
    %c2_160 = arith.constant 2 : index
    %c0_161 = arith.constant 0 : index
    %256 = vector.load %arg2[%c2_160, %c0_161] : memref<9x128xf32, #tpu.memory_space<vmem>>, vector<1x128xf32>
    %257 = vector.broadcast %256 : vector<1x128xf32> to vector<32x128xf32>
    %258 = arith.mulf %255, %257 : vector<32x128xf32>
    %c1_i32_162 = arith.constant 1 : i32
    %259 = tpu.dynamic_rotate %246 by %c1_i32_162 dim 1 : vector<32x128xf32>, i32 -> vector<32x128xf32>
    %c3_163 = arith.constant 3 : index
    %c0_164 = arith.constant 0 : index
    %260 = vector.load %arg2[%c3_163, %c0_164] : memref<9x128xf32, #tpu.memory_space<vmem>>, vector<1x128xf32>
    %261 = vector.broadcast %260 : vector<1x128xf32> to vector<32x128xf32>
    %262 = arith.mulf %259, %261 : vector<32x128xf32>
    %c4_165 = arith.constant 4 : index
    %c0_166 = arith.constant 0 : index
    %263 = vector.load %arg2[%c4_165, %c0_166] : memref<9x128xf32, #tpu.memory_space<vmem>>, vector<1x128xf32>
    %264 = vector.broadcast %263 : vector<1x128xf32> to vector<32x128xf32>
    %265 = arith.mulf %246, %264 : vector<32x128xf32>
    %c127_i32_167 = arith.constant 127 : i32
    %266 = tpu.dynamic_rotate %246 by %c127_i32_167 dim 1 : vector<32x128xf32>, i32 -> vector<32x128xf32>
    %c5_168 = arith.constant 5 : index
    %c0_169 = arith.constant 0 : index
    %267 = vector.load %arg2[%c5_168, %c0_169] : memref<9x128xf32, #tpu.memory_space<vmem>>, vector<1x128xf32>
    %268 = vector.broadcast %267 : vector<1x128xf32> to vector<32x128xf32>
    %269 = arith.mulf %266, %268 : vector<32x128xf32>
    %c125_i32_170 = arith.constant 125 : i32
    %270 = tpu.dynamic_rotate %246 by %c125_i32_170 dim 1 : vector<32x128xf32>, i32 -> vector<32x128xf32>
    %c6_171 = arith.constant 6 : index
    %c0_172 = arith.constant 0 : index
    %271 = vector.load %arg2[%c6_171, %c0_172] : memref<9x128xf32, #tpu.memory_space<vmem>>, vector<1x128xf32>
    %272 = vector.broadcast %271 : vector<1x128xf32> to vector<32x128xf32>
    %273 = arith.mulf %270, %272 : vector<32x128xf32>
    %c124_i32_173 = arith.constant 124 : i32
    %274 = tpu.dynamic_rotate %246 by %c124_i32_173 dim 1 : vector<32x128xf32>, i32 -> vector<32x128xf32>
    %c7_174 = arith.constant 7 : index
    %c0_175 = arith.constant 0 : index
    %275 = vector.load %arg2[%c7_174, %c0_175] : memref<9x128xf32, #tpu.memory_space<vmem>>, vector<1x128xf32>
    %276 = vector.broadcast %275 : vector<1x128xf32> to vector<32x128xf32>
    %277 = arith.mulf %274, %276 : vector<32x128xf32>
    %c123_i32_176 = arith.constant 123 : i32
    %278 = tpu.dynamic_rotate %246 by %c123_i32_176 dim 1 : vector<32x128xf32>, i32 -> vector<32x128xf32>
    %c8_177 = arith.constant 8 : index
    %c0_178 = arith.constant 0 : index
    %279 = vector.load %arg2[%c8_177, %c0_178] : memref<9x128xf32, #tpu.memory_space<vmem>>, vector<1x128xf32>
    %280 = vector.broadcast %279 : vector<1x128xf32> to vector<32x128xf32>
    %281 = arith.mulf %278, %280 : vector<32x128xf32>
    %282 = tpu.concatenate %250, %254, %258, %262, %265, %269, %273, %277, %281 in 0 : vector<32x128xf32>, vector<32x128xf32>, vector<32x128xf32>, vector<32x128xf32>, vector<32x128xf32>, vector<32x128xf32>, vector<32x128xf32>, vector<32x128xf32>, vector<32x128xf32> -> vector<288x128xf32>
    %c0_179 = arith.constant 0 : index
    %c0_180 = arith.constant 0 : index
    %283 = vector.load %arg18[%c0_179, %c0_180] : memref<32x288xf32, #tpu.memory_space<vmem>>, vector<32x288xf32>
    %cst_181 = arith.constant dense<0.000000e+00> : vector<32x128xf32>
    %284 = tpu.matmul %283, %282, %cst_181 {dimension_numbers = #tpu.dot_dimension_numbers<[1], [0], [0], [1], [0, 0, 1, 1], [], []>} : vector<32x288xf32>, vector<288x128xf32>, vector<32x128xf32> -> vector<32x128xf32>
    %c0_182 = arith.constant 0 : index
    %c0_183 = arith.constant 0 : index
    %285 = vector.load %arg16[%c0_182, %c0_183] : memref<32x1xf32, #tpu.memory_space<vmem>>, vector<32x1xf32>
    %286 = vector.broadcast %285 : vector<32x1xf32> to vector<32x128xf32>
    %287 = arith.mulf %284, %286 : vector<32x128xf32>
    %c0_184 = arith.constant 0 : index
    %c0_185 = arith.constant 0 : index
    %288 = vector.load %arg14[%c0_184, %c0_185] : memref<32x1xf32, #tpu.memory_space<vmem>>, vector<32x1xf32>
    %289 = vector.broadcast %288 : vector<32x1xf32> to vector<32x128xf32>
    %290 = arith.addf %287, %289 : vector<32x128xf32>
    %cst_186 = arith.constant 0.000000e+00 : f32
    %291 = vector.broadcast %cst_186 : f32 to vector<32x128xf32>
    %292 = arith.maximumf %290, %291 : vector<32x128xf32>
    %c0_187 = arith.constant 0 : index
    %c0_188 = arith.constant 0 : index
    %293 = vector.load %arg5[%c0_187, %c0_188] : memref<128x128xf32, #tpu.memory_space<vmem>>, vector<128x128xf32>
    %cst_189 = arith.constant dense<0.000000e+00> : vector<32x128xf32>
    %294 = tpu.matmul %292, %293, %cst_189 {dimension_numbers = #tpu.dot_dimension_numbers<[1], [0], [0], [1], [0, 0, 1, 1], [], []>} : vector<32x128xf32>, vector<128x128xf32>, vector<32x128xf32> -> vector<32x128xf32>
    %c9_i32_190 = arith.constant 9 : i32
    %295 = tpu.dynamic_rotate %294 by %c9_i32_190 dim 1 : vector<32x128xf32>, i32 -> vector<32x128xf32>
    %c0_191 = arith.constant 0 : index
    %c0_192 = arith.constant 0 : index
    %296 = vector.load %arg1[%c0_191, %c0_192] : memref<9x128xf32, #tpu.memory_space<vmem>>, vector<1x128xf32>
    %297 = vector.broadcast %296 : vector<1x128xf32> to vector<32x128xf32>
    %298 = arith.mulf %295, %297 : vector<32x128xf32>
    %c8_i32_193 = arith.constant 8 : i32
    %299 = tpu.dynamic_rotate %294 by %c8_i32_193 dim 1 : vector<32x128xf32>, i32 -> vector<32x128xf32>
    %c1_194 = arith.constant 1 : index
    %c0_195 = arith.constant 0 : index
    %300 = vector.load %arg1[%c1_194, %c0_195] : memref<9x128xf32, #tpu.memory_space<vmem>>, vector<1x128xf32>
    %301 = vector.broadcast %300 : vector<1x128xf32> to vector<32x128xf32>
    %302 = arith.mulf %299, %301 : vector<32x128xf32>
    %c7_i32_196 = arith.constant 7 : i32
    %303 = tpu.dynamic_rotate %294 by %c7_i32_196 dim 1 : vector<32x128xf32>, i32 -> vector<32x128xf32>
    %c2_197 = arith.constant 2 : index
    %c0_198 = arith.constant 0 : index
    %304 = vector.load %arg1[%c2_197, %c0_198] : memref<9x128xf32, #tpu.memory_space<vmem>>, vector<1x128xf32>
    %305 = vector.broadcast %304 : vector<1x128xf32> to vector<32x128xf32>
    %306 = arith.mulf %303, %305 : vector<32x128xf32>
    %c1_i32_199 = arith.constant 1 : i32
    %307 = tpu.dynamic_rotate %294 by %c1_i32_199 dim 1 : vector<32x128xf32>, i32 -> vector<32x128xf32>
    %c3_200 = arith.constant 3 : index
    %c0_201 = arith.constant 0 : index
    %308 = vector.load %arg1[%c3_200, %c0_201] : memref<9x128xf32, #tpu.memory_space<vmem>>, vector<1x128xf32>
    %309 = vector.broadcast %308 : vector<1x128xf32> to vector<32x128xf32>
    %310 = arith.mulf %307, %309 : vector<32x128xf32>
    %c4_202 = arith.constant 4 : index
    %c0_203 = arith.constant 0 : index
    %311 = vector.load %arg1[%c4_202, %c0_203] : memref<9x128xf32, #tpu.memory_space<vmem>>, vector<1x128xf32>
    %312 = vector.broadcast %311 : vector<1x128xf32> to vector<32x128xf32>
    %313 = arith.mulf %294, %312 : vector<32x128xf32>
    %c127_i32_204 = arith.constant 127 : i32
    %314 = tpu.dynamic_rotate %294 by %c127_i32_204 dim 1 : vector<32x128xf32>, i32 -> vector<32x128xf32>
    %c5_205 = arith.constant 5 : index
    %c0_206 = arith.constant 0 : index
    %315 = vector.load %arg1[%c5_205, %c0_206] : memref<9x128xf32, #tpu.memory_space<vmem>>, vector<1x128xf32>
    %316 = vector.broadcast %315 : vector<1x128xf32> to vector<32x128xf32>
    %317 = arith.mulf %314, %316 : vector<32x128xf32>
    %c121_i32_207 = arith.constant 121 : i32
    %318 = tpu.dynamic_rotate %294 by %c121_i32_207 dim 1 : vector<32x128xf32>, i32 -> vector<32x128xf32>
    %c6_208 = arith.constant 6 : index
    %c0_209 = arith.constant 0 : index
    %319 = vector.load %arg1[%c6_208, %c0_209] : memref<9x128xf32, #tpu.memory_space<vmem>>, vector<1x128xf32>
    %320 = vector.broadcast %319 : vector<1x128xf32> to vector<32x128xf32>
    %321 = arith.mulf %318, %320 : vector<32x128xf32>
    %c120_i32_210 = arith.constant 120 : i32
    %322 = tpu.dynamic_rotate %294 by %c120_i32_210 dim 1 : vector<32x128xf32>, i32 -> vector<32x128xf32>
    %c7_211 = arith.constant 7 : index
    %c0_212 = arith.constant 0 : index
    %323 = vector.load %arg1[%c7_211, %c0_212] : memref<9x128xf32, #tpu.memory_space<vmem>>, vector<1x128xf32>
    %324 = vector.broadcast %323 : vector<1x128xf32> to vector<32x128xf32>
    %325 = arith.mulf %322, %324 : vector<32x128xf32>
    %c119_i32_213 = arith.constant 119 : i32
    %326 = tpu.dynamic_rotate %294 by %c119_i32_213 dim 1 : vector<32x128xf32>, i32 -> vector<32x128xf32>
    %c8_214 = arith.constant 8 : index
    %c0_215 = arith.constant 0 : index
    %327 = vector.load %arg1[%c8_214, %c0_215] : memref<9x128xf32, #tpu.memory_space<vmem>>, vector<1x128xf32>
    %328 = vector.broadcast %327 : vector<1x128xf32> to vector<32x128xf32>
    %329 = arith.mulf %326, %328 : vector<32x128xf32>
    %330 = tpu.concatenate %298, %302, %306, %310, %313, %317, %321, %325, %329 in 0 : vector<32x128xf32>, vector<32x128xf32>, vector<32x128xf32>, vector<32x128xf32>, vector<32x128xf32>, vector<32x128xf32>, vector<32x128xf32>, vector<32x128xf32>, vector<32x128xf32> -> vector<288x128xf32>
    %c0_216 = arith.constant 0 : index
    %c0_217 = arith.constant 0 : index
    %331 = vector.load %arg32[%c0_216, %c0_217] : memref<16x288xf32, #tpu.memory_space<vmem>>, vector<16x288xf32>
    %cst_218 = arith.constant dense<0.000000e+00> : vector<16x128xf32>
    %332 = tpu.matmul %331, %330, %cst_218 {dimension_numbers = #tpu.dot_dimension_numbers<[1], [0], [0], [1], [0, 0, 1, 1], [], []>} : vector<16x288xf32>, vector<288x128xf32>, vector<16x128xf32> -> vector<16x128xf32>
    %c9_i32_219 = arith.constant 9 : i32
    %333 = tpu.dynamic_rotate %192 by %c9_i32_219 dim 1 : vector<16x128xf32>, i32 -> vector<16x128xf32>
    %c0_220 = arith.constant 0 : index
    %c0_221 = arith.constant 0 : index
    %334 = vector.load %arg1[%c0_220, %c0_221] : memref<9x128xf32, #tpu.memory_space<vmem>>, vector<1x128xf32>
    %335 = vector.broadcast %334 : vector<1x128xf32> to vector<16x128xf32>
    %336 = arith.mulf %333, %335 : vector<16x128xf32>
    %c8_i32_222 = arith.constant 8 : i32
    %337 = tpu.dynamic_rotate %192 by %c8_i32_222 dim 1 : vector<16x128xf32>, i32 -> vector<16x128xf32>
    %c1_223 = arith.constant 1 : index
    %c0_224 = arith.constant 0 : index
    %338 = vector.load %arg1[%c1_223, %c0_224] : memref<9x128xf32, #tpu.memory_space<vmem>>, vector<1x128xf32>
    %339 = vector.broadcast %338 : vector<1x128xf32> to vector<16x128xf32>
    %340 = arith.mulf %337, %339 : vector<16x128xf32>
    %c7_i32_225 = arith.constant 7 : i32
    %341 = tpu.dynamic_rotate %192 by %c7_i32_225 dim 1 : vector<16x128xf32>, i32 -> vector<16x128xf32>
    %c2_226 = arith.constant 2 : index
    %c0_227 = arith.constant 0 : index
    %342 = vector.load %arg1[%c2_226, %c0_227] : memref<9x128xf32, #tpu.memory_space<vmem>>, vector<1x128xf32>
    %343 = vector.broadcast %342 : vector<1x128xf32> to vector<16x128xf32>
    %344 = arith.mulf %341, %343 : vector<16x128xf32>
    %c1_i32_228 = arith.constant 1 : i32
    %345 = tpu.dynamic_rotate %192 by %c1_i32_228 dim 1 : vector<16x128xf32>, i32 -> vector<16x128xf32>
    %c3_229 = arith.constant 3 : index
    %c0_230 = arith.constant 0 : index
    %346 = vector.load %arg1[%c3_229, %c0_230] : memref<9x128xf32, #tpu.memory_space<vmem>>, vector<1x128xf32>
    %347 = vector.broadcast %346 : vector<1x128xf32> to vector<16x128xf32>
    %348 = arith.mulf %345, %347 : vector<16x128xf32>
    %c4_231 = arith.constant 4 : index
    %c0_232 = arith.constant 0 : index
    %349 = vector.load %arg1[%c4_231, %c0_232] : memref<9x128xf32, #tpu.memory_space<vmem>>, vector<1x128xf32>
    %350 = vector.broadcast %349 : vector<1x128xf32> to vector<16x128xf32>
    %351 = arith.mulf %192, %350 : vector<16x128xf32>
    %c127_i32_233 = arith.constant 127 : i32
    %352 = tpu.dynamic_rotate %192 by %c127_i32_233 dim 1 : vector<16x128xf32>, i32 -> vector<16x128xf32>
    %c5_234 = arith.constant 5 : index
    %c0_235 = arith.constant 0 : index
    %353 = vector.load %arg1[%c5_234, %c0_235] : memref<9x128xf32, #tpu.memory_space<vmem>>, vector<1x128xf32>
    %354 = vector.broadcast %353 : vector<1x128xf32> to vector<16x128xf32>
    %355 = arith.mulf %352, %354 : vector<16x128xf32>
    %c121_i32_236 = arith.constant 121 : i32
    %356 = tpu.dynamic_rotate %192 by %c121_i32_236 dim 1 : vector<16x128xf32>, i32 -> vector<16x128xf32>
    %c6_237 = arith.constant 6 : index
    %c0_238 = arith.constant 0 : index
    %357 = vector.load %arg1[%c6_237, %c0_238] : memref<9x128xf32, #tpu.memory_space<vmem>>, vector<1x128xf32>
    %358 = vector.broadcast %357 : vector<1x128xf32> to vector<16x128xf32>
    %359 = arith.mulf %356, %358 : vector<16x128xf32>
    %c120_i32_239 = arith.constant 120 : i32
    %360 = tpu.dynamic_rotate %192 by %c120_i32_239 dim 1 : vector<16x128xf32>, i32 -> vector<16x128xf32>
    %c7_240 = arith.constant 7 : index
    %c0_241 = arith.constant 0 : index
    %361 = vector.load %arg1[%c7_240, %c0_241] : memref<9x128xf32, #tpu.memory_space<vmem>>, vector<1x128xf32>
    %362 = vector.broadcast %361 : vector<1x128xf32> to vector<16x128xf32>
    %363 = arith.mulf %360, %362 : vector<16x128xf32>
    %c119_i32_242 = arith.constant 119 : i32
    %364 = tpu.dynamic_rotate %192 by %c119_i32_242 dim 1 : vector<16x128xf32>, i32 -> vector<16x128xf32>
    %c8_243 = arith.constant 8 : index
    %c0_244 = arith.constant 0 : index
    %365 = vector.load %arg1[%c8_243, %c0_244] : memref<9x128xf32, #tpu.memory_space<vmem>>, vector<1x128xf32>
    %366 = vector.broadcast %365 : vector<1x128xf32> to vector<16x128xf32>
    %367 = arith.mulf %364, %366 : vector<16x128xf32>
    %368 = tpu.concatenate %336, %340, %344, %348, %351, %355, %359, %363, %367 in 0 : vector<16x128xf32>, vector<16x128xf32>, vector<16x128xf32>, vector<16x128xf32>, vector<16x128xf32>, vector<16x128xf32>, vector<16x128xf32>, vector<16x128xf32>, vector<16x128xf32> -> vector<144x128xf32>
    %c0_245 = arith.constant 0 : index
    %c0_246 = arith.constant 0 : index
    %369 = vector.load %arg31[%c0_245, %c0_246] : memref<16x144xf32, #tpu.memory_space<vmem>>, vector<16x144xf32>
    %cst_247 = arith.constant dense<0.000000e+00> : vector<16x128xf32>
    %370 = tpu.matmul %369, %368, %cst_247 {dimension_numbers = #tpu.dot_dimension_numbers<[1], [0], [0], [1], [0, 0, 1, 1], [], []>} : vector<16x144xf32>, vector<144x128xf32>, vector<16x128xf32> -> vector<16x128xf32>
    %371 = arith.addf %332, %370 : vector<16x128xf32>
    %c0_248 = arith.constant 0 : index
    %c0_249 = arith.constant 0 : index
    %372 = vector.load %arg29[%c0_248, %c0_249] : memref<16x1xf32, #tpu.memory_space<vmem>>, vector<16x1xf32>
    %373 = vector.broadcast %372 : vector<16x1xf32> to vector<16x128xf32>
    %374 = arith.mulf %371, %373 : vector<16x128xf32>
    %c0_250 = arith.constant 0 : index
    %c0_251 = arith.constant 0 : index
    %375 = vector.load %arg27[%c0_250, %c0_251] : memref<16x1xf32, #tpu.memory_space<vmem>>, vector<16x1xf32>
    %376 = vector.broadcast %375 : vector<16x1xf32> to vector<16x128xf32>
    %377 = arith.addf %374, %376 : vector<16x128xf32>
    %cst_252 = arith.constant 0.000000e+00 : f32
    %378 = vector.broadcast %cst_252 : f32 to vector<16x128xf32>
    %379 = arith.maximumf %377, %378 : vector<16x128xf32>
    %c9_i32_253 = arith.constant 9 : i32
    %380 = tpu.dynamic_rotate %379 by %c9_i32_253 dim 1 : vector<16x128xf32>, i32 -> vector<16x128xf32>
    %c0_254 = arith.constant 0 : index
    %c0_255 = arith.constant 0 : index
    %381 = vector.load %arg1[%c0_254, %c0_255] : memref<9x128xf32, #tpu.memory_space<vmem>>, vector<1x128xf32>
    %382 = vector.broadcast %381 : vector<1x128xf32> to vector<16x128xf32>
    %383 = arith.mulf %380, %382 : vector<16x128xf32>
    %c8_i32_256 = arith.constant 8 : i32
    %384 = tpu.dynamic_rotate %379 by %c8_i32_256 dim 1 : vector<16x128xf32>, i32 -> vector<16x128xf32>
    %c1_257 = arith.constant 1 : index
    %c0_258 = arith.constant 0 : index
    %385 = vector.load %arg1[%c1_257, %c0_258] : memref<9x128xf32, #tpu.memory_space<vmem>>, vector<1x128xf32>
    %386 = vector.broadcast %385 : vector<1x128xf32> to vector<16x128xf32>
    %387 = arith.mulf %384, %386 : vector<16x128xf32>
    %c7_i32_259 = arith.constant 7 : i32
    %388 = tpu.dynamic_rotate %379 by %c7_i32_259 dim 1 : vector<16x128xf32>, i32 -> vector<16x128xf32>
    %c2_260 = arith.constant 2 : index
    %c0_261 = arith.constant 0 : index
    %389 = vector.load %arg1[%c2_260, %c0_261] : memref<9x128xf32, #tpu.memory_space<vmem>>, vector<1x128xf32>
    %390 = vector.broadcast %389 : vector<1x128xf32> to vector<16x128xf32>
    %391 = arith.mulf %388, %390 : vector<16x128xf32>
    %c1_i32_262 = arith.constant 1 : i32
    %392 = tpu.dynamic_rotate %379 by %c1_i32_262 dim 1 : vector<16x128xf32>, i32 -> vector<16x128xf32>
    %c3_263 = arith.constant 3 : index
    %c0_264 = arith.constant 0 : index
    %393 = vector.load %arg1[%c3_263, %c0_264] : memref<9x128xf32, #tpu.memory_space<vmem>>, vector<1x128xf32>
    %394 = vector.broadcast %393 : vector<1x128xf32> to vector<16x128xf32>
    %395 = arith.mulf %392, %394 : vector<16x128xf32>
    %c4_265 = arith.constant 4 : index
    %c0_266 = arith.constant 0 : index
    %396 = vector.load %arg1[%c4_265, %c0_266] : memref<9x128xf32, #tpu.memory_space<vmem>>, vector<1x128xf32>
    %397 = vector.broadcast %396 : vector<1x128xf32> to vector<16x128xf32>
    %398 = arith.mulf %379, %397 : vector<16x128xf32>
    %c127_i32_267 = arith.constant 127 : i32
    %399 = tpu.dynamic_rotate %379 by %c127_i32_267 dim 1 : vector<16x128xf32>, i32 -> vector<16x128xf32>
    %c5_268 = arith.constant 5 : index
    %c0_269 = arith.constant 0 : index
    %400 = vector.load %arg1[%c5_268, %c0_269] : memref<9x128xf32, #tpu.memory_space<vmem>>, vector<1x128xf32>
    %401 = vector.broadcast %400 : vector<1x128xf32> to vector<16x128xf32>
    %402 = arith.mulf %399, %401 : vector<16x128xf32>
    %c121_i32_270 = arith.constant 121 : i32
    %403 = tpu.dynamic_rotate %379 by %c121_i32_270 dim 1 : vector<16x128xf32>, i32 -> vector<16x128xf32>
    %c6_271 = arith.constant 6 : index
    %c0_272 = arith.constant 0 : index
    %404 = vector.load %arg1[%c6_271, %c0_272] : memref<9x128xf32, #tpu.memory_space<vmem>>, vector<1x128xf32>
    %405 = vector.broadcast %404 : vector<1x128xf32> to vector<16x128xf32>
    %406 = arith.mulf %403, %405 : vector<16x128xf32>
    %c120_i32_273 = arith.constant 120 : i32
    %407 = tpu.dynamic_rotate %379 by %c120_i32_273 dim 1 : vector<16x128xf32>, i32 -> vector<16x128xf32>
    %c7_274 = arith.constant 7 : index
    %c0_275 = arith.constant 0 : index
    %408 = vector.load %arg1[%c7_274, %c0_275] : memref<9x128xf32, #tpu.memory_space<vmem>>, vector<1x128xf32>
    %409 = vector.broadcast %408 : vector<1x128xf32> to vector<16x128xf32>
    %410 = arith.mulf %407, %409 : vector<16x128xf32>
    %c119_i32_276 = arith.constant 119 : i32
    %411 = tpu.dynamic_rotate %379 by %c119_i32_276 dim 1 : vector<16x128xf32>, i32 -> vector<16x128xf32>
    %c8_277 = arith.constant 8 : index
    %c0_278 = arith.constant 0 : index
    %412 = vector.load %arg1[%c8_277, %c0_278] : memref<9x128xf32, #tpu.memory_space<vmem>>, vector<1x128xf32>
    %413 = vector.broadcast %412 : vector<1x128xf32> to vector<16x128xf32>
    %414 = arith.mulf %411, %413 : vector<16x128xf32>
    %415 = tpu.concatenate %383, %387, %391, %395, %398, %402, %406, %410, %414 in 0 : vector<16x128xf32>, vector<16x128xf32>, vector<16x128xf32>, vector<16x128xf32>, vector<16x128xf32>, vector<16x128xf32>, vector<16x128xf32>, vector<16x128xf32>, vector<16x128xf32> -> vector<144x128xf32>
    %c0_279 = arith.constant 0 : index
    %c0_280 = arith.constant 0 : index
    %416 = vector.load %arg33[%c0_279, %c0_280] : memref<16x144xf32, #tpu.memory_space<vmem>>, vector<16x144xf32>
    %cst_281 = arith.constant dense<0.000000e+00> : vector<16x128xf32>
    %417 = tpu.matmul %416, %415, %cst_281 {dimension_numbers = #tpu.dot_dimension_numbers<[1], [0], [0], [1], [0, 0, 1, 1], [], []>} : vector<16x144xf32>, vector<144x128xf32>, vector<16x128xf32> -> vector<16x128xf32>
    %c0_282 = arith.constant 0 : index
    %c0_283 = arith.constant 0 : index
    %418 = vector.load %arg30[%c0_282, %c0_283] : memref<16x1xf32, #tpu.memory_space<vmem>>, vector<16x1xf32>
    %419 = vector.broadcast %418 : vector<16x1xf32> to vector<16x128xf32>
    %420 = arith.mulf %417, %419 : vector<16x128xf32>
    %c0_284 = arith.constant 0 : index
    %c0_285 = arith.constant 0 : index
    %421 = vector.load %arg28[%c0_284, %c0_285] : memref<16x1xf32, #tpu.memory_space<vmem>>, vector<16x1xf32>
    %422 = vector.broadcast %421 : vector<16x1xf32> to vector<16x128xf32>
    %423 = arith.addf %420, %422 : vector<16x128xf32>
    %cst_286 = arith.constant 0.000000e+00 : f32
    %424 = vector.broadcast %cst_286 : f32 to vector<16x128xf32>
    %425 = arith.maximumf %423, %424 : vector<16x128xf32>
    %c0_287 = arith.constant 0 : index
    %c0_288 = arith.constant 0 : index
    %426 = vector.load %arg6[%c0_287, %c0_288] : memref<128x512xf32, #tpu.memory_space<vmem>>, vector<128x512xf32>
    %cst_289 = arith.constant dense<0.000000e+00> : vector<16x512xf32>
    %427 = tpu.matmul %425, %426, %cst_289 {dimension_numbers = #tpu.dot_dimension_numbers<[1], [0], [0], [1], [0, 0, 1, 1], [], []>} : vector<16x128xf32>, vector<128x512xf32>, vector<16x512xf32> -> vector<16x512xf32>
    %c17_i32_290 = arith.constant 17 : i32
    %428 = tpu.dynamic_rotate %427 by %c17_i32_290 dim 1 : vector<16x512xf32>, i32 -> vector<16x512xf32>
    %c0_291 = arith.constant 0 : index
    %c0_292 = arith.constant 0 : index
    %429 = vector.load %arg0[%c0_291, %c0_292] : memref<9x512xf32, #tpu.memory_space<vmem>>, vector<1x512xf32>
    %430 = vector.broadcast %429 : vector<1x512xf32> to vector<16x512xf32>
    %431 = arith.mulf %428, %430 : vector<16x512xf32>
    %c16_i32_293 = arith.constant 16 : i32
    %432 = tpu.dynamic_rotate %427 by %c16_i32_293 dim 1 : vector<16x512xf32>, i32 -> vector<16x512xf32>
    %c1_294 = arith.constant 1 : index
    %c0_295 = arith.constant 0 : index
    %433 = vector.load %arg0[%c1_294, %c0_295] : memref<9x512xf32, #tpu.memory_space<vmem>>, vector<1x512xf32>
    %434 = vector.broadcast %433 : vector<1x512xf32> to vector<16x512xf32>
    %435 = arith.mulf %432, %434 : vector<16x512xf32>
    %c15_i32_296 = arith.constant 15 : i32
    %436 = tpu.dynamic_rotate %427 by %c15_i32_296 dim 1 : vector<16x512xf32>, i32 -> vector<16x512xf32>
    %c2_297 = arith.constant 2 : index
    %c0_298 = arith.constant 0 : index
    %437 = vector.load %arg0[%c2_297, %c0_298] : memref<9x512xf32, #tpu.memory_space<vmem>>, vector<1x512xf32>
    %438 = vector.broadcast %437 : vector<1x512xf32> to vector<16x512xf32>
    %439 = arith.mulf %436, %438 : vector<16x512xf32>
    %c1_i32_299 = arith.constant 1 : i32
    %440 = tpu.dynamic_rotate %427 by %c1_i32_299 dim 1 : vector<16x512xf32>, i32 -> vector<16x512xf32>
    %c3_300 = arith.constant 3 : index
    %c0_301 = arith.constant 0 : index
    %441 = vector.load %arg0[%c3_300, %c0_301] : memref<9x512xf32, #tpu.memory_space<vmem>>, vector<1x512xf32>
    %442 = vector.broadcast %441 : vector<1x512xf32> to vector<16x512xf32>
    %443 = arith.mulf %440, %442 : vector<16x512xf32>
    %c4_302 = arith.constant 4 : index
    %c0_303 = arith.constant 0 : index
    %444 = vector.load %arg0[%c4_302, %c0_303] : memref<9x512xf32, #tpu.memory_space<vmem>>, vector<1x512xf32>
    %445 = vector.broadcast %444 : vector<1x512xf32> to vector<16x512xf32>
    %446 = arith.mulf %427, %445 : vector<16x512xf32>
    %c511_i32_304 = arith.constant 511 : i32
    %447 = tpu.dynamic_rotate %427 by %c511_i32_304 dim 1 : vector<16x512xf32>, i32 -> vector<16x512xf32>
    %c5_305 = arith.constant 5 : index
    %c0_306 = arith.constant 0 : index
    %448 = vector.load %arg0[%c5_305, %c0_306] : memref<9x512xf32, #tpu.memory_space<vmem>>, vector<1x512xf32>
    %449 = vector.broadcast %448 : vector<1x512xf32> to vector<16x512xf32>
    %450 = arith.mulf %447, %449 : vector<16x512xf32>
    %c497_i32_307 = arith.constant 497 : i32
    %451 = tpu.dynamic_rotate %427 by %c497_i32_307 dim 1 : vector<16x512xf32>, i32 -> vector<16x512xf32>
    %c6_308 = arith.constant 6 : index
    %c0_309 = arith.constant 0 : index
    %452 = vector.load %arg0[%c6_308, %c0_309] : memref<9x512xf32, #tpu.memory_space<vmem>>, vector<1x512xf32>
    %453 = vector.broadcast %452 : vector<1x512xf32> to vector<16x512xf32>
    %454 = arith.mulf %451, %453 : vector<16x512xf32>
    %c496_i32_310 = arith.constant 496 : i32
    %455 = tpu.dynamic_rotate %427 by %c496_i32_310 dim 1 : vector<16x512xf32>, i32 -> vector<16x512xf32>
    %c7_311 = arith.constant 7 : index
    %c0_312 = arith.constant 0 : index
    %456 = vector.load %arg0[%c7_311, %c0_312] : memref<9x512xf32, #tpu.memory_space<vmem>>, vector<1x512xf32>
    %457 = vector.broadcast %456 : vector<1x512xf32> to vector<16x512xf32>
    %458 = arith.mulf %455, %457 : vector<16x512xf32>
    %c495_i32_313 = arith.constant 495 : i32
    %459 = tpu.dynamic_rotate %427 by %c495_i32_313 dim 1 : vector<16x512xf32>, i32 -> vector<16x512xf32>
    %c8_314 = arith.constant 8 : index
    %c0_315 = arith.constant 0 : index
    %460 = vector.load %arg0[%c8_314, %c0_315] : memref<9x512xf32, #tpu.memory_space<vmem>>, vector<1x512xf32>
    %461 = vector.broadcast %460 : vector<1x512xf32> to vector<16x512xf32>
    %462 = arith.mulf %459, %461 : vector<16x512xf32>
    %463 = tpu.concatenate %431, %435, %439, %443, %446, %450, %454, %458, %462 in 0 : vector<16x512xf32>, vector<16x512xf32>, vector<16x512xf32>, vector<16x512xf32>, vector<16x512xf32>, vector<16x512xf32>, vector<16x512xf32>, vector<16x512xf32>, vector<16x512xf32> -> vector<144x512xf32>
    %c0_316 = arith.constant 0 : index
    %c0_317 = arith.constant 0 : index
    %464 = vector.load %arg39[%c0_316, %c0_317] : memref<8x144xf32, #tpu.memory_space<vmem>>, vector<8x144xf32>
    %cst_318 = arith.constant dense<0.000000e+00> : vector<8x512xf32>
    %465 = tpu.matmul %464, %463, %cst_318 {dimension_numbers = #tpu.dot_dimension_numbers<[1], [0], [0], [1], [0, 0, 1, 1], [], []>} : vector<8x144xf32>, vector<144x512xf32>, vector<8x512xf32> -> vector<8x512xf32>
    %c17_i32_319 = arith.constant 17 : i32
    %466 = tpu.dynamic_rotate %92 by %c17_i32_319 dim 1 : vector<8x512xf32>, i32 -> vector<8x512xf32>
    %c0_320 = arith.constant 0 : index
    %c0_321 = arith.constant 0 : index
    %467 = vector.load %arg0[%c0_320, %c0_321] : memref<9x512xf32, #tpu.memory_space<vmem>>, vector<1x512xf32>
    %468 = vector.broadcast %467 : vector<1x512xf32> to vector<8x512xf32>
    %469 = arith.mulf %466, %468 : vector<8x512xf32>
    %c16_i32_322 = arith.constant 16 : i32
    %470 = tpu.dynamic_rotate %92 by %c16_i32_322 dim 1 : vector<8x512xf32>, i32 -> vector<8x512xf32>
    %c1_323 = arith.constant 1 : index
    %c0_324 = arith.constant 0 : index
    %471 = vector.load %arg0[%c1_323, %c0_324] : memref<9x512xf32, #tpu.memory_space<vmem>>, vector<1x512xf32>
    %472 = vector.broadcast %471 : vector<1x512xf32> to vector<8x512xf32>
    %473 = arith.mulf %470, %472 : vector<8x512xf32>
    %c15_i32_325 = arith.constant 15 : i32
    %474 = tpu.dynamic_rotate %92 by %c15_i32_325 dim 1 : vector<8x512xf32>, i32 -> vector<8x512xf32>
    %c2_326 = arith.constant 2 : index
    %c0_327 = arith.constant 0 : index
    %475 = vector.load %arg0[%c2_326, %c0_327] : memref<9x512xf32, #tpu.memory_space<vmem>>, vector<1x512xf32>
    %476 = vector.broadcast %475 : vector<1x512xf32> to vector<8x512xf32>
    %477 = arith.mulf %474, %476 : vector<8x512xf32>
    %c1_i32_328 = arith.constant 1 : i32
    %478 = tpu.dynamic_rotate %92 by %c1_i32_328 dim 1 : vector<8x512xf32>, i32 -> vector<8x512xf32>
    %c3_329 = arith.constant 3 : index
    %c0_330 = arith.constant 0 : index
    %479 = vector.load %arg0[%c3_329, %c0_330] : memref<9x512xf32, #tpu.memory_space<vmem>>, vector<1x512xf32>
    %480 = vector.broadcast %479 : vector<1x512xf32> to vector<8x512xf32>
    %481 = arith.mulf %478, %480 : vector<8x512xf32>
    %c4_331 = arith.constant 4 : index
    %c0_332 = arith.constant 0 : index
    %482 = vector.load %arg0[%c4_331, %c0_332] : memref<9x512xf32, #tpu.memory_space<vmem>>, vector<1x512xf32>
    %483 = vector.broadcast %482 : vector<1x512xf32> to vector<8x512xf32>
    %484 = arith.mulf %92, %483 : vector<8x512xf32>
    %c511_i32_333 = arith.constant 511 : i32
    %485 = tpu.dynamic_rotate %92 by %c511_i32_333 dim 1 : vector<8x512xf32>, i32 -> vector<8x512xf32>
    %c5_334 = arith.constant 5 : index
    %c0_335 = arith.constant 0 : index
    %486 = vector.load %arg0[%c5_334, %c0_335] : memref<9x512xf32, #tpu.memory_space<vmem>>, vector<1x512xf32>
    %487 = vector.broadcast %486 : vector<1x512xf32> to vector<8x512xf32>
    %488 = arith.mulf %485, %487 : vector<8x512xf32>
    %c497_i32_336 = arith.constant 497 : i32
    %489 = tpu.dynamic_rotate %92 by %c497_i32_336 dim 1 : vector<8x512xf32>, i32 -> vector<8x512xf32>
    %c6_337 = arith.constant 6 : index
    %c0_338 = arith.constant 0 : index
    %490 = vector.load %arg0[%c6_337, %c0_338] : memref<9x512xf32, #tpu.memory_space<vmem>>, vector<1x512xf32>
    %491 = vector.broadcast %490 : vector<1x512xf32> to vector<8x512xf32>
    %492 = arith.mulf %489, %491 : vector<8x512xf32>
    %c496_i32_339 = arith.constant 496 : i32
    %493 = tpu.dynamic_rotate %92 by %c496_i32_339 dim 1 : vector<8x512xf32>, i32 -> vector<8x512xf32>
    %c7_340 = arith.constant 7 : index
    %c0_341 = arith.constant 0 : index
    %494 = vector.load %arg0[%c7_340, %c0_341] : memref<9x512xf32, #tpu.memory_space<vmem>>, vector<1x512xf32>
    %495 = vector.broadcast %494 : vector<1x512xf32> to vector<8x512xf32>
    %496 = arith.mulf %493, %495 : vector<8x512xf32>
    %c495_i32_342 = arith.constant 495 : i32
    %497 = tpu.dynamic_rotate %92 by %c495_i32_342 dim 1 : vector<8x512xf32>, i32 -> vector<8x512xf32>
    %c8_343 = arith.constant 8 : index
    %c0_344 = arith.constant 0 : index
    %498 = vector.load %arg0[%c8_343, %c0_344] : memref<9x512xf32, #tpu.memory_space<vmem>>, vector<1x512xf32>
    %499 = vector.broadcast %498 : vector<1x512xf32> to vector<8x512xf32>
    %500 = arith.mulf %497, %499 : vector<8x512xf32>
    %501 = tpu.concatenate %469, %473, %477, %481, %484, %488, %492, %496, %500 in 0 : vector<8x512xf32>, vector<8x512xf32>, vector<8x512xf32>, vector<8x512xf32>, vector<8x512xf32>, vector<8x512xf32>, vector<8x512xf32>, vector<8x512xf32>, vector<8x512xf32> -> vector<72x512xf32>
    %c0_345 = arith.constant 0 : index
    %c0_346 = arith.constant 0 : index
    %502 = vector.load %arg38[%c0_345, %c0_346] : memref<8x72xf32, #tpu.memory_space<vmem>>, vector<8x72xf32>
    %cst_347 = arith.constant dense<0.000000e+00> : vector<8x512xf32>
    %503 = tpu.matmul %502, %501, %cst_347 {dimension_numbers = #tpu.dot_dimension_numbers<[1], [0], [0], [1], [0, 0, 1, 1], [], []>} : vector<8x72xf32>, vector<72x512xf32>, vector<8x512xf32> -> vector<8x512xf32>
    %504 = arith.addf %465, %503 : vector<8x512xf32>
    %c0_348 = arith.constant 0 : index
    %c0_349 = arith.constant 0 : index
    %505 = vector.load %arg36[%c0_348, %c0_349] : memref<8x1xf32, #tpu.memory_space<vmem>>, vector<8x1xf32>
    %506 = vector.broadcast %505 : vector<8x1xf32> to vector<8x512xf32>
    %507 = arith.mulf %504, %506 : vector<8x512xf32>
    %c0_350 = arith.constant 0 : index
    %c0_351 = arith.constant 0 : index
    %508 = vector.load %arg34[%c0_350, %c0_351] : memref<8x1xf32, #tpu.memory_space<vmem>>, vector<8x1xf32>
    %509 = vector.broadcast %508 : vector<8x1xf32> to vector<8x512xf32>
    %510 = arith.addf %507, %509 : vector<8x512xf32>
    %cst_352 = arith.constant 0.000000e+00 : f32
    %511 = vector.broadcast %cst_352 : f32 to vector<8x512xf32>
    %512 = arith.maximumf %510, %511 : vector<8x512xf32>
    %c17_i32_353 = arith.constant 17 : i32
    %513 = tpu.dynamic_rotate %512 by %c17_i32_353 dim 1 : vector<8x512xf32>, i32 -> vector<8x512xf32>
    %c0_354 = arith.constant 0 : index
    %c0_355 = arith.constant 0 : index
    %514 = vector.load %arg0[%c0_354, %c0_355] : memref<9x512xf32, #tpu.memory_space<vmem>>, vector<1x512xf32>
    %515 = vector.broadcast %514 : vector<1x512xf32> to vector<8x512xf32>
    %516 = arith.mulf %513, %515 : vector<8x512xf32>
    %c16_i32_356 = arith.constant 16 : i32
    %517 = tpu.dynamic_rotate %512 by %c16_i32_356 dim 1 : vector<8x512xf32>, i32 -> vector<8x512xf32>
    %c1_357 = arith.constant 1 : index
    %c0_358 = arith.constant 0 : index
    %518 = vector.load %arg0[%c1_357, %c0_358] : memref<9x512xf32, #tpu.memory_space<vmem>>, vector<1x512xf32>
    %519 = vector.broadcast %518 : vector<1x512xf32> to vector<8x512xf32>
    %520 = arith.mulf %517, %519 : vector<8x512xf32>
    %c15_i32_359 = arith.constant 15 : i32
    %521 = tpu.dynamic_rotate %512 by %c15_i32_359 dim 1 : vector<8x512xf32>, i32 -> vector<8x512xf32>
    %c2_360 = arith.constant 2 : index
    %c0_361 = arith.constant 0 : index
    %522 = vector.load %arg0[%c2_360, %c0_361] : memref<9x512xf32, #tpu.memory_space<vmem>>, vector<1x512xf32>
    %523 = vector.broadcast %522 : vector<1x512xf32> to vector<8x512xf32>
    %524 = arith.mulf %521, %523 : vector<8x512xf32>
    %c1_i32_362 = arith.constant 1 : i32
    %525 = tpu.dynamic_rotate %512 by %c1_i32_362 dim 1 : vector<8x512xf32>, i32 -> vector<8x512xf32>
    %c3_363 = arith.constant 3 : index
    %c0_364 = arith.constant 0 : index
    %526 = vector.load %arg0[%c3_363, %c0_364] : memref<9x512xf32, #tpu.memory_space<vmem>>, vector<1x512xf32>
    %527 = vector.broadcast %526 : vector<1x512xf32> to vector<8x512xf32>
    %528 = arith.mulf %525, %527 : vector<8x512xf32>
    %c4_365 = arith.constant 4 : index
    %c0_366 = arith.constant 0 : index
    %529 = vector.load %arg0[%c4_365, %c0_366] : memref<9x512xf32, #tpu.memory_space<vmem>>, vector<1x512xf32>
    %530 = vector.broadcast %529 : vector<1x512xf32> to vector<8x512xf32>
    %531 = arith.mulf %512, %530 : vector<8x512xf32>
    %c511_i32_367 = arith.constant 511 : i32
    %532 = tpu.dynamic_rotate %512 by %c511_i32_367 dim 1 : vector<8x512xf32>, i32 -> vector<8x512xf32>
    %c5_368 = arith.constant 5 : index
    %c0_369 = arith.constant 0 : index
    %533 = vector.load %arg0[%c5_368, %c0_369] : memref<9x512xf32, #tpu.memory_space<vmem>>, vector<1x512xf32>
    %534 = vector.broadcast %533 : vector<1x512xf32> to vector<8x512xf32>
    %535 = arith.mulf %532, %534 : vector<8x512xf32>
    %c497_i32_370 = arith.constant 497 : i32
    %536 = tpu.dynamic_rotate %512 by %c497_i32_370 dim 1 : vector<8x512xf32>, i32 -> vector<8x512xf32>
    %c6_371 = arith.constant 6 : index
    %c0_372 = arith.constant 0 : index
    %537 = vector.load %arg0[%c6_371, %c0_372] : memref<9x512xf32, #tpu.memory_space<vmem>>, vector<1x512xf32>
    %538 = vector.broadcast %537 : vector<1x512xf32> to vector<8x512xf32>
    %539 = arith.mulf %536, %538 : vector<8x512xf32>
    %c496_i32_373 = arith.constant 496 : i32
    %540 = tpu.dynamic_rotate %512 by %c496_i32_373 dim 1 : vector<8x512xf32>, i32 -> vector<8x512xf32>
    %c7_374 = arith.constant 7 : index
    %c0_375 = arith.constant 0 : index
    %541 = vector.load %arg0[%c7_374, %c0_375] : memref<9x512xf32, #tpu.memory_space<vmem>>, vector<1x512xf32>
    %542 = vector.broadcast %541 : vector<1x512xf32> to vector<8x512xf32>
    %543 = arith.mulf %540, %542 : vector<8x512xf32>
    %c495_i32_376 = arith.constant 495 : i32
    %544 = tpu.dynamic_rotate %512 by %c495_i32_376 dim 1 : vector<8x512xf32>, i32 -> vector<8x512xf32>
    %c8_377 = arith.constant 8 : index
    %c0_378 = arith.constant 0 : index
    %545 = vector.load %arg0[%c8_377, %c0_378] : memref<9x512xf32, #tpu.memory_space<vmem>>, vector<1x512xf32>
    %546 = vector.broadcast %545 : vector<1x512xf32> to vector<8x512xf32>
    %547 = arith.mulf %544, %546 : vector<8x512xf32>
    %548 = tpu.concatenate %516, %520, %524, %528, %531, %535, %539, %543, %547 in 0 : vector<8x512xf32>, vector<8x512xf32>, vector<8x512xf32>, vector<8x512xf32>, vector<8x512xf32>, vector<8x512xf32>, vector<8x512xf32>, vector<8x512xf32>, vector<8x512xf32> -> vector<72x512xf32>
    %c0_379 = arith.constant 0 : index
    %c0_380 = arith.constant 0 : index
    %549 = vector.load %arg40[%c0_379, %c0_380] : memref<8x72xf32, #tpu.memory_space<vmem>>, vector<8x72xf32>
    %cst_381 = arith.constant dense<0.000000e+00> : vector<8x512xf32>
    %550 = tpu.matmul %549, %548, %cst_381 {dimension_numbers = #tpu.dot_dimension_numbers<[1], [0], [0], [1], [0, 0, 1, 1], [], []>} : vector<8x72xf32>, vector<72x512xf32>, vector<8x512xf32> -> vector<8x512xf32>
    %c0_382 = arith.constant 0 : index
    %c0_383 = arith.constant 0 : index
    %551 = vector.load %arg37[%c0_382, %c0_383] : memref<8x1xf32, #tpu.memory_space<vmem>>, vector<8x1xf32>
    %552 = vector.broadcast %551 : vector<8x1xf32> to vector<8x512xf32>
    %553 = arith.mulf %550, %552 : vector<8x512xf32>
    %c0_384 = arith.constant 0 : index
    %c0_385 = arith.constant 0 : index
    %554 = vector.load %arg35[%c0_384, %c0_385] : memref<8x1xf32, #tpu.memory_space<vmem>>, vector<8x1xf32>
    %555 = vector.broadcast %554 : vector<8x1xf32> to vector<8x512xf32>
    %556 = arith.addf %553, %555 : vector<8x512xf32>
    %cst_386 = arith.constant 0.000000e+00 : f32
    %557 = vector.broadcast %cst_386 : f32 to vector<8x512xf32>
    %558 = arith.maximumf %556, %557 : vector<8x512xf32>
    %c0_387 = arith.constant 0 : index
    %c0_388 = arith.constant 0 : index
    %559 = vector.load %arg20[%c0_387, %c0_388] : memref<1x8xf32, #tpu.memory_space<vmem>>, vector<1x8xf32>
    %cst_389 = arith.constant dense<0.000000e+00> : vector<1x512xf32>
    %560 = tpu.matmul %559, %558, %cst_389 {dimension_numbers = #tpu.dot_dimension_numbers<[1], [0], [0], [1], [0, 0, 1, 1], [], []>} : vector<1x8xf32>, vector<8x512xf32>, vector<1x512xf32> -> vector<1x512xf32>
    %c0_390 = arith.constant 0 : index
    %c0_391 = arith.constant 0 : index
    %561 = vector.load %arg19[%c0_390, %c0_391] : memref<1x1xf32, #tpu.memory_space<vmem>>, vector<1x1xf32>
    %562 = vector.broadcast %561 : vector<1x1xf32> to vector<1x512xf32>
    %563 = arith.addf %560, %562 : vector<1x512xf32>
    %c0_392 = arith.constant 0 : index
    %c0_393 = arith.constant 0 : index
    %564 = vector.load %arg42[%c0_392, %c0_393] : memref<1x512xf32, #tpu.memory_space<vmem>>, vector<1x512xf32>
    tpu.vector_store %arg42[%c0_392, %c0_393], %563 {strides = array<i32>} : memref<1x512xf32, #tpu.memory_space<vmem>>, vector<1x512xf32>,
    return
  }
}

</mosaic_0001>

<llo_original>
// kernel: multi_depth_unet_forward.1
$region0: #{multi_depth_unet_forward.1}
  #allocation0 [shape = 'u32[]', space=smem, size = 0x4, offset = 0x4, fixed_abs, tag = 'smem constant byte address 0x4 - core index']
  #allocation1 [shape = 'u32[72,128]{1,0:T(1,128)}', space=vmem, size = 0x9000, scoped, tag = 'internal scratch']
  #allocation2 [shape = 'f32[1,1]{1,0:T(1,128)S(1)}', space=vmem, size = 0x200, scoped, tag = 'scoped memory for multi_depth_unet_forward.1']
  %s0 = inlined_call_operand.smem [shape: u32[43], index: -1, kind: input, shape index: {}]
  %s1 = sld [smem:[%s0]]
  %s2 = scalar_lea.smem %s0, 1
  %s3 = sld [smem:[%s2]]
  %s4 = scalar_lea.smem %s0, 2
  %s5 = sld [smem:[%s4]]
  %s6 = scalar_lea.smem %s0, 3
  %s7 = sld [smem:[%s6]]
  %s8 = scalar_lea.smem %s0, 4
  %s9 = sld [smem:[%s8]]
  %s10 = scalar_lea.smem %s0, 5
  %s11 = sld [smem:[%s10]]
  %s12 = scalar_lea.smem %s0, 6
  %s13 = sld [smem:[%s12]]
  %s14 = scalar_lea.smem %s0, 7
  %s15 = sld [smem:[%s14]]
  %s16 = scalar_lea.smem %s0, 8
  %s17 = sld [smem:[%s16]]
  %s18 = scalar_lea.smem %s0, 9
  %s19 = sld [smem:[%s18]]
  %s20 = scalar_lea.smem %s0, 10
  %s21 = sld [smem:[%s20]]
  %s22 = scalar_lea.smem %s0, 11
  %s23 = sld [smem:[%s22]]
  %s24 = scalar_lea.smem %s0, 12
  %s25 = sld [smem:[%s24]]
  %s26 = scalar_lea.smem %s0, 13
  %s27 = sld [smem:[%s26]]
  %s28 = scalar_lea.smem %s0, 14
  %s29 = sld [smem:[%s28]]
  %s30 = scalar_lea.smem %s0, 15
  %s31 = sld [smem:[%s30]]
  %s32 = scalar_lea.smem %s0, 16
  %s33 = sld [smem:[%s32]]
  %s34 = scalar_lea.smem %s0, 17
  %s35 = sld [smem:[%s34]]
  %s36 = scalar_lea.smem %s0, 18
  %s37 = sld [smem:[%s36]]
  %s38 = scalar_lea.smem %s0, 19
  %s39 = sld [smem:[%s38]]
  %s40 = scalar_lea.smem %s0, 20
  %s41 = sld [smem:[%s40]]
  %s42 = scalar_lea.smem %s0, 21
  %s43 = sld [smem:[%s42]]
  %s44 = scalar_lea.smem %s0, 22
  %s45 = sld [smem:[%s44]]
  %s46 = scalar_lea.smem %s0, 23
  %s47 = sld [smem:[%s46]]
  %s48 = scalar_lea.smem %s0, 24
  %s49 = sld [smem:[%s48]]
  %s50 = scalar_lea.smem %s0, 25
  %s51 = sld [smem:[%s50]]
  %s52 = scalar_lea.smem %s0, 26
  %s53 = sld [smem:[%s52]]
  %s54 = scalar_lea.smem %s0, 27
  %s55 = sld [smem:[%s54]]
  %s56 = scalar_lea.smem %s0, 28
  %s57 = sld [smem:[%s56]]
  %s58 = scalar_lea.smem %s0, 29
  %s59 = sld [smem:[%s58]]
  %s60 = scalar_lea.smem %s0, 30
  %s61 = sld [smem:[%s60]]
  %s62 = scalar_lea.smem %s0, 31
  %s63 = sld [smem:[%s62]]
  %s64 = scalar_lea.smem %s0, 32
  %s65 = sld [smem:[%s64]]
  %s66 = scalar_lea.smem %s0, 33
  %s67 = sld [smem:[%s66]]
  %s68 = scalar_lea.smem %s0, 34
  %s69 = sld [smem:[%s68]]
  %s70 = scalar_lea.smem %s0, 35
  %s71 = sld [smem:[%s70]]
  %s72 = scalar_lea.smem %s0, 36
  %s73 = sld [smem:[%s72]]
  %s74 = scalar_lea.smem %s0, 37
  %s75 = sld [smem:[%s74]]
  %s76 = scalar_lea.smem %s0, 38
  %s77 = sld [smem:[%s76]]
  %s78 = scalar_lea.smem %s0, 39
  %s79 = sld [smem:[%s78]]
  %s80 = scalar_lea.smem %s0, 40
  %s81 = sld [smem:[%s80]]
  %s82 = scalar_lea.smem %s0, 41
  %s83 = sld [smem:[%s82]]
  %s84 = scalar_lea.smem %s0, 42
  %s85 = sld [smem:[%s84]]
  %s86 = sld [smem:[#allocation0]]
  $region186: #{multi_depth_unet_forward.1} parent=0
    _
  %s88 = ssub.s32 1, %s86
  %s89 = scalar_select 0, %s88, %s86
  %v90 = vstv %s39
  %91 = vst [vmem:[#allocation2] sm:$0x1] %v90
  $region1: #{multi_depth_unet_forward.1} parent=0
    #allocation3 [shape = 'u8[262144]{0}', space=vmem, size = 0x40000, scoped, tag = 'input window, operand 3, single buffered']
    #allocation4 [shape = 's32[1]{0}', space=sflag, size = 0x4, scoped, tag = 'scoped memory for multi_depth_unet_forward.1']
    #allocation5 [shape = 'u8[262144]{0}', space=vmem, size = 0x40000, scoped, tag = 'input window, operand 6, single buffered']
    #allocation6 [shape = 's32[1]{0}', space=sflag, size = 0x4, scoped, tag = 'scoped memory for multi_depth_unet_forward.1']
    %92 = vsyncpa [#allocation4], 0
    %93 = vsyncpa [#allocation6], 0
    // Predicated region
    $region2: #{multi_depth_unet_forward.1} parent=1 // pred_check
      _
    $region3: #{multi_depth_unet_forward.1} parent=1 // pred_check_branch
      %95 = sbr.rel (0) target = $region5
    $region4: #{multi_depth_unet_forward.1} parent=1 // pred_region
      _
    $region5: #{multi_depth_unet_forward.1} parent=1 // pred_fallthru
      _
    // Predicated region
    $region6: #{multi_depth_unet_forward.1} parent=1 // pred_check
      _
    $region7: #{multi_depth_unet_forward.1} parent=1 // pred_check_branch
      %97 = sbr.rel (0) target = $region9
    $region8: #{multi_depth_unet_forward.1} parent=1 // pred_region
      _
    $region9: #{multi_depth_unet_forward.1} parent=1 // pred_fallthru
      _
    // Predicated region
    $region10: #{multi_depth_unet_forward.1} parent=1 // pred_check
      _
    $region11: #{multi_depth_unet_forward.1} parent=1 // pred_check_branch
      %99 = sbr.rel (0) target = $region13
    $region12: #{multi_depth_unet_forward.1} parent=1 // pred_region
      _
    $region13: #{multi_depth_unet_forward.1} parent=1 // pred_fallthru
      _
    // Predicated region
    $region14: #{multi_depth_unet_forward.1} parent=1 // pred_check
      _
    $region15: #{multi_depth_unet_forward.1} parent=1 // pred_check_branch
      %101 = sbr.rel (0) target = $region17
    $region16: #{multi_depth_unet_forward.1} parent=1 // pred_region
      %103 = vsyncadd [#allocation4], 0
      %s104 = sshll.u32 %s7, 4
      %s105 = int_to_ptr.hbm [resolvable:$true] %s104
      %s106 = sshll.u32 [#allocation3], 4
      %s107 = int_to_ptr.vmem [resolvable:$true] %s106
      %112 = dma.hbm_to_vmem [thread:$0]  %s105, 8192, %s107, [#allocation4], 128, 128, 8
    $region17: #{multi_depth_unet_forward.1} parent=1 // pred_fallthru
      _
    // Predicated region
    $region18: #{multi_depth_unet_forward.1} parent=1 // pred_check
      _
    $region19: #{multi_depth_unet_forward.1} parent=1 // pred_check_branch
      %114 = sbr.rel (0) target = $region21
    $region20: #{multi_depth_unet_forward.1} parent=1 // pred_region
      _
    $region21: #{multi_depth_unet_forward.1} parent=1 // pred_fallthru
      _
    // Predicated region
    $region22: #{multi_depth_unet_forward.1} parent=1 // pred_check
      _
    $region23: #{multi_depth_unet_forward.1} parent=1 // pred_check_branch
      %116 = sbr.rel (0) target = $region25
    $region24: #{multi_depth_unet_forward.1} parent=1 // pred_region
      _
    $region25: #{multi_depth_unet_forward.1} parent=1 // pred_fallthru
      _
    // Predicated region
    $region26: #{multi_depth_unet_forward.1} parent=1 // pred_check
      _
    $region27: #{multi_depth_unet_forward.1} parent=1 // pred_check_branch
      %118 = sbr.rel (0) target = $region29
    $region28: #{multi_depth_unet_forward.1} parent=1 // pred_region
      %120 = vsyncadd [#allocation6], 0
      %s121 = sshll.u32 %s13, 4
      %s122 = int_to_ptr.hbm [resolvable:$true] %s121
      %s123 = sshll.u32 [#allocation5], 4
      %s124 = int_to_ptr.vmem [resolvable:$true] %s123
      %129 = dma.hbm_to_vmem [thread:$0]  %s122, 8192, %s124, [#allocation6], 512, 512, 32
    $region29: #{multi_depth_unet_forward.1} parent=1 // pred_fallthru
      _
    // Predicated region
    $region30: #{multi_depth_unet_forward.1} parent=1 // pred_check
      _
    $region31: #{multi_depth_unet_forward.1} parent=1 // pred_check_branch
      %131 = sbr.rel (0) target = $region33
    $region32: #{multi_depth_unet_forward.1} parent=1 // pred_region
      _
    $region33: #{multi_depth_unet_forward.1} parent=1 // pred_fallthru
      _
    // Predicated region
    $region34: #{multi_depth_unet_forward.1} parent=1 // pred_check
      _
    $region35: #{multi_depth_unet_forward.1} parent=1 // pred_check_branch
      %133 = sbr.rel (0) target = $region37
    $region36: #{multi_depth_unet_forward.1} parent=1 // pred_region
      _
    $region37: #{multi_depth_unet_forward.1} parent=1 // pred_fallthru
      _
    // Predicated region
    $region38: #{multi_depth_unet_forward.1} parent=1 // pred_check
      _
    $region39: #{multi_depth_unet_forward.1} parent=1 // pred_check_branch
      %135 = sbr.rel (0) target = $region41
    $region40: #{multi_depth_unet_forward.1} parent=1 // pred_region
      _
    $region41: #{multi_depth_unet_forward.1} parent=1 // pred_fallthru
      _
    // Predicated region
    $region42: #{multi_depth_unet_forward.1} parent=1 // pred_check
      _
    $region43: #{multi_depth_unet_forward.1} parent=1 // pred_check_branch
      %137 = sbr.rel (0) target = $region45
    $region44: #{multi_depth_unet_forward.1} parent=1 // pred_region
      _
    $region45: #{multi_depth_unet_forward.1} parent=1 // pred_fallthru
      _
    // Predicated region
    $region46: #{multi_depth_unet_forward.1} parent=1 // pred_check
      _
    $region47: #{multi_depth_unet_forward.1} parent=1 // pred_check_branch
      %139 = sbr.rel (0) target = $region49
    $region48: #{multi_depth_unet_forward.1} parent=1 // pred_region
      _
    $region49: #{multi_depth_unet_forward.1} parent=1 // pred_fallthru
      _
    // Predicated region
    $region50: #{multi_depth_unet_forward.1} parent=1 // pred_check
      _
    $region51: #{multi_depth_unet_forward.1} parent=1 // pred_check_branch
      %141 = sbr.rel (0) target = $region53
    $region52: #{multi_depth_unet_forward.1} parent=1 // pred_region
      _
    $region53: #{multi_depth_unet_forward.1} parent=1 // pred_fallthru
      _
    // Predicated region
    $region54: #{multi_depth_unet_forward.1} parent=1 // pred_check
      _
    $region55: #{multi_depth_unet_forward.1} parent=1 // pred_check_branch
      %143 = sbr.rel (0) target = $region57
    $region56: #{multi_depth_unet_forward.1} parent=1 // pred_region
      _
    $region57: #{multi_depth_unet_forward.1} parent=1 // pred_fallthru
      _
    // Predicated region
    $region58: #{multi_depth_unet_forward.1} parent=1 // pred_check
      _
    $region59: #{multi_depth_unet_forward.1} parent=1 // pred_check_branch
      %145 = sbr.rel (0) target = $region61
    $region60: #{multi_depth_unet_forward.1} parent=1 // pred_region
      _
    $region61: #{multi_depth_unet_forward.1} parent=1 // pred_fallthru
      _
    // Predicated region
    $region62: #{multi_depth_unet_forward.1} parent=1 // pred_check
      _
    $region63: #{multi_depth_unet_forward.1} parent=1 // pred_check_branch
      %147 = sbr.rel (0) target = $region65
    $region64: #{multi_depth_unet_forward.1} parent=1 // pred_region
      _
    $region65: #{multi_depth_unet_forward.1} parent=1 // pred_fallthru
      _
    // Predicated region
    $region66: #{multi_depth_unet_forward.1} parent=1 // pred_check
      _
    $region67: #{multi_depth_unet_forward.1} parent=1 // pred_check_branch
      %149 = sbr.rel (0) target = $region69
    $region68: #{multi_depth_unet_forward.1} parent=1 // pred_region
      _
    $region69: #{multi_depth_unet_forward.1} parent=1 // pred_fallthru
      _
    // Predicated region
    $region70: #{multi_depth_unet_forward.1} parent=1 // pred_check
      _
    $region71: #{multi_depth_unet_forward.1} parent=1 // pred_check_branch
      %151 = sbr.rel (0) target = $region73
    $region72: #{multi_depth_unet_forward.1} parent=1 // pred_region
      _
    $region73: #{multi_depth_unet_forward.1} parent=1 // pred_fallthru
      _
    // Predicated region
    $region74: #{multi_depth_unet_forward.1} parent=1 // pred_check
      _
    $region75: #{multi_depth_unet_forward.1} parent=1 // pred_check_branch
      %153 = sbr.rel (0) target = $region77
    $region76: #{multi_depth_unet_forward.1} parent=1 // pred_region
      _
    $region77: #{multi_depth_unet_forward.1} parent=1 // pred_fallthru
      _
    // Predicated region
    $region78: #{multi_depth_unet_forward.1} parent=1 // pred_check
      _
    $region79: #{multi_depth_unet_forward.1} parent=1 // pred_check_branch
      %155 = sbr.rel (0) target = $region81
    $region80: #{multi_depth_unet_forward.1} parent=1 // pred_region
      _
    $region81: #{multi_depth_unet_forward.1} parent=1 // pred_fallthru
      _
    // Predicated region
    $region82: #{multi_depth_unet_forward.1} parent=1 // pred_check
      _
    $region83: #{multi_depth_unet_forward.1} parent=1 // pred_check_branch
      %157 = sbr.rel (0) target = $region85
    $region84: #{multi_depth_unet_forward.1} parent=1 // pred_region
      _
    $region85: #{multi_depth_unet_forward.1} parent=1 // pred_fallthru
      _
    // Predicated region
    $region86: #{multi_depth_unet_forward.1} parent=1 // pred_check
      _
    $region87: #{multi_depth_unet_forward.1} parent=1 // pred_check_branch
      %159 = sbr.rel (0) target = $region89
    $region88: #{multi_depth_unet_forward.1} parent=1 // pred_region
      _
    $region89: #{multi_depth_unet_forward.1} parent=1 // pred_fallthru
      _
    // Predicated region
    $region90: #{multi_depth_unet_forward.1} parent=1 // pred_check
      _
    $region91: #{multi_depth_unet_forward.1} parent=1 // pred_check_branch
      %161 = sbr.rel (0) target = $region93
    $region92: #{multi_depth_unet_forward.1} parent=1 // pred_region
      _
    $region93: #{multi_depth_unet_forward.1} parent=1 // pred_fallthru
      _
    // Predicated region
    $region94: #{multi_depth_unet_forward.1} parent=1 // pred_check
      _
    $region95: #{multi_depth_unet_forward.1} parent=1 // pred_check_branch
      %163 = sbr.rel (0) target = $region97
    $region96: #{multi_depth_unet_forward.1} parent=1 // pred_region
      _
    $region97: #{multi_depth_unet_forward.1} parent=1 // pred_fallthru
      _
    // Predicated region
    $region98: #{multi_depth_unet_forward.1} parent=1 // pred_check
      _
    $region99: #{multi_depth_unet_forward.1} parent=1 // pred_check_branch
      %165 = sbr.rel (0) target = $region101
    $region100: #{multi_depth_unet_forward.1} parent=1 // pred_region
      _
    $region101: #{multi_depth_unet_forward.1} parent=1 // pred_fallthru
      _
    // Predicated region
    $region102: #{multi_depth_unet_forward.1} parent=1 // pred_check
      _
    $region103: #{multi_depth_unet_forward.1} parent=1 // pred_check_branch
      %167 = sbr.rel (0) target = $region105
    $region104: #{multi_depth_unet_forward.1} parent=1 // pred_region
      _
    $region105: #{multi_depth_unet_forward.1} parent=1 // pred_fallthru
      _
    // Predicated region
    $region106: #{multi_depth_unet_forward.1} parent=1 // pred_check
      _
    $region107: #{multi_depth_unet_forward.1} parent=1 // pred_check_branch
      %169 = sbr.rel (0) target = $region109
    $region108: #{multi_depth_unet_forward.1} parent=1 // pred_region
      _
    $region109: #{multi_depth_unet_forward.1} parent=1 // pred_fallthru
      _
    // Predicated region
    $region110: #{multi_depth_unet_forward.1} parent=1 // pred_check
      _
    $region111: #{multi_depth_unet_forward.1} parent=1 // pred_check_branch
      %171 = sbr.rel (0) target = $region113
    $region112: #{multi_depth_unet_forward.1} parent=1 // pred_region
      _
    $region113: #{multi_depth_unet_forward.1} parent=1 // pred_fallthru
      _
    // Predicated region
    $region114: #{multi_depth_unet_forward.1} parent=1 // pred_check
      _
    $region115: #{multi_depth_unet_forward.1} parent=1 // pred_check_branch
      %173 = sbr.rel (0) target = $region117
    $region116: #{multi_depth_unet_forward.1} parent=1 // pred_region
      _
    $region117: #{multi_depth_unet_forward.1} parent=1 // pred_fallthru
      _
    // Predicated region
    $region118: #{multi_depth_unet_forward.1} parent=1 // pred_check
      _
    $region119: #{multi_depth_unet_forward.1} parent=1 // pred_check_branch
      %175 = sbr.rel (0) target = $region121
    $region120: #{multi_depth_unet_forward.1} parent=1 // pred_region
      _
    $region121: #{multi_depth_unet_forward.1} parent=1 // pred_fallthru
      _
    // Predicated region
    $region122: #{multi_depth_unet_forward.1} parent=1 // pred_check
      _
    $region123: #{multi_depth_unet_forward.1} parent=1 // pred_check_branch
      %177 = sbr.rel (0) target = $region125
    $region124: #{multi_depth_unet_forward.1} parent=1 // pred_region
      _
    $region125: #{multi_depth_unet_forward.1} parent=1 // pred_fallthru
      _
    // Predicated region
    $region126: #{multi_depth_unet_forward.1} parent=1 // pred_check
      _
    $region127: #{multi_depth_unet_forward.1} parent=1 // pred_check_branch
      %179 = sbr.rel (0) target = $region129
    $region128: #{multi_depth_unet_forward.1} parent=1 // pred_region
      _
    $region129: #{multi_depth_unet_forward.1} parent=1 // pred_fallthru
      _
    // Predicated region
    $region130: #{multi_depth_unet_forward.1} parent=1 // pred_check
      _
    $region131: #{multi_depth_unet_forward.1} parent=1 // pred_check_branch
      %181 = sbr.rel (0) target = $region133
    $region132: #{multi_depth_unet_forward.1} parent=1 // pred_region
      _
    $region133: #{multi_depth_unet_forward.1} parent=1 // pred_fallthru
      _
    // Predicated region
    $region134: #{multi_depth_unet_forward.1} parent=1 // pred_check
      _
    $region135: #{multi_depth_unet_forward.1} parent=1 // pred_check_branch
      %183 = sbr.rel (0) target = $region137
    $region136: #{multi_depth_unet_forward.1} parent=1 // pred_region
      _
    $region137: #{multi_depth_unet_forward.1} parent=1 // pred_fallthru
      _
    // Predicated region
    $region138: #{multi_depth_unet_forward.1} parent=1 // pred_check
      _
    $region139: #{multi_depth_unet_forward.1} parent=1 // pred_check_branch
      %185 = sbr.rel (0) target = $region141
    $region140: #{multi_depth_unet_forward.1} parent=1 // pred_region
      _
    $region141: #{multi_depth_unet_forward.1} parent=1 // pred_fallthru
      _
    // Predicated region
    $region142: #{multi_depth_unet_forward.1} parent=1 // pred_check
      _
    $region143: #{multi_depth_unet_forward.1} parent=1 // pred_check_branch
      %187 = sbr.rel (0) target = $region145
    $region144: #{multi_depth_unet_forward.1} parent=1 // pred_region
      _
    $region145: #{multi_depth_unet_forward.1} parent=1 // pred_fallthru
      _
    // Predicated region
    $region146: #{multi_depth_unet_forward.1} parent=1 // pred_check
      _
    $region147: #{multi_depth_unet_forward.1} parent=1 // pred_check_branch
      %189 = sbr.rel (0) target = $region149
    $region148: #{multi_depth_unet_forward.1} parent=1 // pred_region
      _
    $region149: #{multi_depth_unet_forward.1} parent=1 // pred_fallthru
      _
    // Predicated region
    $region150: #{multi_depth_unet_forward.1} parent=1 // pred_check
      _
    $region151: #{multi_depth_unet_forward.1} parent=1 // pred_check_branch
      %191 = sbr.rel (0) target = $region153
    $region152: #{multi_depth_unet_forward.1} parent=1 // pred_region
      _
    $region153: #{multi_depth_unet_forward.1} parent=1 // pred_fallthru
      _
    // Predicated region
    $region154: #{multi_depth_unet_forward.1} parent=1 // pred_check
      _
    $region155: #{multi_depth_unet_forward.1} parent=1 // pred_check_branch
      %193 = sbr.rel (0) target = $region157
    $region156: #{multi_depth_unet_forward.1} parent=1 // pred_region
      _
    $region157: #{multi_depth_unet_forward.1} parent=1 // pred_fallthru
      _
    // Predicated region
    $region158: #{multi_depth_unet_forward.1} parent=1 // pred_check
      _
    $region159: #{multi_depth_unet_forward.1} parent=1 // pred_check_branch
      %195 = sbr.rel (0) target = $region161
    $region160: #{multi_depth_unet_forward.1} parent=1 // pred_region
      _
    $region161: #{multi_depth_unet_forward.1} parent=1 // pred_fallthru
      _
    // Predicated region
    $region162: #{multi_depth_unet_forward.1} parent=1 // pred_check
      _
    $region163: #{multi_depth_unet_forward.1} parent=1 // pred_check_branch
      %197 = sbr.rel (0) target = $region165
    $region164: #{multi_depth_unet_forward.1} parent=1 // pred_region
      _
    $region165: #{multi_depth_unet_forward.1} parent=1 // pred_fallthru
      _
    // Predicated region
    $region166: #{multi_depth_unet_forward.1} parent=1 // pred_check
      _
    $region167: #{multi_depth_unet_forward.1} parent=1 // pred_check_branch
      %199 = sbr.rel (0) target = $region169
    $region168: #{multi_depth_unet_forward.1} parent=1 // pred_region
      _
    $region169: #{multi_depth_unet_forward.1} parent=1 // pred_fallthru
      _
    // Predicated region
    $region170: #{multi_depth_unet_forward.1} parent=1 // pred_check
      _
    $region171: #{multi_depth_unet_forward.1} parent=1 // pred_check_branch
      %201 = sbr.rel (0) target = $region173
    $region172: #{multi_depth_unet_forward.1} parent=1 // pred_region
      %203 = dma.done [#allocation4], 8192
    $region173: #{multi_depth_unet_forward.1} parent=1 // pred_fallthru
      _
    // Predicated region
    $region174: #{multi_depth_unet_forward.1} parent=1 // pred_check
      _
    $region175: #{multi_depth_unet_forward.1} parent=1 // pred_check_branch
      %205 = sbr.rel (0) target = $region177
    $region176: #{multi_depth_unet_forward.1} parent=1 // pred_region
      %207 = dma.done [#allocation6], 8192
    $region177: #{multi_depth_unet_forward.1} parent=1 // pred_fallthru
      _
    %v208 = vld [vmem:[%s83] sm:$0xff]
    %v209 = vld [vmem:[%s83 + $0x8] sm:$0xff]
    %v210 = vld [vmem:[%s83 + $0x10] sm:$0xff]
    %v211 = vld [vmem:[%s83 + $0x18] sm:$0xff]
    %212 = vrot.lane.b32.xlu0 %v208, 17
    %v213 = vpop.permute.xlu0 %212
    %214 = vrot.lane.b32.xlu0 %v209, 17
    %v215 = vpop.permute.xlu0 %214
    %216 = vrot.lane.b32.xlu0 %v210, 17
    %v217 = vpop.permute.xlu0 %216
    %218 = vrot.lane.b32.xlu0 %v211, 17
    %v219 = vpop.permute.xlu0 %218
    %v220 = vlaneseq
    %v221 = vand.u32 %v220, 127
    %vm222 = vcmp.lt.s32.totalorder %v221, 17
    %v223 = vsel %vm222, %v217, %v219
    %v224 = vsel %vm222, %v215, %v217
    %v225 = vsel %vm222, %v213, %v215
    %v226 = vsel %vm222, %v219, %v213
    %v227 = vld [vmem:[%s1] ss:$8 sm:$0xf]
    %v229 = vperm.slane %v227, 0
    %v230 = vperm.slane %v227, 1
    %v231 = vperm.slane %v227, 2
    %v232 = vperm.slane %v227, 3
    %v237 = vmul.f32 %v226, %v229
    %v238 = vmul.f32 %v225, %v230
    %v239 = vmul.f32 %v224, %v231
    %v240 = vmul.f32 %v223, %v232
    %241 = vrot.lane.b32.xlu0 %v208, 16
    %v242 = vpop.permute.xlu0 %241
    %243 = vrot.lane.b32.xlu0 %v209, 16
    %v244 = vpop.permute.xlu0 %243
    %245 = vrot.lane.b32.xlu0 %v210, 16
    %v246 = vpop.permute.xlu0 %245
    %247 = vrot.lane.b32.xlu0 %v211, 16
    %v248 = vpop.permute.xlu0 %247
    %vm249 = vcmp.lt.s32.totalorder %v221, 16
    %v250 = vsel %vm249, %v246, %v248
    %v251 = vsel %vm249, %v244, %v246
    %v252 = vsel %vm249, %v242, %v244
    %v253 = vsel %vm249, %v248, %v242
    %s254 = scalar_lea.vmem %s1, 1
    %v255 = vld [vmem:[%s254] ss:$8 sm:$0xf]
    %v257 = vperm.slane %v255, 0
    %v258 = vperm.slane %v255, 1
    %v259 = vperm.slane %v255, 2
    %v260 = vperm.slane %v255, 3
    %v265 = vmul.f32 %v253, %v257
    %v266 = vmul.f32 %v252, %v258
    %v267 = vmul.f32 %v251, %v259
    %v268 = vmul.f32 %v250, %v260
    %269 = vrot.lane.b32.xlu0 %v208, 15
    %v270 = vpop.permute.xlu0 %269
    %271 = vrot.lane.b32.xlu0 %v209, 15
    %v272 = vpop.permute.xlu0 %271
    %273 = vrot.lane.b32.xlu0 %v210, 15
    %v274 = vpop.permute.xlu0 %273
    %275 = vrot.lane.b32.xlu0 %v211, 15
    %v276 = vpop.permute.xlu0 %275
    %vm277 = vcmp.lt.s32.totalorder %v221, 15
    %v278 = vsel %vm277, %v274, %v276
    %v279 = vsel %vm277, %v272, %v274
    %v280 = vsel %vm277, %v270, %v272
    %v281 = vsel %vm277, %v276, %v270
    %s282 = scalar_lea.vmem %s1, 2
    %v283 = vld [vmem:[%s282] ss:$8 sm:$0xf]
    %v285 = vperm.slane %v283, 0
    %v286 = vperm.slane %v283, 1
    %v287 = vperm.slane %v283, 2
    %v288 = vperm.slane %v283, 3
    %v293 = vmul.f32 %v281, %v285
    %v294 = vmul.f32 %v280, %v286
    %v295 = vmul.f32 %v279, %v287
    %v296 = vmul.f32 %v278, %v288
    %297 = vrot.lane.b32.xlu0 %v208, 1
    %v298 = vpop.permute.xlu0 %297
    %299 = vrot.lane.b32.xlu0 %v209, 1
    %v300 = vpop.permute.xlu0 %299
    %301 = vrot.lane.b32.xlu0 %v210, 1
    %v302 = vpop.permute.xlu0 %301
    %303 = vrot.lane.b32.xlu0 %v211, 1
    %v304 = vpop.permute.xlu0 %303
    %vm305 = vcmp.lt.s32.totalorder %v221, 1
    %v306 = vsel %vm305, %v302, %v304
    %v307 = vsel %vm305, %v300, %v302
    %v308 = vsel %vm305, %v298, %v300
    %v309 = vsel %vm305, %v304, %v298
    %s310 = scalar_lea.vmem %s1, 3
    %v311 = vld [vmem:[%s310] ss:$8 sm:$0xf]
    %v313 = vperm.slane %v311, 0
    %v314 = vperm.slane %v311, 1
    %v315 = vperm.slane %v311, 2
    %v316 = vperm.slane %v311, 3
    %v321 = vmul.f32 %v309, %v313
    %v322 = vmul.f32 %v308, %v314
    %v323 = vmul.f32 %v307, %v315
    %v324 = vmul.f32 %v306, %v316
    %s325 = scalar_lea.vmem %s1, 4
    %v326 = vld [vmem:[%s325] ss:$8 sm:$0xf]
    %v328 = vperm.slane %v326, 0
    %v329 = vperm.slane %v326, 1
    %v330 = vperm.slane %v326, 2
    %v331 = vperm.slane %v326, 3
    %v336 = vmul.f32 %v208, %v328
    %v337 = vmul.f32 %v209, %v329
    %v338 = vmul.f32 %v210, %v330
    %v339 = vmul.f32 %v211, %v331
    %340 = vrot.lane.b32.xlu0 %v208, 127
    %v341 = vpop.permute.xlu0 %340
    %342 = vrot.lane.b32.xlu0 %v209, 127
    %v343 = vpop.permute.xlu0 %342
    %344 = vrot.lane.b32.xlu0 %v210, 127
    %v345 = vpop.permute.xlu0 %344
    %346 = vrot.lane.b32.xlu0 %v211, 127
    %v347 = vpop.permute.xlu0 %346
    %vm348 = vcmp.lt.s32.totalorder %v221, 127
    %v349 = vsel %vm348, %v345, %v347
    %v350 = vsel %vm348, %v343, %v345
    %v351 = vsel %vm348, %v341, %v343
    %v352 = vsel %vm348, %v347, %v341
    %s353 = scalar_lea.vmem %s1, 5
    %v354 = vld [vmem:[%s353] ss:$8 sm:$0xf]
    %v356 = vperm.slane %v354, 0
    %v357 = vperm.slane %v354, 1
    %v358 = vperm.slane %v354, 2
    %v359 = vperm.slane %v354, 3
    %v364 = vmul.f32 %v351, %v356
    %v365 = vmul.f32 %v350, %v357
    %v366 = vmul.f32 %v349, %v358
    %v367 = vmul.f32 %v352, %v359
    %368 = vrot.lane.b32.xlu0 %v208, 113
    %v369 = vpop.permute.xlu0 %368
    %370 = vrot.lane.b32.xlu0 %v209, 113
    %v371 = vpop.permute.xlu0 %370
    %372 = vrot.lane.b32.xlu0 %v210, 113
    %v373 = vpop.permute.xlu0 %372
    %374 = vrot.lane.b32.xlu0 %v211, 113
    %v375 = vpop.permute.xlu0 %374
    %vm376 = vcmp.lt.s32.totalorder %v221, 113
    %v377 = vsel %vm376, %v373, %v375
    %v378 = vsel %vm376, %v371, %v373
    %v379 = vsel %vm376, %v369, %v371
    %v380 = vsel %vm376, %v375, %v369
    %s381 = scalar_lea.vmem %s1, 6
    %v382 = vld [vmem:[%s381] ss:$8 sm:$0xf]
    %v384 = vperm.slane %v382, 0
    %v385 = vperm.slane %v382, 1
    %v386 = vperm.slane %v382, 2
    %v387 = vperm.slane %v382, 3
    %v392 = vmul.f32 %v379, %v384
    %v393 = vmul.f32 %v378, %v385
    %v394 = vmul.f32 %v377, %v386
    %v395 = vmul.f32 %v380, %v387
    %396 = vrot.lane.b32.xlu0 %v208, 112
    %v397 = vpop.permute.xlu0 %396
    %398 = vrot.lane.b32.xlu0 %v209, 112
    %v399 = vpop.permute.xlu0 %398
    %400 = vrot.lane.b32.xlu0 %v210, 112
    %v401 = vpop.permute.xlu0 %400
    %402 = vrot.lane.b32.xlu0 %v211, 112
    %v403 = vpop.permute.xlu0 %402
    %vm404 = vcmp.lt.s32.totalorder %v221, 112
    %v405 = vsel %vm404, %v401, %v403
    %v406 = vsel %vm404, %v399, %v401
    %v407 = vsel %vm404, %v397, %v399
    %v408 = vsel %vm404, %v403, %v397
    %s409 = scalar_lea.vmem %s1, 7
    %v410 = vld [vmem:[%s409] ss:$8 sm:$0xf]
    %v412 = vperm.slane %v410, 0
    %v413 = vperm.slane %v410, 1
    %v414 = vperm.slane %v410, 2
    %v415 = vperm.slane %v410, 3
    %v420 = vmul.f32 %v407, %v412
    %v421 = vmul.f32 %v406, %v413
    %v422 = vmul.f32 %v405, %v414
    %v423 = vmul.f32 %v408, %v415
    %424 = vrot.lane.b32.xlu0 %v208, 111
    %v425 = vpop.permute.xlu0 %424
    %426 = vrot.lane.b32.xlu0 %v209, 111
    %v427 = vpop.permute.xlu0 %426
    %428 = vrot.lane.b32.xlu0 %v210, 111
    %v429 = vpop.permute.xlu0 %428
    %430 = vrot.lane.b32.xlu0 %v211, 111
    %v431 = vpop.permute.xlu0 %430
    %vm432 = vcmp.lt.s32.totalorder %v221, 111
    %v433 = vsel %vm432, %v429, %v431
    %v434 = vsel %vm432, %v427, %v429
    %v435 = vsel %vm432, %v425, %v427
    %v436 = vsel %vm432, %v431, %v425
    %s437 = scalar_lea.vmem %s1, 32
    %v438 = vld [vmem:[%s437] ss:$8 sm:$0xf]
    %v440 = vperm.slane %v438, 0
    %v441 = vperm.slane %v438, 1
    %v442 = vperm.slane %v438, 2
    %v443 = vperm.slane %v438, 3
    %v448 = vmul.f32 %v435, %v440
    %v449 = vmul.f32 %v434, %v441
    %v450 = vmul.f32 %v433, %v442
    %v451 = vmul.f32 %v436, %v443
    %v452 = vld [vmem:[%s51] sm:$0xff]
    %vm453 = vcmask 588800
    %v455 = vsel %vm453, %v452, 0
    %457 = vmatpush.msra.mxu0 0.0
    %458 = vmatpush.msra.mxu0 0.0
    %459 = vmatpush.msra.mxu0 0.0
    %460 = vmatpush.msra.mxu0 0.0
    %461 = vmatpush.msra.mxu0 0.0
    %462 = vmatpush.msra.mxu0 0.0
    %463 = vmatpush.msra.mxu0 0.0
    %464 = vmatpush.msra.mxu0 %v448
    %465 = vmatpush.msra.mxu0 %v420
    %466 = vmatpush.msra.mxu0 %v392
    %467 = vmatpush.msra.mxu0 %v364
    %468 = vmatpush.msra.mxu0 %v336
    %469 = vmatpush.msra.mxu0 %v321
    %470 = vmatpush.msra.mxu0 %v293
    %471 = vmatpush.msra.mxu0 %v265
    %472 = vmatpush.msra.mxu0 %v237
    %473 = vmatmul.f32.gmra.mxu0 %v455
    %v474 = vpop.f32.mrf.mxu0
    %v475 = vadd.f32 0.0, %v474
    %476 = vdwg.mxu0
    %477 = vmatpush.msra.mxu0 0.0
    %478 = vmatpush.msra.mxu0 0.0
    %479 = vmatpush.msra.mxu0 0.0
    %480 = vmatpush.msra.mxu0 0.0
    %481 = vmatpush.msra.mxu0 0.0
    %482 = vmatpush.msra.mxu0 0.0
    %483 = vmatpush.msra.mxu0 0.0
    %484 = vmatpush.msra.mxu0 %v449
    %485 = vmatpush.msra.mxu0 %v421
    %486 = vmatpush.msra.mxu0 %v393
    %487 = vmatpush.msra.mxu0 %v365
    %488 = vmatpush.msra.mxu0 %v337
    %489 = vmatpush.msra.mxu0 %v322
    %490 = vmatpush.msra.mxu0 %v294
    %491 = vmatpush.msra.mxu0 %v266
    %492 = vmatpush.msra.mxu0 %v238
    %493 = vmatmul.f32.gmra.mxu0 %v455
    %v494 = vpop.f32.mrf.mxu0
    %v495 = vadd.f32 0.0, %v494
    %496 = vdwg.mxu0
    %497 = vmatpush.msra.mxu0 0.0
    %498 = vmatpush.msra.mxu0 0.0
    %499 = vmatpush.msra.mxu0 0.0
    %500 = vmatpush.msra.mxu0 0.0
    %501 = vmatpush.msra.mxu0 0.0
    %502 = vmatpush.msra.mxu0 0.0
    %503 = vmatpush.msra.mxu0 0.0
    %504 = vmatpush.msra.mxu0 %v450
    %505 = vmatpush.msra.mxu0 %v422
    %506 = vmatpush.msra.mxu0 %v394
    %507 = vmatpush.msra.mxu0 %v366
    %508 = vmatpush.msra.mxu0 %v338
    %509 = vmatpush.msra.mxu0 %v323
    %510 = vmatpush.msra.mxu0 %v295
    %511 = vmatpush.msra.mxu0 %v267
    %512 = vmatpush.msra.mxu0 %v239
    %513 = vmatmul.f32.gmra.mxu0 %v455
    %v514 = vpop.f32.mrf.mxu0
    %v515 = vadd.f32 0.0, %v514
    %516 = vdwg.mxu0
    %517 = vmatpush.msra.mxu0 0.0
    %518 = vmatpush.msra.mxu0 0.0
    %519 = vmatpush.msra.mxu0 0.0
    %520 = vmatpush.msra.mxu0 0.0
    %521 = vmatpush.msra.mxu0 0.0
    %522 = vmatpush.msra.mxu0 0.0
    %523 = vmatpush.msra.mxu0 0.0
    %524 = vmatpush.msra.mxu0 %v451
    %525 = vmatpush.msra.mxu0 %v423
    %526 = vmatpush.msra.mxu0 %v395
    %527 = vmatpush.msra.mxu0 %v367
    %528 = vmatpush.msra.mxu0 %v339
    %529 = vmatpush.msra.mxu0 %v324
    %530 = vmatpush.msra.mxu0 %v296
    %531 = vmatpush.msra.mxu0 %v268
    %532 = vmatpush.msra.mxu0 %v240
    %533 = vmatmul.f32.gmra.mxu0 %v455
    %v534 = vpop.f32.mrf.mxu0
    %v535 = vadd.f32 0.0, %v534
    %536 = vdwg.mxu0
    %v537 = vld [vmem:[%s47] sm:$0xff]
    %539 = vset.pattern.permute.xlu0 0
    %540 = vperm.xlu0 %539, %v537
    %v541 = vpop.permute.xlu0 %540
    %v543 = vmul.f32 %v475, %v541
    %v544 = vmul.f32 %v495, %v541
    %v545 = vmul.f32 %v515, %v541
    %v546 = vmul.f32 %v535, %v541
    %v547 = vld [vmem:[%s43] sm:$0xff]
    %549 = vset.pattern.permute.xlu0 0
    %550 = vperm.xlu0 %549, %v547
    %v551 = vpop.permute.xlu0 %550
    %v553 = vadd.f32 %v543, %v551
    %v554 = vadd.f32 %v544, %v551
    %v555 = vadd.f32 %v545, %v551
    %v556 = vadd.f32 %v546, %v551
    %v557 = vmax.f32 %v553, 0.0
    %v558 = vmax.f32 %v554, 0.0
    %v559 = vmax.f32 %v555, 0.0
    %v560 = vmax.f32 %v556, 0.0
    %561 = vrot.lane.b32.xlu0 %v557, 17
    %v562 = vpop.permute.xlu0 %561
    %563 = vrot.lane.b32.xlu0 %v558, 17
    %v564 = vpop.permute.xlu0 %563
    %565 = vrot.lane.b32.xlu0 %v559, 17
    %v566 = vpop.permute.xlu0 %565
    %567 = vrot.lane.b32.xlu0 %v560, 17
    %v568 = vpop.permute.xlu0 %567
    %v569 = vsel %vm222, %v566, %v568
    %v570 = vsel %vm222, %v564, %v566
    %v571 = vsel %vm222, %v562, %v564
    %v572 = vsel %vm222, %v568, %v562
    %v573 = vmul.f32 %v572, %v229
    %v574 = vmul.f32 %v571, %v230
    %v575 = vmul.f32 %v570, %v231
    %v576 = vmul.f32 %v569, %v232
    %577 = vrot.lane.b32.xlu0 %v557, 16
    %v578 = vpop.permute.xlu0 %577
    %579 = vrot.lane.b32.xlu0 %v558, 16
    %v580 = vpop.permute.xlu0 %579
    %581 = vrot.lane.b32.xlu0 %v559, 16
    %v582 = vpop.permute.xlu0 %581
    %583 = vrot.lane.b32.xlu0 %v560, 16
    %v584 = vpop.permute.xlu0 %583
    %v585 = vsel %vm249, %v582, %v584
    %v586 = vsel %vm249, %v580, %v582
    %v587 = vsel %vm249, %v578, %v580
    %v588 = vsel %vm249, %v584, %v578
    %v589 = vmul.f32 %v588, %v257
    %v590 = vmul.f32 %v587, %v258
    %v591 = vmul.f32 %v586, %v259
    %v592 = vmul.f32 %v585, %v260
    %593 = vrot.lane.b32.xlu0 %v557, 15
    %v594 = vpop.permute.xlu0 %593
    %595 = vrot.lane.b32.xlu0 %v558, 15
    %v596 = vpop.permute.xlu0 %595
    %597 = vrot.lane.b32.xlu0 %v559, 15
    %v598 = vpop.permute.xlu0 %597
    %599 = vrot.lane.b32.xlu0 %v560, 15
    %v600 = vpop.permute.xlu0 %599
    %v601 = vsel %vm277, %v598, %v600
    %v602 = vsel %vm277, %v596, %v598
    %v603 = vsel %vm277, %v594, %v596
    %v604 = vsel %vm277, %v600, %v594
    %v605 = vmul.f32 %v604, %v285
    %v606 = vmul.f32 %v603, %v286
    %v607 = vmul.f32 %v602, %v287
    %v608 = vmul.f32 %v601, %v288
    %609 = vrot.lane.b32.xlu0 %v557, 1
    %v610 = vpop.permute.xlu0 %609
    %611 = vrot.lane.b32.xlu0 %v558, 1
    %v612 = vpop.permute.xlu0 %611
    %613 = vrot.lane.b32.xlu0 %v559, 1
    %v614 = vpop.permute.xlu0 %613
    %615 = vrot.lane.b32.xlu0 %v560, 1
    %v616 = vpop.permute.xlu0 %615
    %v617 = vsel %vm305, %v614, %v616
    %v618 = vsel %vm305, %v612, %v614
    %v619 = vsel %vm305, %v610, %v612
    %v620 = vsel %vm305, %v616, %v610
    %v621 = vmul.f32 %v620, %v313
    %v622 = vmul.f32 %v619, %v314
    %v623 = vmul.f32 %v618, %v315
    %v624 = vmul.f32 %v617, %v316
    %v625 = vmul.f32 %v557, %v328
    %v626 = vmul.f32 %v558, %v329
    %v627 = vmul.f32 %v559, %v330
    %v628 = vmul.f32 %v560, %v331
    %629 = vrot.lane.b32.xlu0 %v557, 127
    %v630 = vpop.permute.xlu0 %629
    %631 = vrot.lane.b32.xlu0 %v558, 127
    %v632 = vpop.permute.xlu0 %631
    %633 = vrot.lane.b32.xlu0 %v559, 127
    %v634 = vpop.permute.xlu0 %633
    %635 = vrot.lane.b32.xlu0 %v560, 127
    %v636 = vpop.permute.xlu0 %635
    %v637 = vsel %vm348, %v634, %v636
    %v638 = vsel %vm348, %v632, %v634
    %v639 = vsel %vm348, %v630, %v632
    %v640 = vsel %vm348, %v636, %v630
    %v641 = vmul.f32 %v639, %v356
    %v642 = vmul.f32 %v638, %v357
    %v643 = vmul.f32 %v637, %v358
    %v644 = vmul.f32 %v640, %v359
    %645 = vrot.lane.b32.xlu0 %v557, 113
    %v646 = vpop.permute.xlu0 %645
    %647 = vrot.lane.b32.xlu0 %v558, 113
    %v648 = vpop.permute.xlu0 %647
    %649 = vrot.lane.b32.xlu0 %v559, 113
    %v650 = vpop.permute.xlu0 %649
    %651 = vrot.lane.b32.xlu0 %v560, 113
    %v652 = vpop.permute.xlu0 %651
    %v653 = vsel %vm376, %v650, %v652
    %v654 = vsel %vm376, %v648, %v650
    %v655 = vsel %vm376, %v646, %v648
    %v656 = vsel %vm376, %v652, %v646
    %v657 = vmul.f32 %v655, %v384
    %v658 = vmul.f32 %v654, %v385
    %v659 = vmul.f32 %v653, %v386
    %v660 = vmul.f32 %v656, %v387
    %661 = vrot.lane.b32.xlu0 %v557, 112
    %v662 = vpop.permute.xlu0 %661
    %663 = vrot.lane.b32.xlu0 %v558, 112
    %v664 = vpop.permute.xlu0 %663
    %665 = vrot.lane.b32.xlu0 %v559, 112
    %v666 = vpop.permute.xlu0 %665
    %667 = vrot.lane.b32.xlu0 %v560, 112
    %v668 = vpop.permute.xlu0 %667
    %v669 = vsel %vm404, %v666, %v668
    %v670 = vsel %vm404, %v664, %v666
    %v671 = vsel %vm404, %v662, %v664
    %v672 = vsel %vm404, %v668, %v662
    %v673 = vmul.f32 %v671, %v412
    %v674 = vmul.f32 %v670, %v413
    %v675 = vmul.f32 %v669, %v414
    %v676 = vmul.f32 %v672, %v415
    %677 = vrot.lane.b32.xlu0 %v557, 111
    %v678 = vpop.permute.xlu0 %677
    %679 = vrot.lane.b32.xlu0 %v558, 111
    %v680 = vpop.permute.xlu0 %679
    %681 = vrot.lane.b32.xlu0 %v559, 111
    %v682 = vpop.permute.xlu0 %681
    %683 = vrot.lane.b32.xlu0 %v560, 111
    %v684 = vpop.permute.xlu0 %683
    %v685 = vsel %vm432, %v682, %v684
    %v686 = vsel %vm432, %v680, %v682
    %v687 = vsel %vm432, %v678, %v680
    %v688 = vsel %vm432, %v684, %v678
    %v689 = vmul.f32 %v687, %v440
    %v690 = vmul.f32 %v686, %v441
    %v691 = vmul.f32 %v685, %v442
    %v692 = vmul.f32 %v688, %v443
    %v693 = vld [vmem:[%s53] sm:$0xff]
    %v695 = vsel %vm453, %v693, 0
    %697 = vmatpush.msra.mxu0 0.0
    %698 = vmatpush.msra.mxu0 0.0
    %699 = vmatpush.msra.mxu0 0.0
    %700 = vmatpush.msra.mxu0 0.0
    %701 = vmatpush.msra.mxu0 0.0
    %702 = vmatpush.msra.mxu0 0.0
    %703 = vmatpush.msra.mxu0 0.0
    %704 = vmatpush.msra.mxu0 %v689
    %705 = vmatpush.msra.mxu0 %v673
    %706 = vmatpush.msra.mxu0 %v657
    %707 = vmatpush.msra.mxu0 %v641
    %708 = vmatpush.msra.mxu0 %v625
    %709 = vmatpush.msra.mxu0 %v621
    %710 = vmatpush.msra.mxu0 %v605
    %711 = vmatpush.msra.mxu0 %v589
    %712 = vmatpush.msra.mxu0 %v573
    %713 = vmatmul.f32.gmra.mxu0 %v695
    %v714 = vpop.f32.mrf.mxu0
    %v715 = vadd.f32 0.0, %v714
    %716 = vdwg.mxu0
    %717 = vmatpush.msra.mxu0 0.0
    %718 = vmatpush.msra.mxu0 0.0
    %719 = vmatpush.msra.mxu0 0.0
    %720 = vmatpush.msra.mxu0 0.0
    %721 = vmatpush.msra.mxu0 0.0
    %722 = vmatpush.msra.mxu0 0.0
    %723 = vmatpush.msra.mxu0 0.0
    %724 = vmatpush.msra.mxu0 %v690
    %725 = vmatpush.msra.mxu0 %v674
    %726 = vmatpush.msra.mxu0 %v658
    %727 = vmatpush.msra.mxu0 %v642
    %728 = vmatpush.msra.mxu0 %v626
    %729 = vmatpush.msra.mxu0 %v622
    %730 = vmatpush.msra.mxu0 %v606
    %731 = vmatpush.msra.mxu0 %v590
    %732 = vmatpush.msra.mxu0 %v574
    %733 = vmatmul.f32.gmra.mxu0 %v695
    %v734 = vpop.f32.mrf.mxu0
    %v735 = vadd.f32 0.0, %v734
    %736 = vdwg.mxu0
    %737 = vmatpush.msra.mxu0 0.0
    %738 = vmatpush.msra.mxu0 0.0
    %739 = vmatpush.msra.mxu0 0.0
    %740 = vmatpush.msra.mxu0 0.0
    %741 = vmatpush.msra.mxu0 0.0
    %742 = vmatpush.msra.mxu0 0.0
    %743 = vmatpush.msra.mxu0 0.0
    %744 = vmatpush.msra.mxu0 %v691
    %745 = vmatpush.msra.mxu0 %v675
    %746 = vmatpush.msra.mxu0 %v659
    %747 = vmatpush.msra.mxu0 %v643
    %748 = vmatpush.msra.mxu0 %v627
    %749 = vmatpush.msra.mxu0 %v623
    %750 = vmatpush.msra.mxu0 %v607
    %751 = vmatpush.msra.mxu0 %v591
    %752 = vmatpush.msra.mxu0 %v575
    %753 = vmatmul.f32.gmra.mxu0 %v695
    %v754 = vpop.f32.mrf.mxu0
    %v755 = vadd.f32 0.0, %v754
    %756 = vdwg.mxu0
    %757 = vmatpush.msra.mxu0 0.0
    %758 = vmatpush.msra.mxu0 0.0
    %759 = vmatpush.msra.mxu0 0.0
    %760 = vmatpush.msra.mxu0 0.0
    %761 = vmatpush.msra.mxu0 0.0
    %762 = vmatpush.msra.mxu0 0.0
    %763 = vmatpush.msra.mxu0 0.0
    %764 = vmatpush.msra.mxu0 %v692
    %765 = vmatpush.msra.mxu0 %v676
    %766 = vmatpush.msra.mxu0 %v660
    %767 = vmatpush.msra.mxu0 %v644
    %768 = vmatpush.msra.mxu0 %v628
    %769 = vmatpush.msra.mxu0 %v624
    %770 = vmatpush.msra.mxu0 %v608
    %771 = vmatpush.msra.mxu0 %v592
    %772 = vmatpush.msra.mxu0 %v576
    %773 = vmatmul.f32.gmra.mxu0 %v695
    %v774 = vpop.f32.mrf.mxu0
    %v775 = vadd.f32 0.0, %v774
    %776 = vdwg.mxu0
    %v777 = vld [vmem:[%s49] sm:$0xff]
    %779 = vset.pattern.permute.xlu0 0
    %780 = vperm.xlu0 %779, %v777
    %v781 = vpop.permute.xlu0 %780
    %v783 = vmul.f32 %v715, %v781
    %v784 = vmul.f32 %v735, %v781
    %v785 = vmul.f32 %v755, %v781
    %v786 = vmul.f32 %v775, %v781
    %v787 = vld [vmem:[%s45] sm:$0xff]
    %789 = vset.pattern.permute.xlu0 0
    %790 = vperm.xlu0 %789, %v787
    %v791 = vpop.permute.xlu0 %790
    %v793 = vadd.f32 %v783, %v791
    %v794 = vadd.f32 %v784, %v791
    %v795 = vadd.f32 %v785, %v791
    %v796 = vadd.f32 %v786, %v791
    %v797 = vmax.f32 %v793, 0.0
    %v798 = vmax.f32 %v794, 0.0
    %v799 = vmax.f32 %v795, 0.0
    %v800 = vmax.f32 %v796, 0.0
    %801 = vrot.lane.b32.xlu0 %v797, 127
    %v802 = vpop.permute.xlu0 %801
    %803 = vrot.lane.b32.xlu0 %v798, 127
    %v804 = vpop.permute.xlu0 %803
    %805 = vrot.lane.b32.xlu0 %v799, 127
    %v806 = vpop.permute.xlu0 %805
    %807 = vrot.lane.b32.xlu0 %v800, 127
    %v808 = vpop.permute.xlu0 %807
    %v809 = vsel %vm348, %v806, %v808
    %v810 = vsel %vm348, %v804, %v806
    %v811 = vsel %vm348, %v802, %v804
    %v812 = vsel %vm348, %v808, %v802
    %v813 = vmax.f32 %v797, %v811
    %v814 = vmax.f32 %v798, %v810
    %v815 = vmax.f32 %v799, %v809
    %v816 = vmax.f32 %v800, %v812
    %817 = vrot.lane.b32.xlu0 %v797, 112
    %v818 = vpop.permute.xlu0 %817
    %819 = vrot.lane.b32.xlu0 %v798, 112
    %v820 = vpop.permute.xlu0 %819
    %821 = vrot.lane.b32.xlu0 %v799, 112
    %v822 = vpop.permute.xlu0 %821
    %823 = vrot.lane.b32.xlu0 %v800, 112
    %v824 = vpop.permute.xlu0 %823
    %v825 = vsel %vm404, %v822, %v824
    %v826 = vsel %vm404, %v820, %v822
    %v827 = vsel %vm404, %v818, %v820
    %v828 = vsel %vm404, %v824, %v818
    %v829 = vmax.f32 %v813, %v827
    %v830 = vmax.f32 %v814, %v826
    %v831 = vmax.f32 %v815, %v825
    %v832 = vmax.f32 %v816, %v828
    %833 = vrot.lane.b32.xlu0 %v797, 111
    %v834 = vpop.permute.xlu0 %833
    %835 = vrot.lane.b32.xlu0 %v798, 111
    %v836 = vpop.permute.xlu0 %835
    %837 = vrot.lane.b32.xlu0 %v799, 111
    %v838 = vpop.permute.xlu0 %837
    %839 = vrot.lane.b32.xlu0 %v800, 111
    %v840 = vpop.permute.xlu0 %839
    %v841 = vsel %vm432, %v838, %v840
    %v842 = vsel %vm432, %v836, %v838
    %v843 = vsel %vm432, %v834, %v836
    %v844 = vsel %vm432, %v840, %v834
    %v845 = vmax.f32 %v829, %v843
    %v846 = vmax.f32 %v830, %v842
    %v847 = vmax.f32 %v831, %v841
    %v848 = vmax.f32 %v832, %v844
    %v849 = vld [vmem:[#allocation3] sm:$0xff]
    %v850 = vld [vmem:[#allocation3 + $0x8] sm:$0xff]
    %v851 = vld [vmem:[#allocation3 + $0x10] sm:$0xff]
    %v852 = vld [vmem:[#allocation3 + $0x18] sm:$0xff]
    %v853 = vld [vmem:[#allocation3 + $0x20] sm:$0xff]
    %v854 = vld [vmem:[#allocation3 + $0x28] sm:$0xff]
    %v855 = vld [vmem:[#allocation3 + $0x30] sm:$0xff]
    %v856 = vld [vmem:[#allocation3 + $0x38] sm:$0xff]
    %v857 = vld [vmem:[#allocation3 + $0x40] sm:$0xff]
    %v858 = vld [vmem:[#allocation3 + $0x48] sm:$0xff]
    %v859 = vld [vmem:[#allocation3 + $0x50] sm:$0xff]
    %v860 = vld [vmem:[#allocation3 + $0x58] sm:$0xff]
    %v861 = vld [vmem:[#allocation3 + $0x60] sm:$0xff]
    %v862 = vld [vmem:[#allocation3 + $0x68] sm:$0xff]
    %v863 = vld [vmem:[#allocation3 + $0x70] sm:$0xff]
    %v864 = vld [vmem:[#allocation3 + $0x78] sm:$0xff]
    %v865 = vld [vmem:[#allocation3 + $0x80] sm:$0xff]
    %v866 = vld [vmem:[#allocation3 + $0x88] sm:$0xff]
    %v867 = vld [vmem:[#allocation3 + $0x90] sm:$0xff]
    %v868 = vld [vmem:[#allocation3 + $0x98] sm:$0xff]
    %v869 = vld [vmem:[#allocation3 + $0xa0] sm:$0xff]
    %v870 = vld [vmem:[#allocation3 + $0xa8] sm:$0xff]
    %v871 = vld [vmem:[#allocation3 + $0xb0] sm:$0xff]
    %v872 = vld [vmem:[#allocation3 + $0xb8] sm:$0xff]
    %v873 = vld [vmem:[#allocation3 + $0xc0] sm:$0xff]
    %v874 = vld [vmem:[#allocation3 + $0xc8] sm:$0xff]
    %v875 = vld [vmem:[#allocation3 + $0xd0] sm:$0xff]
    %v876 = vld [vmem:[#allocation3 + $0xd8] sm:$0xff]
    %v877 = vld [vmem:[#allocation3 + $0xe0] sm:$0xff]
    %v878 = vld [vmem:[#allocation3 + $0xe8] sm:$0xff]
    %v879 = vld [vmem:[#allocation3 + $0xf0] sm:$0xff]
    %v880 = vld [vmem:[#allocation3 + $0xf8] sm:$0xff]
    %v881 = vld [vmem:[#allocation3 + $0x100] sm:$0xff]
    %v882 = vld [vmem:[#allocation3 + $0x108] sm:$0xff]
    %v883 = vld [vmem:[#allocation3 + $0x110] sm:$0xff]
    %v884 = vld [vmem:[#allocation3 + $0x118] sm:$0xff]
    %v885 = vld [vmem:[#allocation3 + $0x120] sm:$0xff]
    %v886 = vld [vmem:[#allocation3 + $0x128] sm:$0xff]
    %v887 = vld [vmem:[#allocation3 + $0x130] sm:$0xff]
    %v888 = vld [vmem:[#allocation3 + $0x138] sm:$0xff]
    %v889 = vld [vmem:[#allocation3 + $0x140] sm:$0xff]
    %v890 = vld [vmem:[#allocation3 + $0x148] sm:$0xff]
    %v891 = vld [vmem:[#allocation3 + $0x150] sm:$0xff]
    %v892 = vld [vmem:[#allocation3 + $0x158] sm:$0xff]
    %v893 = vld [vmem:[#allocation3 + $0x160] sm:$0xff]
    %v894 = vld [vmem:[#allocation3 + $0x168] sm:$0xff]
    %v895 = vld [vmem:[#allocation3 + $0x170] sm:$0xff]
    %v896 = vld [vmem:[#allocation3 + $0x178] sm:$0xff]
    %v897 = vld [vmem:[#allocation3 + $0x180] sm:$0xff]
    %v898 = vld [vmem:[#allocation3 + $0x188] sm:$0xff]
    %v899 = vld [vmem:[#allocation3 + $0x190] sm:$0xff]
    %v900 = vld [vmem:[#allocation3 + $0x198] sm:$0xff]
    %v901 = vld [vmem:[#allocation3 + $0x1a0] sm:$0xff]
    %v902 = vld [vmem:[#allocation3 + $0x1a8] sm:$0xff]
    %v903 = vld [vmem:[#allocation3 + $0x1b0] sm:$0xff]
    %v904 = vld [vmem:[#allocation3 + $0x1b8] sm:$0xff]
    %v905 = vld [vmem:[#allocation3 + $0x1c0] sm:$0xff]
    %v906 = vld [vmem:[#allocation3 + $0x1c8] sm:$0xff]
    %v907 = vld [vmem:[#allocation3 + $0x1d0] sm:$0xff]
    %v908 = vld [vmem:[#allocation3 + $0x1d8] sm:$0xff]
    %v909 = vld [vmem:[#allocation3 + $0x1e0] sm:$0xff]
    %v910 = vld [vmem:[#allocation3 + $0x1e8] sm:$0xff]
    %v911 = vld [vmem:[#allocation3 + $0x1f0] sm:$0xff]
    %v912 = vld [vmem:[#allocation3 + $0x1f8] sm:$0xff]
    %913 = vmatpush.msra.mxu0 %v864
    %914 = vmatpush.msra.mxu0 %v863
    %915 = vmatpush.msra.mxu0 %v862
    %916 = vmatpush.msra.mxu0 %v861
    %917 = vmatpush.msra.mxu0 %v860
    %918 = vmatpush.msra.mxu0 %v859
    %919 = vmatpush.msra.mxu0 %v858
    %920 = vmatpush.msra.mxu0 %v857
    %921 = vmatpush.msra.mxu0 %v856
    %922 = vmatpush.msra.mxu0 %v855
    %923 = vmatpush.msra.mxu0 %v854
    %924 = vmatpush.msra.mxu0 %v853
    %925 = vmatpush.msra.mxu0 %v852
    %926 = vmatpush.msra.mxu0 %v851
    %927 = vmatpush.msra.mxu0 %v850
    %928 = vmatpush.msra.mxu0 %v849
    %929 = vmatmul.f32.gmra.mxu0 %v845
    %v930 = vpop.f32.mrf.mxu0
    %v931 = vadd.f32 0.0, %v930
    %932 = vdwg.mxu0
    %933 = vmatpush.msra.mxu0 %v880
    %934 = vmatpush.msra.mxu0 %v879
    %935 = vmatpush.msra.mxu0 %v878
    %936 = vmatpush.msra.mxu0 %v877
    %937 = vmatpush.msra.mxu0 %v876
    %938 = vmatpush.msra.mxu0 %v875
    %939 = vmatpush.msra.mxu0 %v874
    %940 = vmatpush.msra.mxu0 %v873
    %941 = vmatpush.msra.mxu0 %v872
    %942 = vmatpush.msra.mxu0 %v871
    %943 = vmatpush.msra.mxu0 %v870
    %944 = vmatpush.msra.mxu0 %v869
    %945 = vmatpush.msra.mxu0 %v868
    %946 = vmatpush.msra.mxu0 %v867
    %947 = vmatpush.msra.mxu0 %v866
    %948 = vmatpush.msra.mxu0 %v865
    %949 = vmatmul.f32.gmra.mxu0 %v846
    %v950 = vpop.f32.mrf.mxu0
    %v951 = vadd.f32 %v931, %v950
    %952 = vdwg.mxu0
    %953 = vmatpush.msra.mxu0 %v896
    %954 = vmatpush.msra.mxu0 %v895
    %955 = vmatpush.msra.mxu0 %v894
    %956 = vmatpush.msra.mxu0 %v893
    %957 = vmatpush.msra.mxu0 %v892
    %958 = vmatpush.msra.mxu0 %v891
    %959 = vmatpush.msra.mxu0 %v890
    %960 = vmatpush.msra.mxu0 %v889
    %961 = vmatpush.msra.mxu0 %v888
    %962 = vmatpush.msra.mxu0 %v887
    %963 = vmatpush.msra.mxu0 %v886
    %964 = vmatpush.msra.mxu0 %v885
    %965 = vmatpush.msra.mxu0 %v884
    %966 = vmatpush.msra.mxu0 %v883
    %967 = vmatpush.msra.mxu0 %v882
    %968 = vmatpush.msra.mxu0 %v881
    %969 = vmatmul.f32.gmra.mxu0 %v847
    %v970 = vpop.f32.mrf.mxu0
    %v971 = vadd.f32 %v951, %v970
    %972 = vdwg.mxu0
    %973 = vmatpush.msra.mxu0 %v912
    %974 = vmatpush.msra.mxu0 %v911
    %975 = vmatpush.msra.mxu0 %v910
    %976 = vmatpush.msra.mxu0 %v909
    %977 = vmatpush.msra.mxu0 %v908
    %978 = vmatpush.msra.mxu0 %v907
    %979 = vmatpush.msra.mxu0 %v906
    %980 = vmatpush.msra.mxu0 %v905
    %981 = vmatpush.msra.mxu0 %v904
    %982 = vmatpush.msra.mxu0 %v903
    %983 = vmatpush.msra.mxu0 %v902
    %984 = vmatpush.msra.mxu0 %v901
    %985 = vmatpush.msra.mxu0 %v900
    %986 = vmatpush.msra.mxu0 %v899
    %987 = vmatpush.msra.mxu0 %v898
    %988 = vmatpush.msra.mxu0 %v897
    %989 = vmatmul.f32.gmra.mxu0 %v848
    %v990 = vpop.f32.mrf.mxu0
    %v991 = vadd.f32 %v971, %v990
    %992 = vdwg.mxu0
    %993 = vrot.lane.b32.xlu0 %v991, 9
    %v994 = vpop.permute.xlu0 %993
    %v995 = vld [vmem:[%s3] sm:$0x1]
    %v996 = vperm.slane %v995, 0
    %v997 = vmul.f32 %v994, %v996
    %998 = vrot.lane.b32.xlu0 %v991, 8
    %v999 = vpop.permute.xlu0 %998
    %v1000 = vld [vmem:[%s3 + $0x1] sm:$0x1]
    %v1001 = vperm.slane %v1000, 0
    %v1002 = vmul.f32 %v999, %v1001
    %1003 = vrot.lane.b32.xlu0 %v991, 7
    %v1004 = vpop.permute.xlu0 %1003
    %v1005 = vld [vmem:[%s3 + $0x2] sm:$0x1]
    %v1006 = vperm.slane %v1005, 0
    %v1007 = vmul.f32 %v1004, %v1006
    %1008 = vrot.lane.b32.xlu0 %v991, 1
    %v1009 = vpop.permute.xlu0 %1008
    %v1010 = vld [vmem:[%s3 + $0x3] sm:$0x1]
    %v1011 = vperm.slane %v1010, 0
    %v1012 = vmul.f32 %v1009, %v1011
    %v1013 = vld [vmem:[%s3 + $0x4] sm:$0x1]
    %v1014 = vperm.slane %v1013, 0
    %v1015 = vmul.f32 %v991, %v1014
    %1016 = vrot.lane.b32.xlu0 %v991, 127
    %v1017 = vpop.permute.xlu0 %1016
    %v1018 = vld [vmem:[%s3 + $0x5] sm:$0x1]
    %v1019 = vperm.slane %v1018, 0
    %v1020 = vmul.f32 %v1017, %v1019
    %1021 = vrot.lane.b32.xlu0 %v991, 121
    %v1022 = vpop.permute.xlu0 %1021
    %v1023 = vld [vmem:[%s3 + $0x6] sm:$0x1]
    %v1024 = vperm.slane %v1023, 0
    %v1025 = vmul.f32 %v1022, %v1024
    %1026 = vrot.lane.b32.xlu0 %v991, 120
    %v1027 = vpop.permute.xlu0 %1026
    %v1028 = vld [vmem:[%s3 + $0x7] sm:$0x1]
    %v1029 = vperm.slane %v1028, 0
    %v1030 = vmul.f32 %v1027, %v1029
    %1031 = vrot.lane.b32.xlu0 %v991, 119
    %v1032 = vpop.permute.xlu0 %1031
    %v1033 = vld [vmem:[%s3 + $0x8] sm:$0x1]
    %v1034 = vperm.slane %v1033, 0
    %v1035 = vmul.f32 %v1032, %v1034
    %v1036 = vld [vmem:[%s23] sm:$0xff]
    %v1037 = vld [vmem:[%s23 + $0x8] sm:$0xff]
    %v1039 = vsel %vm453, %v1036, 0
    %v1042 = vsel %vm453, %v1037, 0
    %1044 = vmatpush.msra.mxu0 0.0
    %1045 = vmatpush.msra.mxu0 0.0
    %1046 = vmatpush.msra.mxu0 0.0
    %1047 = vmatpush.msra.mxu0 0.0
    %1048 = vmatpush.msra.mxu0 0.0
    %1049 = vmatpush.msra.mxu0 0.0
    %1050 = vmatpush.msra.mxu0 0.0
    %1051 = vmatpush.msra.mxu0 %v1035
    %1052 = vmatpush.msra.mxu0 %v1030
    %1053 = vmatpush.msra.mxu0 %v1025
    %1054 = vmatpush.msra.mxu0 %v1020
    %1055 = vmatpush.msra.mxu0 %v1015
    %1056 = vmatpush.msra.mxu0 %v1012
    %1057 = vmatpush.msra.mxu0 %v1007
    %1058 = vmatpush.msra.mxu0 %v1002
    %1059 = vmatpush.msra.mxu0 %v997
    %1060 = vmatmul.f32.gmra.mxu0 %v1039
    %v1061 = vpop.f32.mrf.mxu0
    %v1062 = vadd.f32 0.0, %v1061
    %1063 = vmatmul.f32.gmra.mxu0 %v1042
    %v1064 = vpop.f32.mrf.mxu0
    %v1065 = vadd.f32 0.0, %v1064
    %1066 = vdwg.mxu0
    %v1067 = vld [vmem:[%s19] sm:$0xff]
    %v1068 = vld [vmem:[%s19 + $0x8] sm:$0xff]
    %1070 = vset.pattern.permute.xlu0 0
    %1071 = vperm.xlu0 %1070, %v1067
    %v1072 = vpop.permute.xlu0 %1071
    %1075 = vset.pattern.permute.xlu0 0
    %1076 = vperm.xlu0 %1075, %v1068
    %v1077 = vpop.permute.xlu0 %1076
    %v1079 = vmul.f32 %v1062, %v1072
    %v1080 = vmul.f32 %v1065, %v1077
    %v1081 = vld [vmem:[%s15] sm:$0xff]
    %v1082 = vld [vmem:[%s15 + $0x8] sm:$0xff]
    %1084 = vset.pattern.permute.xlu0 0
    %1085 = vperm.xlu0 %1084, %v1081
    %v1086 = vpop.permute.xlu0 %1085
    %1089 = vset.pattern.permute.xlu0 0
    %1090 = vperm.xlu0 %1089, %v1082
    %v1091 = vpop.permute.xlu0 %1090
    %v1093 = vadd.f32 %v1079, %v1086
    %v1094 = vadd.f32 %v1080, %v1091
    %v1095 = vmax.f32 %v1093, 0.0
    %v1096 = vmax.f32 %v1094, 0.0
    %1097 = vrot.lane.b32.xlu0 %v1095, 9
    %v1098 = vpop.permute.xlu0 %1097
    %1099 = vrot.lane.b32.xlu0 %v1096, 9
    %v1100 = vpop.permute.xlu0 %1099
    %v1101 = vmul.f32 %v1098, %v996
    %v1102 = vmul.f32 %v1100, %v996
    %1103 = vrot.lane.b32.xlu0 %v1095, 8
    %v1104 = vpop.permute.xlu0 %1103
    %1105 = vrot.lane.b32.xlu0 %v1096, 8
    %v1106 = vpop.permute.xlu0 %1105
    %v1107 = vmul.f32 %v1104, %v1001
    %v1108 = vmul.f32 %v1106, %v1001
    %1109 = vrot.lane.b32.xlu0 %v1095, 7
    %v1110 = vpop.permute.xlu0 %1109
    %1111 = vrot.lane.b32.xlu0 %v1096, 7
    %v1112 = vpop.permute.xlu0 %1111
    %v1113 = vmul.f32 %v1110, %v1006
    %v1114 = vmul.f32 %v1112, %v1006
    %1115 = vrot.lane.b32.xlu0 %v1095, 1
    %v1116 = vpop.permute.xlu0 %1115
    %1117 = vrot.lane.b32.xlu0 %v1096, 1
    %v1118 = vpop.permute.xlu0 %1117
    %v1119 = vmul.f32 %v1116, %v1011
    %v1120 = vmul.f32 %v1118, %v1011
    %v1121 = vmul.f32 %v1095, %v1014
    %v1122 = vmul.f32 %v1096, %v1014
    %1123 = vrot.lane.b32.xlu0 %v1095, 127
    %v1124 = vpop.permute.xlu0 %1123
    %1125 = vrot.lane.b32.xlu0 %v1096, 127
    %v1126 = vpop.permute.xlu0 %1125
    %v1127 = vmul.f32 %v1124, %v1019
    %v1128 = vmul.f32 %v1126, %v1019
    %1129 = vrot.lane.b32.xlu0 %v1095, 121
    %v1130 = vpop.permute.xlu0 %1129
    %1131 = vrot.lane.b32.xlu0 %v1096, 121
    %v1132 = vpop.permute.xlu0 %1131
    %v1133 = vmul.f32 %v1130, %v1024
    %v1134 = vmul.f32 %v1132, %v1024
    %1135 = vrot.lane.b32.xlu0 %v1095, 120
    %v1136 = vpop.permute.xlu0 %1135
    %1137 = vrot.lane.b32.xlu0 %v1096, 120
    %v1138 = vpop.permute.xlu0 %1137
    %v1139 = vmul.f32 %v1136, %v1029
    %v1140 = vmul.f32 %v1138, %v1029
    %1141 = vrot.lane.b32.xlu0 %v1095, 119
    %v1142 = vpop.permute.xlu0 %1141
    %1143 = vrot.lane.b32.xlu0 %v1096, 119
    %v1144 = vpop.permute.xlu0 %1143
    %v1145 = vmul.f32 %v1142, %v1034
    %v1146 = vmul.f32 %v1144, %v1034
    %v1147 = vld [vmem:[%s25] sm:$0xff]
    %v1148 = vld [vmem:[%s25 + $0x8] sm:$0xff]
    %v1149 = vld [vmem:[%s25 + $0x10] sm:$0xff]
    %v1150 = vld [vmem:[%s25 + $0x18] sm:$0xff]
    %vm1151 = vcmask 130048
    %v1153 = vsel %vm1151, %v1148, 0
    %v1156 = vsel %vm1151, %v1150, 0
    %1158 = vmatpush.msra.mxu0 %v1140
    %1159 = vmatpush.msra.mxu0 %v1139
    %1160 = vmatpush.msra.mxu0 %v1134
    %1161 = vmatpush.msra.mxu0 %v1133
    %1162 = vmatpush.msra.mxu0 %v1128
    %1163 = vmatpush.msra.mxu0 %v1127
    %1164 = vmatpush.msra.mxu0 %v1122
    %1165 = vmatpush.msra.mxu0 %v1121
    %1166 = vmatpush.msra.mxu0 %v1120
    %1167 = vmatpush.msra.mxu0 %v1119
    %1168 = vmatpush.msra.mxu0 %v1114
    %1169 = vmatpush.msra.mxu0 %v1113
    %1170 = vmatpush.msra.mxu0 %v1108
    %1171 = vmatpush.msra.mxu0 %v1107
    %1172 = vmatpush.msra.mxu0 %v1102
    %1173 = vmatpush.msra.mxu0 %v1101
    %1174 = vmatmul.f32.gmra.mxu0 %v1147
    %v1175 = vpop.f32.mrf.mxu0
    %v1176 = vadd.f32 0.0, %v1175
    %1177 = vmatmul.f32.gmra.mxu0 %v1149
    %v1178 = vpop.f32.mrf.mxu0
    %v1179 = vadd.f32 0.0, %v1178
    %1180 = vdwg.mxu0
    %1181 = vmatpush.msra.mxu0 0.0
    %1182 = vmatpush.msra.mxu0 0.0
    %1183 = vmatpush.msra.mxu0 0.0
    %1184 = vmatpush.msra.mxu0 0.0
    %1185 = vmatpush.msra.mxu0 0.0
    %1186 = vmatpush.msra.mxu0 0.0
    %1187 = vmatpush.msra.mxu0 0.0
    %1188 = vmatpush.msra.mxu0 0.0
    %1189 = vmatpush.msra.mxu0 0.0
    %1190 = vmatpush.msra.mxu0 0.0
    %1191 = vmatpush.msra.mxu0 0.0
    %1192 = vmatpush.msra.mxu0 0.0
    %1193 = vmatpush.msra.mxu0 0.0
    %1194 = vmatpush.msra.mxu0 0.0
    %1195 = vmatpush.msra.mxu0 %v1146
    %1196 = vmatpush.msra.mxu0 %v1145
    %1197 = vmatmul.f32.gmra.mxu0 %v1153
    %v1198 = vpop.f32.mrf.mxu0
    %v1199 = vadd.f32 %v1176, %v1198
    %1200 = vmatmul.f32.gmra.mxu0 %v1156
    %v1201 = vpop.f32.mrf.mxu0
    %v1202 = vadd.f32 %v1179, %v1201
    %1203 = vdwg.mxu0
    %v1204 = vld [vmem:[%s21] sm:$0xff]
    %v1205 = vld [vmem:[%s21 + $0x8] sm:$0xff]
    %1207 = vset.pattern.permute.xlu0 0
    %1208 = vperm.xlu0 %1207, %v1204
    %v1209 = vpop.permute.xlu0 %1208
    %1212 = vset.pattern.permute.xlu0 0
    %1213 = vperm.xlu0 %1212, %v1205
    %v1214 = vpop.permute.xlu0 %1213
    %v1216 = vmul.f32 %v1199, %v1209
    %v1217 = vmul.f32 %v1202, %v1214
    %v1218 = vld [vmem:[%s17] sm:$0xff]
    %v1219 = vld [vmem:[%s17 + $0x8] sm:$0xff]
    %1221 = vset.pattern.permute.xlu0 0
    %1222 = vperm.xlu0 %1221, %v1218
    %v1223 = vpop.permute.xlu0 %1222
    %1226 = vset.pattern.permute.xlu0 0
    %1227 = vperm.xlu0 %1226, %v1219
    %v1228 = vpop.permute.xlu0 %1227
    %v1230 = vadd.f32 %v1216, %v1223
    %v1231 = vadd.f32 %v1217, %v1228
    %v1232 = vmax.f32 %v1230, 0.0
    %v1233 = vmax.f32 %v1231, 0.0
    %1234 = vrot.lane.b32.xlu0 %v1232, 127
    %v1235 = vpop.permute.xlu0 %1234
    %1236 = vrot.lane.b32.xlu0 %v1233, 127
    %v1237 = vpop.permute.xlu0 %1236
    %v1238 = vmax.f32 %v1232, %v1235
    %v1239 = vmax.f32 %v1233, %v1237
    %1240 = vrot.lane.b32.xlu0 %v1232, 120
    %v1241 = vpop.permute.xlu0 %1240
    %1242 = vrot.lane.b32.xlu0 %v1233, 120
    %v1243 = vpop.permute.xlu0 %1242
    %v1244 = vmax.f32 %v1238, %v1241
    %v1245 = vmax.f32 %v1239, %v1243
    %1246 = vrot.lane.b32.xlu0 %v1232, 119
    %v1247 = vpop.permute.xlu0 %1246
    %1248 = vrot.lane.b32.xlu0 %v1233, 119
    %v1249 = vpop.permute.xlu0 %1248
    %v1250 = vmax.f32 %v1244, %v1247
    %v1251 = vmax.f32 %v1245, %v1249
    %v1252 = vld [vmem:[%s9] sm:$0xff]
    %v1253 = vld [vmem:[%s9 + $0x8] sm:$0xff]
    %v1254 = vld [vmem:[%s9 + $0x10] sm:$0xff]
    %v1255 = vld [vmem:[%s9 + $0x18] sm:$0xff]
    %v1256 = vld [vmem:[%s9 + $0x20] sm:$0xff]
    %v1257 = vld [vmem:[%s9 + $0x28] sm:$0xff]
    %v1258 = vld [vmem:[%s9 + $0x30] sm:$0xff]
    %v1259 = vld [vmem:[%s9 + $0x38] sm:$0xff]
    %v1260 = vld [vmem:[%s9 + $0x40] sm:$0xff]
    %v1261 = vld [vmem:[%s9 + $0x48] sm:$0xff]
    %v1262 = vld [vmem:[%s9 + $0x50] sm:$0xff]
    %v1263 = vld [vmem:[%s9 + $0x58] sm:$0xff]
    %v1264 = vld [vmem:[%s9 + $0x60] sm:$0xff]
    %v1265 = vld [vmem:[%s9 + $0x68] sm:$0xff]
    %v1266 = vld [vmem:[%s9 + $0x70] sm:$0xff]
    %v1267 = vld [vmem:[%s9 + $0x78] sm:$0xff]
    %1268 = vmatpush.msra.mxu0 %v1267
    %1269 = vmatpush.msra.mxu0 %v1266
    %1270 = vmatpush.msra.mxu0 %v1265
    %1271 = vmatpush.msra.mxu0 %v1264
    %1272 = vmatpush.msra.mxu0 %v1263
    %1273 = vmatpush.msra.mxu0 %v1262
    %1274 = vmatpush.msra.mxu0 %v1261
    %1275 = vmatpush.msra.mxu0 %v1260
    %1276 = vmatpush.msra.mxu0 %v1259
    %1277 = vmatpush.msra.mxu0 %v1258
    %1278 = vmatpush.msra.mxu0 %v1257
    %1279 = vmatpush.msra.mxu0 %v1256
    %1280 = vmatpush.msra.mxu0 %v1255
    %1281 = vmatpush.msra.mxu0 %v1254
    %1282 = vmatpush.msra.mxu0 %v1253
    %1283 = vmatpush.msra.mxu0 %v1252
    %1284 = vmatmul.f32.gmra.mxu0 %v1250
    %v1285 = vpop.f32.mrf.mxu0
    %v1286 = vadd.f32 0.0, %v1285
    %1287 = vmatmul.f32.gmra.mxu0 %v1251
    %v1288 = vpop.f32.mrf.mxu0
    %v1289 = vadd.f32 0.0, %v1288
    %1290 = vdwg.mxu0
    %1291 = vrot.lane.b32.xlu0 %v1286, 5
    %v1292 = vpop.permute.xlu0 %1291
    %1293 = vrot.lane.b32.xlu0 %v1289, 5
    %v1294 = vpop.permute.xlu0 %1293
    %v1295 = vld [vmem:[%s5] sm:$0x1]
    %v1296 = vperm.slane %v1295, 0
    %v1297 = vmul.f32 %v1292, %v1296
    %v1298 = vmul.f32 %v1294, %v1296
    %1299 = vrot.lane.b32.xlu0 %v1286, 4
    %v1300 = vpop.permute.xlu0 %1299
    %1301 = vrot.lane.b32.xlu0 %v1289, 4
    %v1302 = vpop.permute.xlu0 %1301
    %v1303 = vld [vmem:[%s5 + $0x1] sm:$0x1]
    %v1304 = vperm.slane %v1303, 0
    %v1305 = vmul.f32 %v1300, %v1304
    %v1306 = vmul.f32 %v1302, %v1304
    %1307 = vrot.lane.b32.xlu0 %v1286, 3
    %v1308 = vpop.permute.xlu0 %1307
    %1309 = vrot.lane.b32.xlu0 %v1289, 3
    %v1310 = vpop.permute.xlu0 %1309
    %v1311 = vld [vmem:[%s5 + $0x2] sm:$0x1]
    %v1312 = vperm.slane %v1311, 0
    %v1313 = vmul.f32 %v1308, %v1312
    %v1314 = vmul.f32 %v1310, %v1312
    %1315 = vrot.lane.b32.xlu0 %v1286, 1
    %v1316 = vpop.permute.xlu0 %1315
    %1317 = vrot.lane.b32.xlu0 %v1289, 1
    %v1318 = vpop.permute.xlu0 %1317
    %v1319 = vld [vmem:[%s5 + $0x3] sm:$0x1]
    %v1320 = vperm.slane %v1319, 0
    %v1321 = vmul.f32 %v1316, %v1320
    %v1322 = vmul.f32 %v1318, %v1320
    %v1323 = vld [vmem:[%s5 + $0x4] sm:$0x1]
    %v1324 = vperm.slane %v1323, 0
    %v1325 = vmul.f32 %v1286, %v1324
    %v1326 = vmul.f32 %v1289, %v1324
    %1327 = vrot.lane.b32.xlu0 %v1286, 127
    %v1328 = vpop.permute.xlu0 %1327
    %1329 = vrot.lane.b32.xlu0 %v1289, 127
    %v1330 = vpop.permute.xlu0 %1329
    %v1331 = vld [vmem:[%s5 + $0x5] sm:$0x1]
    %v1332 = vperm.slane %v1331, 0
    %v1333 = vmul.f32 %v1328, %v1332
    %v1334 = vmul.f32 %v1330, %v1332
    %1335 = vrot.lane.b32.xlu0 %v1286, 125
    %v1336 = vpop.permute.xlu0 %1335
    %1337 = vrot.lane.b32.xlu0 %v1289, 125
    %v1338 = vpop.permute.xlu0 %1337
    %v1339 = vld [vmem:[%s5 + $0x6] sm:$0x1]
    %v1340 = vperm.slane %v1339, 0
    %v1341 = vmul.f32 %v1336, %v1340
    %v1342 = vmul.f32 %v1338, %v1340
    %1343 = vrot.lane.b32.xlu0 %v1286, 124
    %v1344 = vpop.permute.xlu0 %1343
    %1345 = vrot.lane.b32.xlu0 %v1289, 124
    %v1346 = vpop.permute.xlu0 %1345
    %v1347 = vld [vmem:[%s5 + $0x7] sm:$0x1]
    %v1348 = vperm.slane %v1347, 0
    %v1349 = vmul.f32 %v1344, %v1348
    %v1350 = vmul.f32 %v1346, %v1348
    %1351 = vrot.lane.b32.xlu0 %v1286, 123
    %v1352 = vpop.permute.xlu0 %1351
    %1353 = vrot.lane.b32.xlu0 %v1289, 123
    %v1354 = vpop.permute.xlu0 %1353
    %v1355 = vld [vmem:[%s5 + $0x8] sm:$0x1]
    %v1356 = vperm.slane %v1355, 0
    %v1357 = vmul.f32 %v1352, %v1356
    %v1358 = vmul.f32 %v1354, %v1356
    %v1359 = vld [vmem:[%s35] sm:$0xff]
    %v1360 = vld [vmem:[%s35 + $0x8] sm:$0xff]
    %v1361 = vld [vmem:[%s35 + $0x10] sm:$0xff]
    %v1362 = vld [vmem:[%s35 + $0x18] sm:$0xff]
    %v1363 = vld [vmem:[%s35 + $0x20] sm:$0xff]
    %v1364 = vld [vmem:[%s35 + $0x28] sm:$0xff]
    %v1365 = vld [vmem:[%s35 + $0x30] sm:$0xff]
    %v1366 = vld [vmem:[%s35 + $0x38] sm:$0xff]
    %v1368 = vsel %vm1151, %v1360, 0
    %v1371 = vsel %vm1151, %v1362, 0
    %v1374 = vsel %vm1151, %v1364, 0
    %v1377 = vsel %vm1151, %v1366, 0
    %1379 = vmatpush.msra.mxu0 %v1350
    %1380 = vmatpush.msra.mxu0 %v1349
    %1381 = vmatpush.msra.mxu0 %v1342
    %1382 = vmatpush.msra.mxu0 %v1341
    %1383 = vmatpush.msra.mxu0 %v1334
    %1384 = vmatpush.msra.mxu0 %v1333
    %1385 = vmatpush.msra.mxu0 %v1326
    %1386 = vmatpush.msra.mxu0 %v1325
    %1387 = vmatpush.msra.mxu0 %v1322
    %1388 = vmatpush.msra.mxu0 %v1321
    %1389 = vmatpush.msra.mxu0 %v1314
    %1390 = vmatpush.msra.mxu0 %v1313
    %1391 = vmatpush.msra.mxu0 %v1306
    %1392 = vmatpush.msra.mxu0 %v1305
    %1393 = vmatpush.msra.mxu0 %v1298
    %1394 = vmatpush.msra.mxu0 %v1297
    %1395 = vmatmul.f32.gmra.mxu0 %v1359
    %v1396 = vpop.f32.mrf.mxu0
    %v1397 = vadd.f32 0.0, %v1396
    %1398 = vmatmul.f32.gmra.mxu0 %v1361
    %v1399 = vpop.f32.mrf.mxu0
    %v1400 = vadd.f32 0.0, %v1399
    %1401 = vmatmul.f32.gmra.mxu0 %v1363
    %v1402 = vpop.f32.mrf.mxu0
    %v1403 = vadd.f32 0.0, %v1402
    %1404 = vmatmul.f32.gmra.mxu0 %v1365
    %v1405 = vpop.f32.mrf.mxu0
    %v1406 = vadd.f32 0.0, %v1405
    %1407 = vdwg.mxu0
    %1408 = vmatpush.msra.mxu0 0.0
    %1409 = vmatpush.msra.mxu0 0.0
    %1410 = vmatpush.msra.mxu0 0.0
    %1411 = vmatpush.msra.mxu0 0.0
    %1412 = vmatpush.msra.mxu0 0.0
    %1413 = vmatpush.msra.mxu0 0.0
    %1414 = vmatpush.msra.mxu0 0.0
    %1415 = vmatpush.msra.mxu0 0.0
    %1416 = vmatpush.msra.mxu0 0.0
    %1417 = vmatpush.msra.mxu0 0.0
    %1418 = vmatpush.msra.mxu0 0.0
    %1419 = vmatpush.msra.mxu0 0.0
    %1420 = vmatpush.msra.mxu0 0.0
    %1421 = vmatpush.msra.mxu0 0.0
    %1422 = vmatpush.msra.mxu0 %v1358
    %1423 = vmatpush.msra.mxu0 %v1357
    %1424 = vmatmul.f32.gmra.mxu0 %v1368
    %v1425 = vpop.f32.mrf.mxu0
    %v1426 = vadd.f32 %v1397, %v1425
    %1427 = vmatmul.f32.gmra.mxu0 %v1371
    %v1428 = vpop.f32.mrf.mxu0
    %v1429 = vadd.f32 %v1400, %v1428
    %1430 = vmatmul.f32.gmra.mxu0 %v1374
    %v1431 = vpop.f32.mrf.mxu0
    %v1432 = vadd.f32 %v1403, %v1431
    %1433 = vmatmul.f32.gmra.mxu0 %v1377
    %v1434 = vpop.f32.mrf.mxu0
    %v1435 = vadd.f32 %v1406, %v1434
    %1436 = vdwg.mxu0
    %v1437 = vld [vmem:[%s31] sm:$0xff]
    %v1438 = vld [vmem:[%s31 + $0x8] sm:$0xff]
    %v1439 = vld [vmem:[%s31 + $0x10] sm:$0xff]
    %v1440 = vld [vmem:[%s31 + $0x18] sm:$0xff]
    %1442 = vset.pattern.permute.xlu0 0
    %1443 = vperm.xlu0 %1442, %v1437
    %v1444 = vpop.permute.xlu0 %1443
    %1447 = vset.pattern.permute.xlu0 0
    %1448 = vperm.xlu0 %1447, %v1438
    %v1449 = vpop.permute.xlu0 %1448
    %1452 = vset.pattern.permute.xlu0 0
    %1453 = vperm.xlu0 %1452, %v1439
    %v1454 = vpop.permute.xlu0 %1453
    %1457 = vset.pattern.permute.xlu0 0
    %1458 = vperm.xlu0 %1457, %v1440
    %v1459 = vpop.permute.xlu0 %1458
    %v1461 = vmul.f32 %v1426, %v1444
    %v1462 = vmul.f32 %v1429, %v1449
    %v1463 = vmul.f32 %v1432, %v1454
    %v1464 = vmul.f32 %v1435, %v1459
    %v1465 = vld [vmem:[%s27] sm:$0xff]
    %v1466 = vld [vmem:[%s27 + $0x8] sm:$0xff]
    %v1467 = vld [vmem:[%s27 + $0x10] sm:$0xff]
    %v1468 = vld [vmem:[%s27 + $0x18] sm:$0xff]
    %1470 = vset.pattern.permute.xlu0 0
    %1471 = vperm.xlu0 %1470, %v1465
    %v1472 = vpop.permute.xlu0 %1471
    %1475 = vset.pattern.permute.xlu0 0
    %1476 = vperm.xlu0 %1475, %v1466
    %v1477 = vpop.permute.xlu0 %1476
    %1480 = vset.pattern.permute.xlu0 0
    %1481 = vperm.xlu0 %1480, %v1467
    %v1482 = vpop.permute.xlu0 %1481
    %1485 = vset.pattern.permute.xlu0 0
    %1486 = vperm.xlu0 %1485, %v1468
    %v1487 = vpop.permute.xlu0 %1486
    %v1489 = vadd.f32 %v1461, %v1472
    %v1490 = vadd.f32 %v1462, %v1477
    %v1491 = vadd.f32 %v1463, %v1482
    %v1492 = vadd.f32 %v1464, %v1487
    %v1493 = vmax.f32 %v1489, 0.0
    %v1494 = vmax.f32 %v1490, 0.0
    %v1495 = vmax.f32 %v1491, 0.0
    %v1496 = vmax.f32 %v1492, 0.0
    %1497 = vrot.lane.b32.xlu0 %v1493, 5
    %v1498 = vpop.permute.xlu0 %1497
    %1499 = vrot.lane.b32.xlu0 %v1494, 5
    %v1500 = vpop.permute.xlu0 %1499
    %1501 = vrot.lane.b32.xlu0 %v1495, 5
    %v1502 = vpop.permute.xlu0 %1501
    %1503 = vrot.lane.b32.xlu0 %v1496, 5
    %v1504 = vpop.permute.xlu0 %1503
    %v1505 = vmul.f32 %v1498, %v1296
    %v1506 = vmul.f32 %v1500, %v1296
    %v1507 = vmul.f32 %v1502, %v1296
    %v1508 = vmul.f32 %v1504, %v1296
    %1509 = vrot.lane.b32.xlu0 %v1493, 4
    %v1510 = vpop.permute.xlu0 %1509
    %1511 = vrot.lane.b32.xlu0 %v1494, 4
    %v1512 = vpop.permute.xlu0 %1511
    %1513 = vrot.lane.b32.xlu0 %v1495, 4
    %v1514 = vpop.permute.xlu0 %1513
    %1515 = vrot.lane.b32.xlu0 %v1496, 4
    %v1516 = vpop.permute.xlu0 %1515
    %v1517 = vmul.f32 %v1510, %v1304
    %v1518 = vmul.f32 %v1512, %v1304
    %v1519 = vmul.f32 %v1514, %v1304
    %v1520 = vmul.f32 %v1516, %v1304
    %1521 = vrot.lane.b32.xlu0 %v1493, 3
    %v1522 = vpop.permute.xlu0 %1521
    %1523 = vrot.lane.b32.xlu0 %v1494, 3
    %v1524 = vpop.permute.xlu0 %1523
    %1525 = vrot.lane.b32.xlu0 %v1495, 3
    %v1526 = vpop.permute.xlu0 %1525
    %1527 = vrot.lane.b32.xlu0 %v1496, 3
    %v1528 = vpop.permute.xlu0 %1527
    %v1529 = vmul.f32 %v1522, %v1312
    %v1530 = vmul.f32 %v1524, %v1312
    %v1531 = vmul.f32 %v1526, %v1312
    %v1532 = vmul.f32 %v1528, %v1312
    %1533 = vrot.lane.b32.xlu0 %v1493, 1
    %v1534 = vpop.permute.xlu0 %1533
    %1535 = vrot.lane.b32.xlu0 %v1494, 1
    %v1536 = vpop.permute.xlu0 %1535
    %1537 = vrot.lane.b32.xlu0 %v1495, 1
    %v1538 = vpop.permute.xlu0 %1537
    %1539 = vrot.lane.b32.xlu0 %v1496, 1
    %v1540 = vpop.permute.xlu0 %1539
    %v1541 = vmul.f32 %v1534, %v1320
    %v1542 = vmul.f32 %v1536, %v1320
    %v1543 = vmul.f32 %v1538, %v1320
    %v1544 = vmul.f32 %v1540, %v1320
    %v1545 = vmul.f32 %v1493, %v1324
    %v1546 = vmul.f32 %v1494, %v1324
    %v1547 = vmul.f32 %v1495, %v1324
    %v1548 = vmul.f32 %v1496, %v1324
    %1549 = vrot.lane.b32.xlu0 %v1493, 127
    %v1550 = vpop.permute.xlu0 %1549
    %1551 = vrot.lane.b32.xlu0 %v1494, 127
    %v1552 = vpop.permute.xlu0 %1551
    %1553 = vrot.lane.b32.xlu0 %v1495, 127
    %v1554 = vpop.permute.xlu0 %1553
    %1555 = vrot.lane.b32.xlu0 %v1496, 127
    %v1556 = vpop.permute.xlu0 %1555
    %v1557 = vmul.f32 %v1550, %v1332
    %v1558 = vmul.f32 %v1552, %v1332
    %v1559 = vmul.f32 %v1554, %v1332
    %v1560 = vmul.f32 %v1556, %v1332
    %1561 = vrot.lane.b32.xlu0 %v1493, 125
    %v1562 = vpop.permute.xlu0 %1561
    %1563 = vrot.lane.b32.xlu0 %v1494, 125
    %v1564 = vpop.permute.xlu0 %1563
    %1565 = vrot.lane.b32.xlu0 %v1495, 125
    %v1566 = vpop.permute.xlu0 %1565
    %1567 = vrot.lane.b32.xlu0 %v1496, 125
    %v1568 = vpop.permute.xlu0 %1567
    %v1569 = vmul.f32 %v1562, %v1340
    %v1570 = vmul.f32 %v1564, %v1340
    %v1571 = vmul.f32 %v1566, %v1340
    %v1572 = vmul.f32 %v1568, %v1340
    %1573 = vrot.lane.b32.xlu0 %v1493, 124
    %v1574 = vpop.permute.xlu0 %1573
    %1575 = vrot.lane.b32.xlu0 %v1494, 124
    %v1576 = vpop.permute.xlu0 %1575
    %1577 = vrot.lane.b32.xlu0 %v1495, 124
    %v1578 = vpop.permute.xlu0 %1577
    %1579 = vrot.lane.b32.xlu0 %v1496, 124
    %v1580 = vpop.permute.xlu0 %1579
    %v1581 = vmul.f32 %v1574, %v1348
    %v1582 = vmul.f32 %v1576, %v1348
    %v1583 = vmul.f32 %v1578, %v1348
    %v1584 = vmul.f32 %v1580, %v1348
    %1585 = vrot.lane.b32.xlu0 %v1493, 123
    %v1586 = vpop.permute.xlu0 %1585
    %1587 = vrot.lane.b32.xlu0 %v1494, 123
    %v1588 = vpop.permute.xlu0 %1587
    %1589 = vrot.lane.b32.xlu0 %v1495, 123
    %v1590 = vpop.permute.xlu0 %1589
    %1591 = vrot.lane.b32.xlu0 %v1496, 123
    %v1592 = vpop.permute.xlu0 %1591
    %v1593 = vmul.f32 %v1586, %v1356
    %v1594 = vmul.f32 %v1588, %v1356
    %v1595 = vmul.f32 %v1590, %v1356
    %v1596 = vmul.f32 %v1592, %v1356
    %v1597 = vld [vmem:[%s37] sm:$0xff]
    %v1598 = vld [vmem:[%s37 + $0x8] sm:$0xff]
    %v1599 = vld [vmem:[%s37 + $0x10] sm:$0xff]
    %v1600 = vld [vmem:[%s37 + $0x18] sm:$0xff]
    %v1601 = vld [vmem:[%s37 + $0x20] sm:$0xff]
    %v1602 = vld [vmem:[%s37 + $0x28] sm:$0xff]
    %v1603 = vld [vmem:[%s37 + $0x30] sm:$0xff]
    %v1604 = vld [vmem:[%s37 + $0x38] sm:$0xff]
    %v1605 = vld [vmem:[%s37 + $0x40] sm:$0xff]
    %v1606 = vld [vmem:[%s37 + $0x48] sm:$0xff]
    %v1607 = vld [vmem:[%s37 + $0x50] sm:$0xff]
    %v1608 = vld [vmem:[%s37 + $0x58] sm:$0xff]
    %vm1609 = vcmask 261120
    %v1611 = vsel %vm1609, %v1599, 0
    %v1614 = vsel %vm1609, %v1602, 0
    %v1617 = vsel %vm1609, %v1605, 0
    %v1620 = vsel %vm1609, %v1608, 0
    %1622 = vmatpush.msra.mxu0 %v1544
    %1623 = vmatpush.msra.mxu0 %v1543
    %1624 = vmatpush.msra.mxu0 %v1542
    %1625 = vmatpush.msra.mxu0 %v1541
    %1626 = vmatpush.msra.mxu0 %v1532
    %1627 = vmatpush.msra.mxu0 %v1531
    %1628 = vmatpush.msra.mxu0 %v1530
    %1629 = vmatpush.msra.mxu0 %v1529
    %1630 = vmatpush.msra.mxu0 %v1520
    %1631 = vmatpush.msra.mxu0 %v1519
    %1632 = vmatpush.msra.mxu0 %v1518
    %1633 = vmatpush.msra.mxu0 %v1517
    %1634 = vmatpush.msra.mxu0 %v1508
    %1635 = vmatpush.msra.mxu0 %v1507
    %1636 = vmatpush.msra.mxu0 %v1506
    %1637 = vmatpush.msra.mxu0 %v1505
    %1638 = vmatmul.f32.gmra.mxu0 %v1597
    %v1639 = vpop.f32.mrf.mxu0
    %v1640 = vadd.f32 0.0, %v1639
    %1641 = vmatmul.f32.gmra.mxu0 %v1600
    %v1642 = vpop.f32.mrf.mxu0
    %v1643 = vadd.f32 0.0, %v1642
    %1644 = vmatmul.f32.gmra.mxu0 %v1603
    %v1645 = vpop.f32.mrf.mxu0
    %v1646 = vadd.f32 0.0, %v1645
    %1647 = vmatmul.f32.gmra.mxu0 %v1606
    %v1648 = vpop.f32.mrf.mxu0
    %v1649 = vadd.f32 0.0, %v1648
    %1650 = vdwg.mxu0
    %1651 = vmatpush.msra.mxu0 %v1584
    %1652 = vmatpush.msra.mxu0 %v1583
    %1653 = vmatpush.msra.mxu0 %v1582
    %1654 = vmatpush.msra.mxu0 %v1581
    %1655 = vmatpush.msra.mxu0 %v1572
    %1656 = vmatpush.msra.mxu0 %v1571
    %1657 = vmatpush.msra.mxu0 %v1570
    %1658 = vmatpush.msra.mxu0 %v1569
    %1659 = vmatpush.msra.mxu0 %v1560
    %1660 = vmatpush.msra.mxu0 %v1559
    %1661 = vmatpush.msra.mxu0 %v1558
    %1662 = vmatpush.msra.mxu0 %v1557
    %1663 = vmatpush.msra.mxu0 %v1548
    %1664 = vmatpush.msra.mxu0 %v1547
    %1665 = vmatpush.msra.mxu0 %v1546
    %1666 = vmatpush.msra.mxu0 %v1545
    %1667 = vmatmul.f32.gmra.mxu0 %v1598
    %v1668 = vpop.f32.mrf.mxu0
    %v1669 = vadd.f32 %v1640, %v1668
    %1670 = vmatmul.f32.gmra.mxu0 %v1601
    %v1671 = vpop.f32.mrf.mxu0
    %v1672 = vadd.f32 %v1643, %v1671
    %1673 = vmatmul.f32.gmra.mxu0 %v1604
    %v1674 = vpop.f32.mrf.mxu0
    %v1675 = vadd.f32 %v1646, %v1674
    %1676 = vmatmul.f32.gmra.mxu0 %v1607
    %v1677 = vpop.f32.mrf.mxu0
    %v1678 = vadd.f32 %v1649, %v1677
    %1679 = vdwg.mxu0
    %1680 = vmatpush.msra.mxu0 0.0
    %1681 = vmatpush.msra.mxu0 0.0
    %1682 = vmatpush.msra.mxu0 0.0
    %1683 = vmatpush.msra.mxu0 0.0
    %1684 = vmatpush.msra.mxu0 0.0
    %1685 = vmatpush.msra.mxu0 0.0
    %1686 = vmatpush.msra.mxu0 0.0
    %1687 = vmatpush.msra.mxu0 0.0
    %1688 = vmatpush.msra.mxu0 0.0
    %1689 = vmatpush.msra.mxu0 0.0
    %1690 = vmatpush.msra.mxu0 0.0
    %1691 = vmatpush.msra.mxu0 0.0
    %1692 = vmatpush.msra.mxu0 %v1596
    %1693 = vmatpush.msra.mxu0 %v1595
    %1694 = vmatpush.msra.mxu0 %v1594
    %1695 = vmatpush.msra.mxu0 %v1593
    %1696 = vmatmul.f32.gmra.mxu0 %v1611
    %v1697 = vpop.f32.mrf.mxu0
    %v1698 = vadd.f32 %v1669, %v1697
    %1699 = vmatmul.f32.gmra.mxu0 %v1614
    %v1700 = vpop.f32.mrf.mxu0
    %v1701 = vadd.f32 %v1672, %v1700
    %1702 = vmatmul.f32.gmra.mxu0 %v1617
    %v1703 = vpop.f32.mrf.mxu0
    %v1704 = vadd.f32 %v1675, %v1703
    %1705 = vmatmul.f32.gmra.mxu0 %v1620
    %v1706 = vpop.f32.mrf.mxu0
    %v1707 = vadd.f32 %v1678, %v1706
    %1708 = vdwg.mxu0
    %v1709 = vld [vmem:[%s33] sm:$0xff]
    %v1710 = vld [vmem:[%s33 + $0x8] sm:$0xff]
    %v1711 = vld [vmem:[%s33 + $0x10] sm:$0xff]
    %v1712 = vld [vmem:[%s33 + $0x18] sm:$0xff]
    %1714 = vset.pattern.permute.xlu0 0
    %1715 = vperm.xlu0 %1714, %v1709
    %v1716 = vpop.permute.xlu0 %1715
    %1719 = vset.pattern.permute.xlu0 0
    %1720 = vperm.xlu0 %1719, %v1710
    %v1721 = vpop.permute.xlu0 %1720
    %1724 = vset.pattern.permute.xlu0 0
    %1725 = vperm.xlu0 %1724, %v1711
    %v1726 = vpop.permute.xlu0 %1725
    %1729 = vset.pattern.permute.xlu0 0
    %1730 = vperm.xlu0 %1729, %v1712
    %v1731 = vpop.permute.xlu0 %1730
    %v1733 = vmul.f32 %v1698, %v1716
    %v1734 = vmul.f32 %v1701, %v1721
    %v1735 = vmul.f32 %v1704, %v1726
    %v1736 = vmul.f32 %v1707, %v1731
    %v1737 = vld [vmem:[%s29] sm:$0xff]
    %v1738 = vld [vmem:[%s29 + $0x8] sm:$0xff]
    %v1739 = vld [vmem:[%s29 + $0x10] sm:$0xff]
    %v1740 = vld [vmem:[%s29 + $0x18] sm:$0xff]
    %1742 = vset.pattern.permute.xlu0 0
    %1743 = vperm.xlu0 %1742, %v1737
    %v1744 = vpop.permute.xlu0 %1743
    %1747 = vset.pattern.permute.xlu0 0
    %1748 = vperm.xlu0 %1747, %v1738
    %v1749 = vpop.permute.xlu0 %1748
    %1752 = vset.pattern.permute.xlu0 0
    %1753 = vperm.xlu0 %1752, %v1739
    %v1754 = vpop.permute.xlu0 %1753
    %1757 = vset.pattern.permute.xlu0 0
    %1758 = vperm.xlu0 %1757, %v1740
    %v1759 = vpop.permute.xlu0 %1758
    %v1761 = vadd.f32 %v1733, %v1744
    %v1762 = vadd.f32 %v1734, %v1749
    %v1763 = vadd.f32 %v1735, %v1754
    %v1764 = vadd.f32 %v1736, %v1759
    %v1765 = vmax.f32 %v1761, 0.0
    %v1766 = vmax.f32 %v1762, 0.0
    %v1767 = vmax.f32 %v1763, 0.0
    %v1768 = vmax.f32 %v1764, 0.0
    %v1769 = vld [vmem:[%s11] sm:$0xff]
    %v1770 = vld [vmem:[%s11 + $0x8] sm:$0xff]
    %v1771 = vld [vmem:[%s11 + $0x10] sm:$0xff]
    %v1772 = vld [vmem:[%s11 + $0x18] sm:$0xff]
    %v1773 = vld [vmem:[%s11 + $0x20] sm:$0xff]
    %v1774 = vld [vmem:[%s11 + $0x28] sm:$0xff]
    %v1775 = vld [vmem:[%s11 + $0x30] sm:$0xff]
    %v1776 = vld [vmem:[%s11 + $0x38] sm:$0xff]
    %v1777 = vld [vmem:[%s11 + $0x40] sm:$0xff]
    %v1778 = vld [vmem:[%s11 + $0x48] sm:$0xff]
    %v1779 = vld [vmem:[%s11 + $0x50] sm:$0xff]
    %v1780 = vld [vmem:[%s11 + $0x58] sm:$0xff]
    %v1781 = vld [vmem:[%s11 + $0x60] sm:$0xff]
    %v1782 = vld [vmem:[%s11 + $0x68] sm:$0xff]
    %v1783 = vld [vmem:[%s11 + $0x70] sm:$0xff]
    %v1784 = vld [vmem:[%s11 + $0x78] sm:$0xff]
    %1785 = vmatpush.msra.mxu0 %v1784
    %1786 = vmatpush.msra.mxu0 %v1783
    %1787 = vmatpush.msra.mxu0 %v1782
    %1788 = vmatpush.msra.mxu0 %v1781
    %1789 = vmatpush.msra.mxu0 %v1780
    %1790 = vmatpush.msra.mxu0 %v1779
    %1791 = vmatpush.msra.mxu0 %v1778
    %1792 = vmatpush.msra.mxu0 %v1777
    %1793 = vmatpush.msra.mxu0 %v1776
    %1794 = vmatpush.msra.mxu0 %v1775
    %1795 = vmatpush.msra.mxu0 %v1774
    %1796 = vmatpush.msra.mxu0 %v1773
    %1797 = vmatpush.msra.mxu0 %v1772
    %1798 = vmatpush.msra.mxu0 %v1771
    %1799 = vmatpush.msra.mxu0 %v1770
    %1800 = vmatpush.msra.mxu0 %v1769
    %1801 = vmatmul.f32.gmra.mxu0 %v1765
    %v1802 = vpop.f32.mrf.mxu0
    %v1803 = vadd.f32 0.0, %v1802
    %1804 = vmatmul.f32.gmra.mxu0 %v1766
    %v1805 = vpop.f32.mrf.mxu0
    %v1806 = vadd.f32 0.0, %v1805
    %1807 = vmatmul.f32.gmra.mxu0 %v1767
    %v1808 = vpop.f32.mrf.mxu0
    %v1809 = vadd.f32 0.0, %v1808
    %1810 = vmatmul.f32.gmra.mxu0 %v1768
    %v1811 = vpop.f32.mrf.mxu0
    %v1812 = vadd.f32 0.0, %v1811
    %1813 = vdwg.mxu0
    %1814 = vrot.lane.b32.xlu0 %v1803, 9
    %v1815 = vpop.permute.xlu0 %1814
    %1816 = vrot.lane.b32.xlu0 %v1806, 9
    %v1817 = vpop.permute.xlu0 %1816
    %1818 = vrot.lane.b32.xlu0 %v1809, 9
    %v1819 = vpop.permute.xlu0 %1818
    %1820 = vrot.lane.b32.xlu0 %v1812, 9
    %v1821 = vpop.permute.xlu0 %1820
    %v1822 = vmul.f32 %v1815, %v996
    %v1823 = vmul.f32 %v1817, %v996
    %v1824 = vmul.f32 %v1819, %v996
    %v1825 = vmul.f32 %v1821, %v996
    %1826 = vrot.lane.b32.xlu0 %v1803, 8
    %v1827 = vpop.permute.xlu0 %1826
    %1828 = vrot.lane.b32.xlu0 %v1806, 8
    %v1829 = vpop.permute.xlu0 %1828
    %1830 = vrot.lane.b32.xlu0 %v1809, 8
    %v1831 = vpop.permute.xlu0 %1830
    %1832 = vrot.lane.b32.xlu0 %v1812, 8
    %v1833 = vpop.permute.xlu0 %1832
    %v1834 = vmul.f32 %v1827, %v1001
    %v1835 = vmul.f32 %v1829, %v1001
    %v1836 = vmul.f32 %v1831, %v1001
    %v1837 = vmul.f32 %v1833, %v1001
    %1838 = vrot.lane.b32.xlu0 %v1803, 7
    %v1839 = vpop.permute.xlu0 %1838
    %1840 = vrot.lane.b32.xlu0 %v1806, 7
    %v1841 = vpop.permute.xlu0 %1840
    %1842 = vrot.lane.b32.xlu0 %v1809, 7
    %v1843 = vpop.permute.xlu0 %1842
    %1844 = vrot.lane.b32.xlu0 %v1812, 7
    %v1845 = vpop.permute.xlu0 %1844
    %v1846 = vmul.f32 %v1839, %v1006
    %v1847 = vmul.f32 %v1841, %v1006
    %v1848 = vmul.f32 %v1843, %v1006
    %v1849 = vmul.f32 %v1845, %v1006
    %1850 = vrot.lane.b32.xlu0 %v1803, 1
    %v1851 = vpop.permute.xlu0 %1850
    %1852 = vrot.lane.b32.xlu0 %v1806, 1
    %v1853 = vpop.permute.xlu0 %1852
    %1854 = vrot.lane.b32.xlu0 %v1809, 1
    %v1855 = vpop.permute.xlu0 %1854
    %1856 = vrot.lane.b32.xlu0 %v1812, 1
    %v1857 = vpop.permute.xlu0 %1856
    %v1858 = vmul.f32 %v1851, %v1011
    %v1859 = vmul.f32 %v1853, %v1011
    %v1860 = vmul.f32 %v1855, %v1011
    %v1861 = vmul.f32 %v1857, %v1011
    %v1862 = vmul.f32 %v1803, %v1014
    %v1863 = vmul.f32 %v1806, %v1014
    %v1864 = vmul.f32 %v1809, %v1014
    %v1865 = vmul.f32 %v1812, %v1014
    %1866 = vrot.lane.b32.xlu0 %v1803, 127
    %v1867 = vpop.permute.xlu0 %1866
    %1868 = vrot.lane.b32.xlu0 %v1806, 127
    %v1869 = vpop.permute.xlu0 %1868
    %1870 = vrot.lane.b32.xlu0 %v1809, 127
    %v1871 = vpop.permute.xlu0 %1870
    %1872 = vrot.lane.b32.xlu0 %v1812, 127
    %v1873 = vpop.permute.xlu0 %1872
    %v1874 = vmul.f32 %v1867, %v1019
    %v1875 = vmul.f32 %v1869, %v1019
    %v1876 = vmul.f32 %v1871, %v1019
    %v1877 = vmul.f32 %v1873, %v1019
    %1878 = vrot.lane.b32.xlu0 %v1803, 121
    %v1879 = vpop.permute.xlu0 %1878
    %1880 = vrot.lane.b32.xlu0 %v1806, 121
    %v1881 = vpop.permute.xlu0 %1880
    %1882 = vrot.lane.b32.xlu0 %v1809, 121
    %v1883 = vpop.permute.xlu0 %1882
    %1884 = vrot.lane.b32.xlu0 %v1812, 121
    %v1885 = vpop.permute.xlu0 %1884
    %v1886 = vmul.f32 %v1879, %v1024
    %v1887 = vmul.f32 %v1881, %v1024
    %v1888 = vmul.f32 %v1883, %v1024
    %v1889 = vmul.f32 %v1885, %v1024
    %1890 = vrot.lane.b32.xlu0 %v1803, 120
    %v1891 = vpop.permute.xlu0 %1890
    %1892 = vrot.lane.b32.xlu0 %v1806, 120
    %v1893 = vpop.permute.xlu0 %1892
    %1894 = vrot.lane.b32.xlu0 %v1809, 120
    %v1895 = vpop.permute.xlu0 %1894
    %1896 = vrot.lane.b32.xlu0 %v1812, 120
    %v1897 = vpop.permute.xlu0 %1896
    %v1898 = vmul.f32 %v1891, %v1029
    %v1899 = vmul.f32 %v1893, %v1029
    %v1900 = vmul.f32 %v1895, %v1029
    %v1901 = vmul.f32 %v1897, %v1029
    %1902 = vrot.lane.b32.xlu0 %v1803, 119
    %v1903 = vpop.permute.xlu0 %1902
    %1904 = vrot.lane.b32.xlu0 %v1806, 119
    %v1905 = vpop.permute.xlu0 %1904
    %1906 = vrot.lane.b32.xlu0 %v1809, 119
    %v1907 = vpop.permute.xlu0 %1906
    %1908 = vrot.lane.b32.xlu0 %v1812, 119
    %v1909 = vpop.permute.xlu0 %1908
    %v1910 = vmul.f32 %v1903, %v1034
    %v1911 = vmul.f32 %v1905, %v1034
    %v1912 = vmul.f32 %v1907, %v1034
    %v1913 = vmul.f32 %v1909, %v1034
    %v1914 = vld [vmem:[%s65] sm:$0xff]
    %v1915 = vld [vmem:[%s65 + $0x8] sm:$0xff]
    %v1916 = vld [vmem:[%s65 + $0x10] sm:$0xff]
    %v1917 = vld [vmem:[%s65 + $0x18] sm:$0xff]
    %v1918 = vld [vmem:[%s65 + $0x20] sm:$0xff]
    %v1919 = vld [vmem:[%s65 + $0x28] sm:$0xff]
    %1920 = vrot.lane.b32.xlu0 %v1232, 9
    %v1921 = vpop.permute.xlu0 %1920
    %1922 = vrot.lane.b32.xlu0 %v1233, 9
    %v1923 = vpop.permute.xlu0 %1922
    %v1924 = vmul.f32 %v1921, %v996
    %v1925 = vmul.f32 %v1923, %v996
    %1926 = vrot.lane.b32.xlu0 %v1232, 8
    %v1927 = vpop.permute.xlu0 %1926
    %1928 = vrot.lane.b32.xlu0 %v1233, 8
    %v1929 = vpop.permute.xlu0 %1928
    %v1930 = vmul.f32 %v1927, %v1001
    %v1931 = vmul.f32 %v1929, %v1001
    %1932 = vrot.lane.b32.xlu0 %v1232, 7
    %v1933 = vpop.permute.xlu0 %1932
    %1934 = vrot.lane.b32.xlu0 %v1233, 7
    %v1935 = vpop.permute.xlu0 %1934
    %v1936 = vmul.f32 %v1933, %v1006
    %v1937 = vmul.f32 %v1935, %v1006
    %1938 = vrot.lane.b32.xlu0 %v1232, 1
    %v1939 = vpop.permute.xlu0 %1938
    %1940 = vrot.lane.b32.xlu0 %v1233, 1
    %v1941 = vpop.permute.xlu0 %1940
    %v1942 = vmul.f32 %v1939, %v1011
    %v1943 = vmul.f32 %v1941, %v1011
    %v1944 = vmul.f32 %v1232, %v1014
    %v1945 = vmul.f32 %v1233, %v1014
    %v1946 = vmul.f32 %v1235, %v1019
    %v1947 = vmul.f32 %v1237, %v1019
    %1948 = vrot.lane.b32.xlu0 %v1232, 121
    %v1949 = vpop.permute.xlu0 %1948
    %1950 = vrot.lane.b32.xlu0 %v1233, 121
    %v1951 = vpop.permute.xlu0 %1950
    %v1952 = vmul.f32 %v1949, %v1024
    %v1953 = vmul.f32 %v1951, %v1024
    %v1954 = vmul.f32 %v1241, %v1029
    %v1955 = vmul.f32 %v1243, %v1029
    %v1956 = vmul.f32 %v1247, %v1034
    %v1957 = vmul.f32 %v1249, %v1034
    %v1958 = vld [vmem:[%s63] sm:$0xff]
    %v1959 = vld [vmem:[%s63 + $0x8] sm:$0xff]
    %v1960 = vld [vmem:[%s63 + $0x10] sm:$0xff]
    %v1961 = vld [vmem:[%s63 + $0x18] sm:$0xff]
    %v1963 = vsel %vm1151, %v1959, 0
    %v1966 = vsel %vm1151, %v1961, 0
    %1968 = vmatpush.msra.mxu0 %v1955
    %1969 = vmatpush.msra.mxu0 %v1954
    %1970 = vmatpush.msra.mxu0 %v1953
    %1971 = vmatpush.msra.mxu0 %v1952
    %1972 = vmatpush.msra.mxu0 %v1947
    %1973 = vmatpush.msra.mxu0 %v1946
    %1974 = vmatpush.msra.mxu0 %v1945
    %1975 = vmatpush.msra.mxu0 %v1944
    %1976 = vmatpush.msra.mxu0 %v1943
    %1977 = vmatpush.msra.mxu0 %v1942
    %1978 = vmatpush.msra.mxu0 %v1937
    %1979 = vmatpush.msra.mxu0 %v1936
    %1980 = vmatpush.msra.mxu0 %v1931
    %1981 = vmatpush.msra.mxu0 %v1930
    %1982 = vmatpush.msra.mxu0 %v1925
    %1983 = vmatpush.msra.mxu0 %v1924
    %1984 = vmatmul.f32.gmra.mxu0 %v1958
    %v1985 = vpop.f32.mrf.mxu0
    %v1986 = vadd.f32 0.0, %v1985
    %1987 = vmatmul.f32.gmra.mxu0 %v1960
    %v1988 = vpop.f32.mrf.mxu0
    %v1989 = vadd.f32 0.0, %v1988
    %1990 = vdwg.mxu0
    %1991 = vmatpush.msra.mxu0 0.0
    %1992 = vmatpush.msra.mxu0 0.0
    %1993 = vmatpush.msra.mxu0 0.0
    %1994 = vmatpush.msra.mxu0 0.0
    %1995 = vmatpush.msra.mxu0 0.0
    %1996 = vmatpush.msra.mxu0 0.0
    %1997 = vmatpush.msra.mxu0 0.0
    %1998 = vmatpush.msra.mxu0 0.0
    %1999 = vmatpush.msra.mxu0 0.0
    %2000 = vmatpush.msra.mxu0 0.0
    %2001 = vmatpush.msra.mxu0 0.0
    %2002 = vmatpush.msra.mxu0 0.0
    %2003 = vmatpush.msra.mxu0 0.0
    %2004 = vmatpush.msra.mxu0 0.0
    %2005 = vmatpush.msra.mxu0 %v1957
    %2006 = vmatpush.msra.mxu0 %v1956
    %2007 = vmatmul.f32.gmra.mxu0 %v1963
    %v2008 = vpop.f32.mrf.mxu0
    %v2009 = vadd.f32 %v1986, %v2008
    %2010 = vmatmul.f32.gmra.mxu0 %v1966
    %v2011 = vpop.f32.mrf.mxu0
    %v2012 = vadd.f32 %v1989, %v2011
    %2013 = vdwg.mxu0
    %v2015 = vsel %vm1609, %v1916, 0
    %v2018 = vsel %vm1609, %v1919, 0
    %2020 = vmatpush.msra.mxu0 %v1861
    %2021 = vmatpush.msra.mxu0 %v1860
    %2022 = vmatpush.msra.mxu0 %v1859
    %2023 = vmatpush.msra.mxu0 %v1858
    %2024 = vmatpush.msra.mxu0 %v1849
    %2025 = vmatpush.msra.mxu0 %v1848
    %2026 = vmatpush.msra.mxu0 %v1847
    %2027 = vmatpush.msra.mxu0 %v1846
    %2028 = vmatpush.msra.mxu0 %v1837
    %2029 = vmatpush.msra.mxu0 %v1836
    %2030 = vmatpush.msra.mxu0 %v1835
    %2031 = vmatpush.msra.mxu0 %v1834
    %2032 = vmatpush.msra.mxu0 %v1825
    %2033 = vmatpush.msra.mxu0 %v1824
    %2034 = vmatpush.msra.mxu0 %v1823
    %2035 = vmatpush.msra.mxu0 %v1822
    %2036 = vmatmul.f32.gmra.mxu0 %v1914
    %v2037 = vpop.f32.mrf.mxu0
    %v2038 = vadd.f32 %v2009, %v2037
    %2039 = vmatmul.f32.gmra.mxu0 %v1917
    %v2040 = vpop.f32.mrf.mxu0
    %v2041 = vadd.f32 %v2012, %v2040
    %2042 = vdwg.mxu0
    %2043 = vmatpush.msra.mxu0 %v1901
    %2044 = vmatpush.msra.mxu0 %v1900
    %2045 = vmatpush.msra.mxu0 %v1899
    %2046 = vmatpush.msra.mxu0 %v1898
    %2047 = vmatpush.msra.mxu0 %v1889
    %2048 = vmatpush.msra.mxu0 %v1888
    %2049 = vmatpush.msra.mxu0 %v1887
    %2050 = vmatpush.msra.mxu0 %v1886
    %2051 = vmatpush.msra.mxu0 %v1877
    %2052 = vmatpush.msra.mxu0 %v1876
    %2053 = vmatpush.msra.mxu0 %v1875
    %2054 = vmatpush.msra.mxu0 %v1874
    %2055 = vmatpush.msra.mxu0 %v1865
    %2056 = vmatpush.msra.mxu0 %v1864
    %2057 = vmatpush.msra.mxu0 %v1863
    %2058 = vmatpush.msra.mxu0 %v1862
    %2059 = vmatmul.f32.gmra.mxu0 %v1915
    %v2060 = vpop.f32.mrf.mxu0
    %v2061 = vadd.f32 %v2038, %v2060
    %2062 = vmatmul.f32.gmra.mxu0 %v1918
    %v2063 = vpop.f32.mrf.mxu0
    %v2064 = vadd.f32 %v2041, %v2063
    %2065 = vdwg.mxu0
    %2066 = vmatpush.msra.mxu0 0.0
    %2067 = vmatpush.msra.mxu0 0.0
    %2068 = vmatpush.msra.mxu0 0.0
    %2069 = vmatpush.msra.mxu0 0.0
    %2070 = vmatpush.msra.mxu0 0.0
    %2071 = vmatpush.msra.mxu0 0.0
    %2072 = vmatpush.msra.mxu0 0.0
    %2073 = vmatpush.msra.mxu0 0.0
    %2074 = vmatpush.msra.mxu0 0.0
    %2075 = vmatpush.msra.mxu0 0.0
    %2076 = vmatpush.msra.mxu0 0.0
    %2077 = vmatpush.msra.mxu0 0.0
    %2078 = vmatpush.msra.mxu0 %v1913
    %2079 = vmatpush.msra.mxu0 %v1912
    %2080 = vmatpush.msra.mxu0 %v1911
    %2081 = vmatpush.msra.mxu0 %v1910
    %2082 = vmatmul.f32.gmra.mxu0 %v2015
    %v2083 = vpop.f32.mrf.mxu0
    %v2084 = vadd.f32 %v2061, %v2083
    %2085 = vmatmul.f32.gmra.mxu0 %v2018
    %v2086 = vpop.f32.mrf.mxu0
    %v2087 = vadd.f32 %v2064, %v2086
    %2088 = vdwg.mxu0
    %v2089 = vld [vmem:[%s59] sm:$0xff]
    %v2090 = vld [vmem:[%s59 + $0x8] sm:$0xff]
    %2092 = vset.pattern.permute.xlu0 0
    %2093 = vperm.xlu0 %2092, %v2089
    %v2094 = vpop.permute.xlu0 %2093
    %2097 = vset.pattern.permute.xlu0 0
    %2098 = vperm.xlu0 %2097, %v2090
    %v2099 = vpop.permute.xlu0 %2098
    %v2101 = vmul.f32 %v2084, %v2094
    %v2102 = vmul.f32 %v2087, %v2099
    %v2103 = vld [vmem:[%s55] sm:$0xff]
    %v2104 = vld [vmem:[%s55 + $0x8] sm:$0xff]
    %2106 = vset.pattern.permute.xlu0 0
    %2107 = vperm.xlu0 %2106, %v2103
    %v2108 = vpop.permute.xlu0 %2107
    %2111 = vset.pattern.permute.xlu0 0
    %2112 = vperm.xlu0 %2111, %v2104
    %v2113 = vpop.permute.xlu0 %2112
    %v2115 = vadd.f32 %v2101, %v2108
    %v2116 = vadd.f32 %v2102, %v2113
    %v2117 = vmax.f32 %v2115, 0.0
    %v2118 = vmax.f32 %v2116, 0.0
    %2119 = vrot.lane.b32.xlu0 %v2117, 9
    %v2120 = vpop.permute.xlu0 %2119
    %2121 = vrot.lane.b32.xlu0 %v2118, 9
    %v2122 = vpop.permute.xlu0 %2121
    %v2123 = vmul.f32 %v2120, %v996
    %v2124 = vmul.f32 %v2122, %v996
    %2125 = vrot.lane.b32.xlu0 %v2117, 8
    %v2126 = vpop.permute.xlu0 %2125
    %2127 = vrot.lane.b32.xlu0 %v2118, 8
    %v2128 = vpop.permute.xlu0 %2127
    %v2129 = vmul.f32 %v2126, %v1001
    %v2130 = vmul.f32 %v2128, %v1001
    %2131 = vrot.lane.b32.xlu0 %v2117, 7
    %v2132 = vpop.permute.xlu0 %2131
    %2133 = vrot.lane.b32.xlu0 %v2118, 7
    %v2134 = vpop.permute.xlu0 %2133
    %v2135 = vmul.f32 %v2132, %v1006
    %v2136 = vmul.f32 %v2134, %v1006
    %2137 = vrot.lane.b32.xlu0 %v2117, 1
    %v2138 = vpop.permute.xlu0 %2137
    %2139 = vrot.lane.b32.xlu0 %v2118, 1
    %v2140 = vpop.permute.xlu0 %2139
    %v2141 = vmul.f32 %v2138, %v1011
    %v2142 = vmul.f32 %v2140, %v1011
    %v2143 = vmul.f32 %v2117, %v1014
    %v2144 = vmul.f32 %v2118, %v1014
    %2145 = vrot.lane.b32.xlu0 %v2117, 127
    %v2146 = vpop.permute.xlu0 %2145
    %2147 = vrot.lane.b32.xlu0 %v2118, 127
    %v2148 = vpop.permute.xlu0 %2147
    %v2149 = vmul.f32 %v2146, %v1019
    %v2150 = vmul.f32 %v2148, %v1019
    %2151 = vrot.lane.b32.xlu0 %v2117, 121
    %v2152 = vpop.permute.xlu0 %2151
    %2153 = vrot.lane.b32.xlu0 %v2118, 121
    %v2154 = vpop.permute.xlu0 %2153
    %v2155 = vmul.f32 %v2152, %v1024
    %v2156 = vmul.f32 %v2154, %v1024
    %2157 = vrot.lane.b32.xlu0 %v2117, 120
    %v2158 = vpop.permute.xlu0 %2157
    %2159 = vrot.lane.b32.xlu0 %v2118, 120
    %v2160 = vpop.permute.xlu0 %2159
    %v2161 = vmul.f32 %v2158, %v1029
    %v2162 = vmul.f32 %v2160, %v1029
    %2163 = vrot.lane.b32.xlu0 %v2117, 119
    %v2164 = vpop.permute.xlu0 %2163
    %2165 = vrot.lane.b32.xlu0 %v2118, 119
    %v2166 = vpop.permute.xlu0 %2165
    %v2167 = vmul.f32 %v2164, %v1034
    %v2168 = vmul.f32 %v2166, %v1034
    %v2169 = vld [vmem:[%s67] sm:$0xff]
    %v2170 = vld [vmem:[%s67 + $0x8] sm:$0xff]
    %v2171 = vld [vmem:[%s67 + $0x10] sm:$0xff]
    %v2172 = vld [vmem:[%s67 + $0x18] sm:$0xff]
    %v2174 = vsel %vm1151, %v2170, 0
    %v2177 = vsel %vm1151, %v2172, 0
    %2179 = vmatpush.msra.mxu0 %v2162
    %2180 = vmatpush.msra.mxu0 %v2161
    %2181 = vmatpush.msra.mxu0 %v2156
    %2182 = vmatpush.msra.mxu0 %v2155
    %2183 = vmatpush.msra.mxu0 %v2150
    %2184 = vmatpush.msra.mxu0 %v2149
    %2185 = vmatpush.msra.mxu0 %v2144
    %2186 = vmatpush.msra.mxu0 %v2143
    %2187 = vmatpush.msra.mxu0 %v2142
    %2188 = vmatpush.msra.mxu0 %v2141
    %2189 = vmatpush.msra.mxu0 %v2136
    %2190 = vmatpush.msra.mxu0 %v2135
    %2191 = vmatpush.msra.mxu0 %v2130
    %2192 = vmatpush.msra.mxu0 %v2129
    %2193 = vmatpush.msra.mxu0 %v2124
    %2194 = vmatpush.msra.mxu0 %v2123
    %2195 = vmatmul.f32.gmra.mxu0 %v2169
    %v2196 = vpop.f32.mrf.mxu0
    %v2197 = vadd.f32 0.0, %v2196
    %2198 = vmatmul.f32.gmra.mxu0 %v2171
    %v2199 = vpop.f32.mrf.mxu0
    %v2200 = vadd.f32 0.0, %v2199
    %2201 = vdwg.mxu0
    %2202 = vmatpush.msra.mxu0 0.0
    %2203 = vmatpush.msra.mxu0 0.0
    %2204 = vmatpush.msra.mxu0 0.0
    %2205 = vmatpush.msra.mxu0 0.0
    %2206 = vmatpush.msra.mxu0 0.0
    %2207 = vmatpush.msra.mxu0 0.0
    %2208 = vmatpush.msra.mxu0 0.0
    %2209 = vmatpush.msra.mxu0 0.0
    %2210 = vmatpush.msra.mxu0 0.0
    %2211 = vmatpush.msra.mxu0 0.0
    %2212 = vmatpush.msra.mxu0 0.0
    %2213 = vmatpush.msra.mxu0 0.0
    %2214 = vmatpush.msra.mxu0 0.0
    %2215 = vmatpush.msra.mxu0 0.0
    %2216 = vmatpush.msra.mxu0 %v2168
    %2217 = vmatpush.msra.mxu0 %v2167
    %2218 = vmatmul.f32.gmra.mxu0 %v2174
    %v2219 = vpop.f32.mrf.mxu0
    %v2220 = vadd.f32 %v2197, %v2219
    %2221 = vmatmul.f32.gmra.mxu0 %v2177
    %v2222 = vpop.f32.mrf.mxu0
    %v2223 = vadd.f32 %v2200, %v2222
    %2224 = vdwg.mxu0
    %v2225 = vld [vmem:[%s61] sm:$0xff]
    %v2226 = vld [vmem:[%s61 + $0x8] sm:$0xff]
    %2228 = vset.pattern.permute.xlu0 0
    %2229 = vperm.xlu0 %2228, %v2225
    %v2230 = vpop.permute.xlu0 %2229
    %2233 = vset.pattern.permute.xlu0 0
    %2234 = vperm.xlu0 %2233, %v2226
    %v2235 = vpop.permute.xlu0 %2234
    %v2237 = vmul.f32 %v2220, %v2230
    %v2238 = vmul.f32 %v2223, %v2235
    %v2239 = vld [vmem:[%s57] sm:$0xff]
    %v2240 = vld [vmem:[%s57 + $0x8] sm:$0xff]
    %2242 = vset.pattern.permute.xlu0 0
    %2243 = vperm.xlu0 %2242, %v2239
    %v2244 = vpop.permute.xlu0 %2243
    %2247 = vset.pattern.permute.xlu0 0
    %2248 = vperm.xlu0 %2247, %v2240
    %v2249 = vpop.permute.xlu0 %2248
    %v2251 = vadd.f32 %v2237, %v2244
    %v2252 = vadd.f32 %v2238, %v2249
    %v2253 = vmax.f32 %v2251, 0.0
    %v2254 = vmax.f32 %v2252, 0.0
    %v2255 = vld [vmem:[#allocation5] sm:$0xff]
    %v2256 = vld [vmem:[#allocation5 + $0x8] sm:$0xff]
    %v2257 = vld [vmem:[#allocation5 + $0x10] sm:$0xff]
    %v2258 = vld [vmem:[#allocation5 + $0x18] sm:$0xff]
    %v2259 = vld [vmem:[#allocation5 + $0x20] sm:$0xff]
    %v2260 = vld [vmem:[#allocation5 + $0x28] sm:$0xff]
    %v2261 = vld [vmem:[#allocation5 + $0x30] sm:$0xff]
    %v2262 = vld [vmem:[#allocation5 + $0x38] sm:$0xff]
    %v2263 = vld [vmem:[#allocation5 + $0x40] sm:$0xff]
    %v2264 = vld [vmem:[#allocation5 + $0x48] sm:$0xff]
    %v2265 = vld [vmem:[#allocation5 + $0x50] sm:$0xff]
    %v2266 = vld [vmem:[#allocation5 + $0x58] sm:$0xff]
    %v2267 = vld [vmem:[#allocation5 + $0x60] sm:$0xff]
    %v2268 = vld [vmem:[#allocation5 + $0x68] sm:$0xff]
    %v2269 = vld [vmem:[#allocation5 + $0x70] sm:$0xff]
    %v2270 = vld [vmem:[#allocation5 + $0x78] sm:$0xff]
    %v2271 = vld [vmem:[#allocation5 + $0x80] sm:$0xff]
    %v2272 = vld [vmem:[#allocation5 + $0x88] sm:$0xff]
    %v2273 = vld [vmem:[#allocation5 + $0x90] sm:$0xff]
    %v2274 = vld [vmem:[#allocation5 + $0x98] sm:$0xff]
    %v2275 = vld [vmem:[#allocation5 + $0xa0] sm:$0xff]
    %v2276 = vld [vmem:[#allocation5 + $0xa8] sm:$0xff]
    %v2277 = vld [vmem:[#allocation5 + $0xb0] sm:$0xff]
    %v2278 = vld [vmem:[#allocation5 + $0xb8] sm:$0xff]
    %v2279 = vld [vmem:[#allocation5 + $0xc0] sm:$0xff]
    %v2280 = vld [vmem:[#allocation5 + $0xc8] sm:$0xff]
    %v2281 = vld [vmem:[#allocation5 + $0xd0] sm:$0xff]
    %v2282 = vld [vmem:[#allocation5 + $0xd8] sm:$0xff]
    %v2283 = vld [vmem:[#allocation5 + $0xe0] sm:$0xff]
    %v2284 = vld [vmem:[#allocation5 + $0xe8] sm:$0xff]
    %v2285 = vld [vmem:[#allocation5 + $0xf0] sm:$0xff]
    %v2286 = vld [vmem:[#allocation5 + $0xf8] sm:$0xff]
    %v2287 = vld [vmem:[#allocation5 + $0x100] sm:$0xff]
    %v2288 = vld [vmem:[#allocation5 + $0x108] sm:$0xff]
    %v2289 = vld [vmem:[#allocation5 + $0x110] sm:$0xff]
    %v2290 = vld [vmem:[#allocation5 + $0x118] sm:$0xff]
    %v2291 = vld [vmem:[#allocation5 + $0x120] sm:$0xff]
    %v2292 = vld [vmem:[#allocation5 + $0x128] sm:$0xff]
    %v2293 = vld [vmem:[#allocation5 + $0x130] sm:$0xff]
    %v2294 = vld [vmem:[#allocation5 + $0x138] sm:$0xff]
    %v2295 = vld [vmem:[#allocation5 + $0x140] sm:$0xff]
    %v2296 = vld [vmem:[#allocation5 + $0x148] sm:$0xff]
    %v2297 = vld [vmem:[#allocation5 + $0x150] sm:$0xff]
    %v2298 = vld [vmem:[#allocation5 + $0x158] sm:$0xff]
    %v2299 = vld [vmem:[#allocation5 + $0x160] sm:$0xff]
    %v2300 = vld [vmem:[#allocation5 + $0x168] sm:$0xff]
    %v2301 = vld [vmem:[#allocation5 + $0x170] sm:$0xff]
    %v2302 = vld [vmem:[#allocation5 + $0x178] sm:$0xff]
    %v2303 = vld [vmem:[#allocation5 + $0x180] sm:$0xff]
    %v2304 = vld [vmem:[#allocation5 + $0x188] sm:$0xff]
    %v2305 = vld [vmem:[#allocation5 + $0x190] sm:$0xff]
    %v2306 = vld [vmem:[#allocation5 + $0x198] sm:$0xff]
    %v2307 = vld [vmem:[#allocation5 + $0x1a0] sm:$0xff]
    %v2308 = vld [vmem:[#allocation5 + $0x1a8] sm:$0xff]
    %v2309 = vld [vmem:[#allocation5 + $0x1b0] sm:$0xff]
    %v2310 = vld [vmem:[#allocation5 + $0x1b8] sm:$0xff]
    %v2311 = vld [vmem:[#allocation5 + $0x1c0] sm:$0xff]
    %v2312 = vld [vmem:[#allocation5 + $0x1c8] sm:$0xff]
    %v2313 = vld [vmem:[#allocation5 + $0x1d0] sm:$0xff]
    %v2314 = vld [vmem:[#allocation5 + $0x1d8] sm:$0xff]
    %v2315 = vld [vmem:[#allocation5 + $0x1e0] sm:$0xff]
    %v2316 = vld [vmem:[#allocation5 + $0x1e8] sm:$0xff]
    %v2317 = vld [vmem:[#allocation5 + $0x1f0] sm:$0xff]
    %v2318 = vld [vmem:[#allocation5 + $0x1f8] sm:$0xff]
    %2319 = vmatpush.msra.mxu0 %v2315
    %2320 = vmatpush.msra.mxu0 %v2311
    %2321 = vmatpush.msra.mxu0 %v2307
    %2322 = vmatpush.msra.mxu0 %v2303
    %2323 = vmatpush.msra.mxu0 %v2299
    %2324 = vmatpush.msra.mxu0 %v2295
    %2325 = vmatpush.msra.mxu0 %v2291
    %2326 = vmatpush.msra.mxu0 %v2287
    %2327 = vmatpush.msra.mxu0 %v2283
    %2328 = vmatpush.msra.mxu0 %v2279
    %2329 = vmatpush.msra.mxu0 %v2275
    %2330 = vmatpush.msra.mxu0 %v2271
    %2331 = vmatpush.msra.mxu0 %v2267
    %2332 = vmatpush.msra.mxu0 %v2263
    %2333 = vmatpush.msra.mxu0 %v2259
    %2334 = vmatpush.msra.mxu0 %v2255
    %2335 = vmatmul.f32.gmra.mxu0 %v2253
    %v2336 = vpop.f32.mrf.mxu0
    %v2337 = vadd.f32 0.0, %v2336
    %2338 = vmatmul.f32.gmra.mxu0 %v2254
    %v2339 = vpop.f32.mrf.mxu0
    %v2340 = vadd.f32 0.0, %v2339
    %2341 = vdwg.mxu0
    %2342 = vmatpush.msra.mxu0 %v2316
    %2343 = vmatpush.msra.mxu0 %v2312
    %2344 = vmatpush.msra.mxu0 %v2308
    %2345 = vmatpush.msra.mxu0 %v2304
    %2346 = vmatpush.msra.mxu0 %v2300
    %2347 = vmatpush.msra.mxu0 %v2296
    %2348 = vmatpush.msra.mxu0 %v2292
    %2349 = vmatpush.msra.mxu0 %v2288
    %2350 = vmatpush.msra.mxu0 %v2284
    %2351 = vmatpush.msra.mxu0 %v2280
    %2352 = vmatpush.msra.mxu0 %v2276
    %2353 = vmatpush.msra.mxu0 %v2272
    %2354 = vmatpush.msra.mxu0 %v2268
    %2355 = vmatpush.msra.mxu0 %v2264
    %2356 = vmatpush.msra.mxu0 %v2260
    %2357 = vmatpush.msra.mxu0 %v2256
    %2358 = vmatmul.f32.gmra.mxu0 %v2253
    %v2359 = vpop.f32.mrf.mxu0
    %v2360 = vadd.f32 0.0, %v2359
    %2361 = vmatmul.f32.gmra.mxu0 %v2254
    %v2362 = vpop.f32.mrf.mxu0
    %v2363 = vadd.f32 0.0, %v2362
    %2364 = vdwg.mxu0
    %2365 = vmatpush.msra.mxu0 %v2317
    %2366 = vmatpush.msra.mxu0 %v2313
    %2367 = vmatpush.msra.mxu0 %v2309
    %2368 = vmatpush.msra.mxu0 %v2305
    %2369 = vmatpush.msra.mxu0 %v2301
    %2370 = vmatpush.msra.mxu0 %v2297
    %2371 = vmatpush.msra.mxu0 %v2293
    %2372 = vmatpush.msra.mxu0 %v2289
    %2373 = vmatpush.msra.mxu0 %v2285
    %2374 = vmatpush.msra.mxu0 %v2281
    %2375 = vmatpush.msra.mxu0 %v2277
    %2376 = vmatpush.msra.mxu0 %v2273
    %2377 = vmatpush.msra.mxu0 %v2269
    %2378 = vmatpush.msra.mxu0 %v2265
    %2379 = vmatpush.msra.mxu0 %v2261
    %2380 = vmatpush.msra.mxu0 %v2257
    %2381 = vmatmul.f32.gmra.mxu0 %v2253
    %v2382 = vpop.f32.mrf.mxu0
    %v2383 = vadd.f32 0.0, %v2382
    %2384 = vmatmul.f32.gmra.mxu0 %v2254
    %v2385 = vpop.f32.mrf.mxu0
    %v2386 = vadd.f32 0.0, %v2385
    %2387 = vdwg.mxu0
    %2388 = vmatpush.msra.mxu0 %v2318
    %2389 = vmatpush.msra.mxu0 %v2314
    %2390 = vmatpush.msra.mxu0 %v2310
    %2391 = vmatpush.msra.mxu0 %v2306
    %2392 = vmatpush.msra.mxu0 %v2302
    %2393 = vmatpush.msra.mxu0 %v2298
    %2394 = vmatpush.msra.mxu0 %v2294
    %2395 = vmatpush.msra.mxu0 %v2290
    %2396 = vmatpush.msra.mxu0 %v2286
    %2397 = vmatpush.msra.mxu0 %v2282
    %2398 = vmatpush.msra.mxu0 %v2278
    %2399 = vmatpush.msra.mxu0 %v2274
    %2400 = vmatpush.msra.mxu0 %v2270
    %2401 = vmatpush.msra.mxu0 %v2266
    %2402 = vmatpush.msra.mxu0 %v2262
    %2403 = vmatpush.msra.mxu0 %v2258
    %2404 = vmatmul.f32.gmra.mxu0 %v2253
    %v2405 = vpop.f32.mrf.mxu0
    %v2406 = vadd.f32 0.0, %v2405
    %2407 = vmatmul.f32.gmra.mxu0 %v2254
    %v2408 = vpop.f32.mrf.mxu0
    %v2409 = vadd.f32 0.0, %v2408
    %2410 = vdwg.mxu0
    %2411 = vrot.lane.b32.xlu0 %v2337, 17
    %v2412 = vpop.permute.xlu0 %2411
    %2413 = vrot.lane.b32.xlu0 %v2340, 17
    %v2414 = vpop.permute.xlu0 %2413
    %2415 = vrot.lane.b32.xlu0 %v2360, 17
    %v2416 = vpop.permute.xlu0 %2415
    %2417 = vrot.lane.b32.xlu0 %v2363, 17
    %v2418 = vpop.permute.xlu0 %2417
    %2419 = vrot.lane.b32.xlu0 %v2383, 17
    %v2420 = vpop.permute.xlu0 %2419
    %2421 = vrot.lane.b32.xlu0 %v2386, 17
    %v2422 = vpop.permute.xlu0 %2421
    %2423 = vrot.lane.b32.xlu0 %v2406, 17
    %v2424 = vpop.permute.xlu0 %2423
    %2425 = vrot.lane.b32.xlu0 %v2409, 17
    %v2426 = vpop.permute.xlu0 %2425
    %v2427 = vsel %vm222, %v2420, %v2424
    %v2428 = vsel %vm222, %v2422, %v2426
    %v2429 = vsel %vm222, %v2416, %v2420
    %v2430 = vsel %vm222, %v2418, %v2422
    %v2431 = vsel %vm222, %v2412, %v2416
    %v2432 = vsel %vm222, %v2414, %v2418
    %v2433 = vsel %vm222, %v2424, %v2412
    %v2434 = vsel %vm222, %v2426, %v2414
    %v2435 = vmul.f32 %v2433, %v229
    %v2436 = vmul.f32 %v2431, %v230
    %v2437 = vmul.f32 %v2429, %v231
    %v2438 = vmul.f32 %v2427, %v232
    %v2439 = vmul.f32 %v2434, %v229
    %v2440 = vmul.f32 %v2432, %v230
    %v2441 = vmul.f32 %v2430, %v231
    %v2442 = vmul.f32 %v2428, %v232
    %2443 = vrot.lane.b32.xlu0 %v2337, 16
    %v2444 = vpop.permute.xlu0 %2443
    %2445 = vrot.lane.b32.xlu0 %v2340, 16
    %v2446 = vpop.permute.xlu0 %2445
    %2447 = vrot.lane.b32.xlu0 %v2360, 16
    %v2448 = vpop.permute.xlu0 %2447
    %2449 = vrot.lane.b32.xlu0 %v2363, 16
    %v2450 = vpop.permute.xlu0 %2449
    %2451 = vrot.lane.b32.xlu0 %v2383, 16
    %v2452 = vpop.permute.xlu0 %2451
    %2453 = vrot.lane.b32.xlu0 %v2386, 16
    %v2454 = vpop.permute.xlu0 %2453
    %2455 = vrot.lane.b32.xlu0 %v2406, 16
    %v2456 = vpop.permute.xlu0 %2455
    %2457 = vrot.lane.b32.xlu0 %v2409, 16
    %v2458 = vpop.permute.xlu0 %2457
    %v2459 = vsel %vm249, %v2452, %v2456
    %v2460 = vsel %vm249, %v2454, %v2458
    %v2461 = vsel %vm249, %v2448, %v2452
    %v2462 = vsel %vm249, %v2450, %v2454
    %v2463 = vsel %vm249, %v2444, %v2448
    %v2464 = vsel %vm249, %v2446, %v2450
    %v2465 = vsel %vm249, %v2456, %v2444
    %v2466 = vsel %vm249, %v2458, %v2446
    %v2467 = vmul.f32 %v2465, %v257
    %v2468 = vmul.f32 %v2463, %v258
    %v2469 = vmul.f32 %v2461, %v259
    %v2470 = vmul.f32 %v2459, %v260
    %v2471 = vmul.f32 %v2466, %v257
    %v2472 = vmul.f32 %v2464, %v258
    %v2473 = vmul.f32 %v2462, %v259
    %v2474 = vmul.f32 %v2460, %v260
    %2475 = vrot.lane.b32.xlu0 %v2337, 15
    %v2476 = vpop.permute.xlu0 %2475
    %2477 = vrot.lane.b32.xlu0 %v2340, 15
    %v2478 = vpop.permute.xlu0 %2477
    %2479 = vrot.lane.b32.xlu0 %v2360, 15
    %v2480 = vpop.permute.xlu0 %2479
    %2481 = vrot.lane.b32.xlu0 %v2363, 15
    %v2482 = vpop.permute.xlu0 %2481
    %2483 = vrot.lane.b32.xlu0 %v2383, 15
    %v2484 = vpop.permute.xlu0 %2483
    %2485 = vrot.lane.b32.xlu0 %v2386, 15
    %v2486 = vpop.permute.xlu0 %2485
    %2487 = vrot.lane.b32.xlu0 %v2406, 15
    %v2488 = vpop.permute.xlu0 %2487
    %2489 = vrot.lane.b32.xlu0 %v2409, 15
    %v2490 = vpop.permute.xlu0 %2489
    %v2491 = vsel %vm277, %v2484, %v2488
    %v2492 = vsel %vm277, %v2486, %v2490
    %v2493 = vsel %vm277, %v2480, %v2484
    %v2494 = vsel %vm277, %v2482, %v2486
    %v2495 = vsel %vm277, %v2476, %v2480
    %v2496 = vsel %vm277, %v2478, %v2482
    %v2497 = vsel %vm277, %v2488, %v2476
    %v2498 = vsel %vm277, %v2490, %v2478
    %v2499 = vmul.f32 %v2497, %v285
    %v2500 = vmul.f32 %v2495, %v286
    %v2501 = vmul.f32 %v2493, %v287
    %v2502 = vmul.f32 %v2491, %v288
    %v2503 = vmul.f32 %v2498, %v285
    %v2504 = vmul.f32 %v2496, %v286
    %v2505 = vmul.f32 %v2494, %v287
    %v2506 = vmul.f32 %v2492, %v288
    %2507 = vrot.lane.b32.xlu0 %v2337, 1
    %v2508 = vpop.permute.xlu0 %2507
    %2509 = vrot.lane.b32.xlu0 %v2340, 1
    %v2510 = vpop.permute.xlu0 %2509
    %2511 = vrot.lane.b32.xlu0 %v2360, 1
    %v2512 = vpop.permute.xlu0 %2511
    %2513 = vrot.lane.b32.xlu0 %v2363, 1
    %v2514 = vpop.permute.xlu0 %2513
    %2515 = vrot.lane.b32.xlu0 %v2383, 1
    %v2516 = vpop.permute.xlu0 %2515
    %2517 = vrot.lane.b32.xlu0 %v2386, 1
    %v2518 = vpop.permute.xlu0 %2517
    %2519 = vrot.lane.b32.xlu0 %v2406, 1
    %v2520 = vpop.permute.xlu0 %2519
    %2521 = vrot.lane.b32.xlu0 %v2409, 1
    %v2522 = vpop.permute.xlu0 %2521
    %v2523 = vsel %vm305, %v2516, %v2520
    %v2524 = vsel %vm305, %v2518, %v2522
    %v2525 = vsel %vm305, %v2512, %v2516
    %v2526 = vsel %vm305, %v2514, %v2518
    %v2527 = vsel %vm305, %v2508, %v2512
    %v2528 = vsel %vm305, %v2510, %v2514
    %v2529 = vsel %vm305, %v2520, %v2508
    %v2530 = vsel %vm305, %v2522, %v2510
    %v2531 = vmul.f32 %v2529, %v313
    %v2532 = vmul.f32 %v2527, %v314
    %v2533 = vmul.f32 %v2525, %v315
    %v2534 = vmul.f32 %v2523, %v316
    %v2535 = vmul.f32 %v2530, %v313
    %v2536 = vmul.f32 %v2528, %v314
    %v2537 = vmul.f32 %v2526, %v315
    %v2538 = vmul.f32 %v2524, %v316
    %v2539 = vmul.f32 %v2337, %v328
    %v2540 = vmul.f32 %v2360, %v329
    %v2541 = vmul.f32 %v2383, %v330
    %v2542 = vmul.f32 %v2406, %v331
    %v2543 = vmul.f32 %v2340, %v328
    %v2544 = vmul.f32 %v2363, %v329
    %v2545 = vmul.f32 %v2386, %v330
    %v2546 = vmul.f32 %v2409, %v331
    %2547 = vrot.lane.b32.xlu0 %v2337, 127
    %v2548 = vpop.permute.xlu0 %2547
    %2549 = vrot.lane.b32.xlu0 %v2340, 127
    %v2550 = vpop.permute.xlu0 %2549
    %2551 = vrot.lane.b32.xlu0 %v2360, 127
    %v2552 = vpop.permute.xlu0 %2551
    %2553 = vrot.lane.b32.xlu0 %v2363, 127
    %v2554 = vpop.permute.xlu0 %2553
    %2555 = vrot.lane.b32.xlu0 %v2383, 127
    %v2556 = vpop.permute.xlu0 %2555
    %2557 = vrot.lane.b32.xlu0 %v2386, 127
    %v2558 = vpop.permute.xlu0 %2557
    %2559 = vrot.lane.b32.xlu0 %v2406, 127
    %v2560 = vpop.permute.xlu0 %2559
    %2561 = vrot.lane.b32.xlu0 %v2409, 127
    %v2562 = vpop.permute.xlu0 %2561
    %v2563 = vsel %vm348, %v2556, %v2560
    %v2564 = vsel %vm348, %v2558, %v2562
    %v2565 = vsel %vm348, %v2552, %v2556
    %v2566 = vsel %vm348, %v2554, %v2558
    %v2567 = vsel %vm348, %v2548, %v2552
    %v2568 = vsel %vm348, %v2550, %v2554
    %v2569 = vsel %vm348, %v2560, %v2548
    %v2570 = vsel %vm348, %v2562, %v2550
    %v2571 = vmul.f32 %v2567, %v356
    %v2572 = vmul.f32 %v2565, %v357
    %v2573 = vmul.f32 %v2563, %v358
    %v2574 = vmul.f32 %v2569, %v359
    %v2575 = vmul.f32 %v2568, %v356
    %v2576 = vmul.f32 %v2566, %v357
    %v2577 = vmul.f32 %v2564, %v358
    %v2578 = vmul.f32 %v2570, %v359
    %2579 = vrot.lane.b32.xlu0 %v2337, 113
    %v2580 = vpop.permute.xlu0 %2579
    %2581 = vrot.lane.b32.xlu0 %v2340, 113
    %v2582 = vpop.permute.xlu0 %2581
    %2583 = vrot.lane.b32.xlu0 %v2360, 113
    %v2584 = vpop.permute.xlu0 %2583
    %2585 = vrot.lane.b32.xlu0 %v2363, 113
    %v2586 = vpop.permute.xlu0 %2585
    %2587 = vrot.lane.b32.xlu0 %v2383, 113
    %v2588 = vpop.permute.xlu0 %2587
    %2589 = vrot.lane.b32.xlu0 %v2386, 113
    %v2590 = vpop.permute.xlu0 %2589
    %2591 = vrot.lane.b32.xlu0 %v2406, 113
    %v2592 = vpop.permute.xlu0 %2591
    %2593 = vrot.lane.b32.xlu0 %v2409, 113
    %v2594 = vpop.permute.xlu0 %2593
    %v2595 = vsel %vm376, %v2588, %v2592
    %v2596 = vsel %vm376, %v2590, %v2594
    %v2597 = vsel %vm376, %v2584, %v2588
    %v2598 = vsel %vm376, %v2586, %v2590
    %v2599 = vsel %vm376, %v2580, %v2584
    %v2600 = vsel %vm376, %v2582, %v2586
    %v2601 = vsel %vm376, %v2592, %v2580
    %v2602 = vsel %vm376, %v2594, %v2582
    %v2603 = vmul.f32 %v2599, %v384
    %v2604 = vmul.f32 %v2597, %v385
    %v2605 = vmul.f32 %v2595, %v386
    %v2606 = vmul.f32 %v2601, %v387
    %v2607 = vmul.f32 %v2600, %v384
    %v2608 = vmul.f32 %v2598, %v385
    %v2609 = vmul.f32 %v2596, %v386
    %v2610 = vmul.f32 %v2602, %v387
    %2611 = vrot.lane.b32.xlu0 %v2337, 112
    %v2612 = vpop.permute.xlu0 %2611
    %2613 = vrot.lane.b32.xlu0 %v2340, 112
    %v2614 = vpop.permute.xlu0 %2613
    %2615 = vrot.lane.b32.xlu0 %v2360, 112
    %v2616 = vpop.permute.xlu0 %2615
    %2617 = vrot.lane.b32.xlu0 %v2363, 112
    %v2618 = vpop.permute.xlu0 %2617
    %2619 = vrot.lane.b32.xlu0 %v2383, 112
    %v2620 = vpop.permute.xlu0 %2619
    %2621 = vrot.lane.b32.xlu0 %v2386, 112
    %v2622 = vpop.permute.xlu0 %2621
    %2623 = vrot.lane.b32.xlu0 %v2406, 112
    %v2624 = vpop.permute.xlu0 %2623
    %2625 = vrot.lane.b32.xlu0 %v2409, 112
    %v2626 = vpop.permute.xlu0 %2625
    %v2627 = vsel %vm404, %v2620, %v2624
    %v2628 = vsel %vm404, %v2622, %v2626
    %v2629 = vsel %vm404, %v2616, %v2620
    %v2630 = vsel %vm404, %v2618, %v2622
    %v2631 = vsel %vm404, %v2612, %v2616
    %v2632 = vsel %vm404, %v2614, %v2618
    %v2633 = vsel %vm404, %v2624, %v2612
    %v2634 = vsel %vm404, %v2626, %v2614
    %v2635 = vmul.f32 %v2631, %v412
    %v2636 = vmul.f32 %v2629, %v413
    %v2637 = vmul.f32 %v2627, %v414
    %v2638 = vmul.f32 %v2633, %v415
    %v2639 = vmul.f32 %v2632, %v412
    %v2640 = vmul.f32 %v2630, %v413
    %v2641 = vmul.f32 %v2628, %v414
    %v2642 = vmul.f32 %v2634, %v415
    %2643 = vrot.lane.b32.xlu0 %v2337, 111
    %v2644 = vpop.permute.xlu0 %2643
    %2645 = vrot.lane.b32.xlu0 %v2340, 111
    %v2646 = vpop.permute.xlu0 %2645
    %2647 = vrot.lane.b32.xlu0 %v2360, 111
    %v2648 = vpop.permute.xlu0 %2647
    %2649 = vrot.lane.b32.xlu0 %v2363, 111
    %v2650 = vpop.permute.xlu0 %2649
    %2651 = vrot.lane.b32.xlu0 %v2383, 111
    %v2652 = vpop.permute.xlu0 %2651
    %2653 = vrot.lane.b32.xlu0 %v2386, 111
    %v2654 = vpop.permute.xlu0 %2653
    %2655 = vrot.lane.b32.xlu0 %v2406, 111
    %v2656 = vpop.permute.xlu0 %2655
    %2657 = vrot.lane.b32.xlu0 %v2409, 111
    %v2658 = vpop.permute.xlu0 %2657
    %v2659 = vsel %vm432, %v2652, %v2656
    %v2660 = vsel %vm432, %v2654, %v2658
    %v2661 = vsel %vm432, %v2648, %v2652
    %v2662 = vsel %vm432, %v2650, %v2654
    %v2663 = vsel %vm432, %v2644, %v2648
    %v2664 = vsel %vm432, %v2646, %v2650
    %v2665 = vsel %vm432, %v2656, %v2644
    %v2666 = vsel %vm432, %v2658, %v2646
    %v2667 = vmul.f32 %v2663, %v440
    %v2668 = vmul.f32 %v2661, %v441
    %v2669 = vmul.f32 %v2659, %v442
    %v2670 = vmul.f32 %v2665, %v443
    %v2671 = vmul.f32 %v2664, %v440
    %v2672 = vmul.f32 %v2662, %v441
    %v2673 = vmul.f32 %v2660, %v442
    %v2674 = vmul.f32 %v2666, %v443
    %v2675 = vld [vmem:[%s79] sm:$0xff]
    %v2676 = vld [vmem:[%s79 + $0x8] sm:$0xff]
    %2677 = vrot.lane.b32.xlu0 %v797, 17
    %v2678 = vpop.permute.xlu0 %2677
    %2679 = vrot.lane.b32.xlu0 %v798, 17
    %v2680 = vpop.permute.xlu0 %2679
    %2681 = vrot.lane.b32.xlu0 %v799, 17
    %v2682 = vpop.permute.xlu0 %2681
    %2683 = vrot.lane.b32.xlu0 %v800, 17
    %v2684 = vpop.permute.xlu0 %2683
    %v2685 = vsel %vm222, %v2682, %v2684
    %v2686 = vsel %vm222, %v2680, %v2682
    %v2687 = vsel %vm222, %v2678, %v2680
    %v2688 = vsel %vm222, %v2684, %v2678
    %v2689 = vmul.f32 %v2688, %v229
    %v2690 = vmul.f32 %v2687, %v230
    %v2691 = vmul.f32 %v2686, %v231
    %v2692 = vmul.f32 %v2685, %v232
    %2693 = vrot.lane.b32.xlu0 %v797, 16
    %v2694 = vpop.permute.xlu0 %2693
    %2695 = vrot.lane.b32.xlu0 %v798, 16
    %v2696 = vpop.permute.xlu0 %2695
    %2697 = vrot.lane.b32.xlu0 %v799, 16
    %v2698 = vpop.permute.xlu0 %2697
    %2699 = vrot.lane.b32.xlu0 %v800, 16
    %v2700 = vpop.permute.xlu0 %2699
    %v2701 = vsel %vm249, %v2698, %v2700
    %v2702 = vsel %vm249, %v2696, %v2698
    %v2703 = vsel %vm249, %v2694, %v2696
    %v2704 = vsel %vm249, %v2700, %v2694
    %v2705 = vmul.f32 %v2704, %v257
    %v2706 = vmul.f32 %v2703, %v258
    %v2707 = vmul.f32 %v2702, %v259
    %v2708 = vmul.f32 %v2701, %v260
    %2709 = vrot.lane.b32.xlu0 %v797, 15
    %v2710 = vpop.permute.xlu0 %2709
    %2711 = vrot.lane.b32.xlu0 %v798, 15
    %v2712 = vpop.permute.xlu0 %2711
    %2713 = vrot.lane.b32.xlu0 %v799, 15
    %v2714 = vpop.permute.xlu0 %2713
    %2715 = vrot.lane.b32.xlu0 %v800, 15
    %v2716 = vpop.permute.xlu0 %2715
    %v2717 = vsel %vm277, %v2714, %v2716
    %v2718 = vsel %vm277, %v2712, %v2714
    %v2719 = vsel %vm277, %v2710, %v2712
    %v2720 = vsel %vm277, %v2716, %v2710
    %v2721 = vmul.f32 %v2720, %v285
    %v2722 = vmul.f32 %v2719, %v286
    %v2723 = vmul.f32 %v2718, %v287
    %v2724 = vmul.f32 %v2717, %v288
    %2725 = vrot.lane.b32.xlu0 %v797, 1
    %v2726 = vpop.permute.xlu0 %2725
    %2727 = vrot.lane.b32.xlu0 %v798, 1
    %v2728 = vpop.permute.xlu0 %2727
    %2729 = vrot.lane.b32.xlu0 %v799, 1
    %v2730 = vpop.permute.xlu0 %2729
    %2731 = vrot.lane.b32.xlu0 %v800, 1
    %v2732 = vpop.permute.xlu0 %2731
    %v2733 = vsel %vm305, %v2730, %v2732
    %v2734 = vsel %vm305, %v2728, %v2730
    %v2735 = vsel %vm305, %v2726, %v2728
    %v2736 = vsel %vm305, %v2732, %v2726
    %v2737 = vmul.f32 %v2736, %v313
    %v2738 = vmul.f32 %v2735, %v314
    %v2739 = vmul.f32 %v2734, %v315
    %v2740 = vmul.f32 %v2733, %v316
    %v2741 = vmul.f32 %v797, %v328
    %v2742 = vmul.f32 %v798, %v329
    %v2743 = vmul.f32 %v799, %v330
    %v2744 = vmul.f32 %v800, %v331
    %v2745 = vmul.f32 %v811, %v356
    %v2746 = vmul.f32 %v810, %v357
    %v2747 = vmul.f32 %v809, %v358
    %v2748 = vmul.f32 %v812, %v359
    %2749 = vrot.lane.b32.xlu0 %v797, 113
    %v2750 = vpop.permute.xlu0 %2749
    %2751 = vrot.lane.b32.xlu0 %v798, 113
    %v2752 = vpop.permute.xlu0 %2751
    %2753 = vrot.lane.b32.xlu0 %v799, 113
    %v2754 = vpop.permute.xlu0 %2753
    %2755 = vrot.lane.b32.xlu0 %v800, 113
    %v2756 = vpop.permute.xlu0 %2755
    %v2757 = vsel %vm376, %v2754, %v2756
    %v2758 = vsel %vm376, %v2752, %v2754
    %v2759 = vsel %vm376, %v2750, %v2752
    %v2760 = vsel %vm376, %v2756, %v2750
    %v2761 = vmul.f32 %v2759, %v384
    %v2762 = vmul.f32 %v2758, %v385
    %v2763 = vmul.f32 %v2757, %v386
    %v2764 = vmul.f32 %v2760, %v387
    %v2765 = vmul.f32 %v827, %v412
    %v2766 = vmul.f32 %v826, %v413
    %v2767 = vmul.f32 %v825, %v414
    %v2768 = vmul.f32 %v828, %v415
    %v2769 = vmul.f32 %v843, %v440
    %v2770 = vmul.f32 %v842, %v441
    %v2771 = vmul.f32 %v841, %v442
    %v2772 = vmul.f32 %v844, %v443
    %v2773 = vld [vmem:[%s77] sm:$0xff]
    %v2775 = vsel %vm453, %v2773, 0
    %2777 = vmatpush.msra.mxu0 0.0
    %2778 = vmatpush.msra.mxu0 0.0
    %2779 = vmatpush.msra.mxu0 0.0
    %2780 = vmatpush.msra.mxu0 0.0
    %2781 = vmatpush.msra.mxu0 0.0
    %2782 = vmatpush.msra.mxu0 0.0
    %2783 = vmatpush.msra.mxu0 0.0
    %2784 = vmatpush.msra.mxu0 %v2769
    %2785 = vmatpush.msra.mxu0 %v2765
    %2786 = vmatpush.msra.mxu0 %v2761
    %2787 = vmatpush.msra.mxu0 %v2745
    %2788 = vmatpush.msra.mxu0 %v2741
    %2789 = vmatpush.msra.mxu0 %v2737
    %2790 = vmatpush.msra.mxu0 %v2721
    %2791 = vmatpush.msra.mxu0 %v2705
    %2792 = vmatpush.msra.mxu0 %v2689
    %2793 = vmatmul.f32.gmra.mxu0 %v2775
    %v2794 = vpop.f32.mrf.mxu0
    %v2795 = vadd.f32 0.0, %v2794
    %2796 = vdwg.mxu0
    %2797 = vmatpush.msra.mxu0 0.0
    %2798 = vmatpush.msra.mxu0 0.0
    %2799 = vmatpush.msra.mxu0 0.0
    %2800 = vmatpush.msra.mxu0 0.0
    %2801 = vmatpush.msra.mxu0 0.0
    %2802 = vmatpush.msra.mxu0 0.0
    %2803 = vmatpush.msra.mxu0 0.0
    %2804 = vmatpush.msra.mxu0 %v2770
    %2805 = vmatpush.msra.mxu0 %v2766
    %2806 = vmatpush.msra.mxu0 %v2762
    %2807 = vmatpush.msra.mxu0 %v2746
    %2808 = vmatpush.msra.mxu0 %v2742
    %2809 = vmatpush.msra.mxu0 %v2738
    %2810 = vmatpush.msra.mxu0 %v2722
    %2811 = vmatpush.msra.mxu0 %v2706
    %2812 = vmatpush.msra.mxu0 %v2690
    %2813 = vmatmul.f32.gmra.mxu0 %v2775
    %v2814 = vpop.f32.mrf.mxu0
    %v2815 = vadd.f32 0.0, %v2814
    %2816 = vdwg.mxu0
    %2817 = vmatpush.msra.mxu0 0.0
    %2818 = vmatpush.msra.mxu0 0.0
    %2819 = vmatpush.msra.mxu0 0.0
    %2820 = vmatpush.msra.mxu0 0.0
    %2821 = vmatpush.msra.mxu0 0.0
    %2822 = vmatpush.msra.mxu0 0.0
    %2823 = vmatpush.msra.mxu0 0.0
    %2824 = vmatpush.msra.mxu0 %v2771
    %2825 = vmatpush.msra.mxu0 %v2767
    %2826 = vmatpush.msra.mxu0 %v2763
    %2827 = vmatpush.msra.mxu0 %v2747
    %2828 = vmatpush.msra.mxu0 %v2743
    %2829 = vmatpush.msra.mxu0 %v2739
    %2830 = vmatpush.msra.mxu0 %v2723
    %2831 = vmatpush.msra.mxu0 %v2707
    %2832 = vmatpush.msra.mxu0 %v2691
    %2833 = vmatmul.f32.gmra.mxu0 %v2775
    %v2834 = vpop.f32.mrf.mxu0
    %v2835 = vadd.f32 0.0, %v2834
    %2836 = vdwg.mxu0
    %2837 = vmatpush.msra.mxu0 0.0
    %2838 = vmatpush.msra.mxu0 0.0
    %2839 = vmatpush.msra.mxu0 0.0
    %2840 = vmatpush.msra.mxu0 0.0
    %2841 = vmatpush.msra.mxu0 0.0
    %2842 = vmatpush.msra.mxu0 0.0
    %2843 = vmatpush.msra.mxu0 0.0
    %2844 = vmatpush.msra.mxu0 %v2772
    %2845 = vmatpush.msra.mxu0 %v2768
    %2846 = vmatpush.msra.mxu0 %v2764
    %2847 = vmatpush.msra.mxu0 %v2748
    %2848 = vmatpush.msra.mxu0 %v2744
    %2849 = vmatpush.msra.mxu0 %v2740
    %2850 = vmatpush.msra.mxu0 %v2724
    %2851 = vmatpush.msra.mxu0 %v2708
    %2852 = vmatpush.msra.mxu0 %v2692
    %2853 = vmatmul.f32.gmra.mxu0 %v2775
    %v2854 = vpop.f32.mrf.mxu0
    %v2855 = vadd.f32 0.0, %v2854
    %2856 = vdwg.mxu0
    %v2858 = vsel %vm1151, %v2676, 0
    %2860 = vmatpush.msra.mxu0 %v2639
    %2861 = vmatpush.msra.mxu0 %v2635
    %2862 = vmatpush.msra.mxu0 %v2607
    %2863 = vmatpush.msra.mxu0 %v2603
    %2864 = vmatpush.msra.mxu0 %v2575
    %2865 = vmatpush.msra.mxu0 %v2571
    %2866 = vmatpush.msra.mxu0 %v2543
    %2867 = vmatpush.msra.mxu0 %v2539
    %2868 = vmatpush.msra.mxu0 %v2535
    %2869 = vmatpush.msra.mxu0 %v2531
    %2870 = vmatpush.msra.mxu0 %v2503
    %2871 = vmatpush.msra.mxu0 %v2499
    %2872 = vmatpush.msra.mxu0 %v2471
    %2873 = vmatpush.msra.mxu0 %v2467
    %2874 = vmatpush.msra.mxu0 %v2439
    %2875 = vmatpush.msra.mxu0 %v2435
    %2876 = vmatmul.f32.gmra.mxu0 %v2675
    %v2877 = vpop.f32.mrf.mxu0
    %v2878 = vadd.f32 %v2795, %v2877
    %2879 = vdwg.mxu0
    %2880 = vmatpush.msra.mxu0 0.0
    %2881 = vmatpush.msra.mxu0 0.0
    %2882 = vmatpush.msra.mxu0 0.0
    %2883 = vmatpush.msra.mxu0 0.0
    %2884 = vmatpush.msra.mxu0 0.0
    %2885 = vmatpush.msra.mxu0 0.0
    %2886 = vmatpush.msra.mxu0 0.0
    %2887 = vmatpush.msra.mxu0 0.0
    %2888 = vmatpush.msra.mxu0 0.0
    %2889 = vmatpush.msra.mxu0 0.0
    %2890 = vmatpush.msra.mxu0 0.0
    %2891 = vmatpush.msra.mxu0 0.0
    %2892 = vmatpush.msra.mxu0 0.0
    %2893 = vmatpush.msra.mxu0 0.0
    %2894 = vmatpush.msra.mxu0 %v2671
    %2895 = vmatpush.msra.mxu0 %v2667
    %2896 = vmatmul.f32.gmra.mxu0 %v2858
    %v2897 = vpop.f32.mrf.mxu0
    %v2898 = vadd.f32 %v2878, %v2897
    %2899 = vdwg.mxu0
    %2900 = vmatpush.msra.mxu0 %v2640
    %2901 = vmatpush.msra.mxu0 %v2636
    %2902 = vmatpush.msra.mxu0 %v2608
    %2903 = vmatpush.msra.mxu0 %v2604
    %2904 = vmatpush.msra.mxu0 %v2576
    %2905 = vmatpush.msra.mxu0 %v2572
    %2906 = vmatpush.msra.mxu0 %v2544
    %2907 = vmatpush.msra.mxu0 %v2540
    %2908 = vmatpush.msra.mxu0 %v2536
    %2909 = vmatpush.msra.mxu0 %v2532
    %2910 = vmatpush.msra.mxu0 %v2504
    %2911 = vmatpush.msra.mxu0 %v2500
    %2912 = vmatpush.msra.mxu0 %v2472
    %2913 = vmatpush.msra.mxu0 %v2468
    %2914 = vmatpush.msra.mxu0 %v2440
    %2915 = vmatpush.msra.mxu0 %v2436
    %2916 = vmatmul.f32.gmra.mxu0 %v2675
    %v2917 = vpop.f32.mrf.mxu0
    %v2918 = vadd.f32 %v2815, %v2917
    %2919 = vdwg.mxu0
    %2920 = vmatpush.msra.mxu0 0.0
    %2921 = vmatpush.msra.mxu0 0.0
    %2922 = vmatpush.msra.mxu0 0.0
    %2923 = vmatpush.msra.mxu0 0.0
    %2924 = vmatpush.msra.mxu0 0.0
    %2925 = vmatpush.msra.mxu0 0.0
    %2926 = vmatpush.msra.mxu0 0.0
    %2927 = vmatpush.msra.mxu0 0.0
    %2928 = vmatpush.msra.mxu0 0.0
    %2929 = vmatpush.msra.mxu0 0.0
    %2930 = vmatpush.msra.mxu0 0.0
    %2931 = vmatpush.msra.mxu0 0.0
    %2932 = vmatpush.msra.mxu0 0.0
    %2933 = vmatpush.msra.mxu0 0.0
    %2934 = vmatpush.msra.mxu0 %v2672
    %2935 = vmatpush.msra.mxu0 %v2668
    %2936 = vmatmul.f32.gmra.mxu0 %v2858
    %v2937 = vpop.f32.mrf.mxu0
    %v2938 = vadd.f32 %v2918, %v2937
    %2939 = vdwg.mxu0
    %2940 = vmatpush.msra.mxu0 %v2641
    %2941 = vmatpush.msra.mxu0 %v2637
    %2942 = vmatpush.msra.mxu0 %v2609
    %2943 = vmatpush.msra.mxu0 %v2605
    %2944 = vmatpush.msra.mxu0 %v2577
    %2945 = vmatpush.msra.mxu0 %v2573
    %2946 = vmatpush.msra.mxu0 %v2545
    %2947 = vmatpush.msra.mxu0 %v2541
    %2948 = vmatpush.msra.mxu0 %v2537
    %2949 = vmatpush.msra.mxu0 %v2533
    %2950 = vmatpush.msra.mxu0 %v2505
    %2951 = vmatpush.msra.mxu0 %v2501
    %2952 = vmatpush.msra.mxu0 %v2473
    %2953 = vmatpush.msra.mxu0 %v2469
    %2954 = vmatpush.msra.mxu0 %v2441
    %2955 = vmatpush.msra.mxu0 %v2437
    %2956 = vmatmul.f32.gmra.mxu0 %v2675
    %v2957 = vpop.f32.mrf.mxu0
    %v2958 = vadd.f32 %v2835, %v2957
    %2959 = vdwg.mxu0
    %2960 = vmatpush.msra.mxu0 0.0
    %2961 = vmatpush.msra.mxu0 0.0
    %2962 = vmatpush.msra.mxu0 0.0
    %2963 = vmatpush.msra.mxu0 0.0
    %2964 = vmatpush.msra.mxu0 0.0
    %2965 = vmatpush.msra.mxu0 0.0
    %2966 = vmatpush.msra.mxu0 0.0
    %2967 = vmatpush.msra.mxu0 0.0
    %2968 = vmatpush.msra.mxu0 0.0
    %2969 = vmatpush.msra.mxu0 0.0
    %2970 = vmatpush.msra.mxu0 0.0
    %2971 = vmatpush.msra.mxu0 0.0
    %2972 = vmatpush.msra.mxu0 0.0
    %2973 = vmatpush.msra.mxu0 0.0
    %2974 = vmatpush.msra.mxu0 %v2673
    %2975 = vmatpush.msra.mxu0 %v2669
    %2976 = vmatmul.f32.gmra.mxu0 %v2858
    %v2977 = vpop.f32.mrf.mxu0
    %v2978 = vadd.f32 %v2958, %v2977
    %2979 = vdwg.mxu0
    %2980 = vmatpush.msra.mxu0 %v2642
    %2981 = vmatpush.msra.mxu0 %v2638
    %2982 = vmatpush.msra.mxu0 %v2610
    %2983 = vmatpush.msra.mxu0 %v2606
    %2984 = vmatpush.msra.mxu0 %v2578
    %2985 = vmatpush.msra.mxu0 %v2574
    %2986 = vmatpush.msra.mxu0 %v2546
    %2987 = vmatpush.msra.mxu0 %v2542
    %2988 = vmatpush.msra.mxu0 %v2538
    %2989 = vmatpush.msra.mxu0 %v2534
    %2990 = vmatpush.msra.mxu0 %v2506
    %2991 = vmatpush.msra.mxu0 %v2502
    %2992 = vmatpush.msra.mxu0 %v2474
    %2993 = vmatpush.msra.mxu0 %v2470
    %2994 = vmatpush.msra.mxu0 %v2442
    %2995 = vmatpush.msra.mxu0 %v2438
    %2996 = vmatmul.f32.gmra.mxu0 %v2675
    %v2997 = vpop.f32.mrf.mxu0
    %v2998 = vadd.f32 %v2855, %v2997
    %2999 = vdwg.mxu0
    %3000 = vmatpush.msra.mxu0 0.0
    %3001 = vmatpush.msra.mxu0 0.0
    %3002 = vmatpush.msra.mxu0 0.0
    %3003 = vmatpush.msra.mxu0 0.0
    %3004 = vmatpush.msra.mxu0 0.0
    %3005 = vmatpush.msra.mxu0 0.0
    %3006 = vmatpush.msra.mxu0 0.0
    %3007 = vmatpush.msra.mxu0 0.0
    %3008 = vmatpush.msra.mxu0 0.0
    %3009 = vmatpush.msra.mxu0 0.0
    %3010 = vmatpush.msra.mxu0 0.0
    %3011 = vmatpush.msra.mxu0 0.0
    %3012 = vmatpush.msra.mxu0 0.0
    %3013 = vmatpush.msra.mxu0 0.0
    %3014 = vmatpush.msra.mxu0 %v2674
    %3015 = vmatpush.msra.mxu0 %v2670
    %3016 = vmatmul.f32.gmra.mxu0 %v2858
    %v3017 = vpop.f32.mrf.mxu0
    %v3018 = vadd.f32 %v2998, %v3017
    %3019 = vdwg.mxu0
    %v3020 = vld [vmem:[%s73] sm:$0xff]
    %3022 = vset.pattern.permute.xlu0 0
    %3023 = vperm.xlu0 %3022, %v3020
    %v3024 = vpop.permute.xlu0 %3023
    %v3026 = vmul.f32 %v2898, %v3024
    %v3027 = vmul.f32 %v2938, %v3024
    %v3028 = vmul.f32 %v2978, %v3024
    %v3029 = vmul.f32 %v3018, %v3024
    %v3030 = vld [vmem:[%s69] sm:$0xff]
    %3032 = vset.pattern.permute.xlu0 0
    %3033 = vperm.xlu0 %3032, %v3030
    %v3034 = vpop.permute.xlu0 %3033
    %v3036 = vadd.f32 %v3026, %v3034
    %v3037 = vadd.f32 %v3027, %v3034
    %v3038 = vadd.f32 %v3028, %v3034
    %v3039 = vadd.f32 %v3029, %v3034
    %v3040 = vmax.f32 %v3036, 0.0
    %v3041 = vmax.f32 %v3037, 0.0
    %v3042 = vmax.f32 %v3038, 0.0
    %v3043 = vmax.f32 %v3039, 0.0
    %3044 = vrot.lane.b32.xlu0 %v3040, 17
    %v3045 = vpop.permute.xlu0 %3044
    %3046 = vrot.lane.b32.xlu0 %v3041, 17
    %v3047 = vpop.permute.xlu0 %3046
    %3048 = vrot.lane.b32.xlu0 %v3042, 17
    %v3049 = vpop.permute.xlu0 %3048
    %3050 = vrot.lane.b32.xlu0 %v3043, 17
    %v3051 = vpop.permute.xlu0 %3050
    %v3052 = vsel %vm222, %v3049, %v3051
    %v3053 = vsel %vm222, %v3047, %v3049
    %v3054 = vsel %vm222, %v3045, %v3047
    %v3055 = vsel %vm222, %v3051, %v3045
    %v3056 = vmul.f32 %v3055, %v229
    %v3057 = vmul.f32 %v3054, %v230
    %v3058 = vmul.f32 %v3053, %v231
    %v3059 = vmul.f32 %v3052, %v232
    %3060 = vrot.lane.b32.xlu0 %v3040, 16
    %v3061 = vpop.permute.xlu0 %3060
    %3062 = vrot.lane.b32.xlu0 %v3041, 16
    %v3063 = vpop.permute.xlu0 %3062
    %3064 = vrot.lane.b32.xlu0 %v3042, 16
    %v3065 = vpop.permute.xlu0 %3064
    %3066 = vrot.lane.b32.xlu0 %v3043, 16
    %v3067 = vpop.permute.xlu0 %3066
    %v3068 = vsel %vm249, %v3065, %v3067
    %v3069 = vsel %vm249, %v3063, %v3065
    %v3070 = vsel %vm249, %v3061, %v3063
    %v3071 = vsel %vm249, %v3067, %v3061
    %v3072 = vmul.f32 %v3071, %v257
    %v3073 = vmul.f32 %v3070, %v258
    %v3074 = vmul.f32 %v3069, %v259
    %v3075 = vmul.f32 %v3068, %v260
    %3076 = vrot.lane.b32.xlu0 %v3040, 15
    %v3077 = vpop.permute.xlu0 %3076
    %3078 = vrot.lane.b32.xlu0 %v3041, 15
    %v3079 = vpop.permute.xlu0 %3078
    %3080 = vrot.lane.b32.xlu0 %v3042, 15
    %v3081 = vpop.permute.xlu0 %3080
    %3082 = vrot.lane.b32.xlu0 %v3043, 15
    %v3083 = vpop.permute.xlu0 %3082
    %v3084 = vsel %vm277, %v3081, %v3083
    %v3085 = vsel %vm277, %v3079, %v3081
    %v3086 = vsel %vm277, %v3077, %v3079
    %v3087 = vsel %vm277, %v3083, %v3077
    %v3088 = vmul.f32 %v3087, %v285
    %v3089 = vmul.f32 %v3086, %v286
    %v3090 = vmul.f32 %v3085, %v287
    %v3091 = vmul.f32 %v3084, %v288
    %3092 = vrot.lane.b32.xlu0 %v3040, 1
    %v3093 = vpop.permute.xlu0 %3092
    %3094 = vrot.lane.b32.xlu0 %v3041, 1
    %v3095 = vpop.permute.xlu0 %3094
    %3096 = vrot.lane.b32.xlu0 %v3042, 1
    %v3097 = vpop.permute.xlu0 %3096
    %3098 = vrot.lane.b32.xlu0 %v3043, 1
    %v3099 = vpop.permute.xlu0 %3098
    %v3100 = vsel %vm305, %v3097, %v3099
    %v3101 = vsel %vm305, %v3095, %v3097
    %v3102 = vsel %vm305, %v3093, %v3095
    %v3103 = vsel %vm305, %v3099, %v3093
    %v3104 = vmul.f32 %v3103, %v313
    %v3105 = vmul.f32 %v3102, %v314
    %v3106 = vmul.f32 %v3101, %v315
    %v3107 = vmul.f32 %v3100, %v316
    %v3108 = vmul.f32 %v3040, %v328
    %v3109 = vmul.f32 %v3041, %v329
    %v3110 = vmul.f32 %v3042, %v330
    %v3111 = vmul.f32 %v3043, %v331
    %3112 = vrot.lane.b32.xlu0 %v3040, 127
    %v3113 = vpop.permute.xlu0 %3112
    %3114 = vrot.lane.b32.xlu0 %v3041, 127
    %v3115 = vpop.permute.xlu0 %3114
    %3116 = vrot.lane.b32.xlu0 %v3042, 127
    %v3117 = vpop.permute.xlu0 %3116
    %3118 = vrot.lane.b32.xlu0 %v3043, 127
    %v3119 = vpop.permute.xlu0 %3118
    %v3120 = vsel %vm348, %v3117, %v3119
    %v3121 = vsel %vm348, %v3115, %v3117
    %v3122 = vsel %vm348, %v3113, %v3115
    %v3123 = vsel %vm348, %v3119, %v3113
    %v3124 = vmul.f32 %v3122, %v356
    %v3125 = vmul.f32 %v3121, %v357
    %v3126 = vmul.f32 %v3120, %v358
    %v3127 = vmul.f32 %v3123, %v359
    %3128 = vrot.lane.b32.xlu0 %v3040, 113
    %v3129 = vpop.permute.xlu0 %3128
    %3130 = vrot.lane.b32.xlu0 %v3041, 113
    %v3131 = vpop.permute.xlu0 %3130
    %3132 = vrot.lane.b32.xlu0 %v3042, 113
    %v3133 = vpop.permute.xlu0 %3132
    %3134 = vrot.lane.b32.xlu0 %v3043, 113
    %v3135 = vpop.permute.xlu0 %3134
    %v3136 = vsel %vm376, %v3133, %v3135
    %v3137 = vsel %vm376, %v3131, %v3133
    %v3138 = vsel %vm376, %v3129, %v3131
    %v3139 = vsel %vm376, %v3135, %v3129
    %v3140 = vmul.f32 %v3138, %v384
    %v3141 = vmul.f32 %v3137, %v385
    %v3142 = vmul.f32 %v3136, %v386
    %v3143 = vmul.f32 %v3139, %v387
    %3144 = vrot.lane.b32.xlu0 %v3040, 112
    %v3145 = vpop.permute.xlu0 %3144
    %3146 = vrot.lane.b32.xlu0 %v3041, 112
    %v3147 = vpop.permute.xlu0 %3146
    %3148 = vrot.lane.b32.xlu0 %v3042, 112
    %v3149 = vpop.permute.xlu0 %3148
    %3150 = vrot.lane.b32.xlu0 %v3043, 112
    %v3151 = vpop.permute.xlu0 %3150
    %v3152 = vsel %vm404, %v3149, %v3151
    %v3153 = vsel %vm404, %v3147, %v3149
    %v3154 = vsel %vm404, %v3145, %v3147
    %v3155 = vsel %vm404, %v3151, %v3145
    %v3156 = vmul.f32 %v3154, %v412
    %v3157 = vmul.f32 %v3153, %v413
    %v3158 = vmul.f32 %v3152, %v414
    %v3159 = vmul.f32 %v3155, %v415
    %3160 = vrot.lane.b32.xlu0 %v3040, 111
    %v3161 = vpop.permute.xlu0 %3160
    %3162 = vrot.lane.b32.xlu0 %v3041, 111
    %v3163 = vpop.permute.xlu0 %3162
    %3164 = vrot.lane.b32.xlu0 %v3042, 111
    %v3165 = vpop.permute.xlu0 %3164
    %3166 = vrot.lane.b32.xlu0 %v3043, 111
    %v3167 = vpop.permute.xlu0 %3166
    %v3168 = vsel %vm432, %v3165, %v3167
    %v3169 = vsel %vm432, %v3163, %v3165
    %v3170 = vsel %vm432, %v3161, %v3163
    %v3171 = vsel %vm432, %v3167, %v3161
    %v3172 = vmul.f32 %v3170, %v440
    %v3173 = vmul.f32 %v3169, %v441
    %v3174 = vmul.f32 %v3168, %v442
    %v3175 = vmul.f32 %v3171, %v443
    %v3176 = vld [vmem:[%s81] sm:$0xff]
    %v3178 = vsel %vm453, %v3176, 0
    %3180 = vmatpush.msra.mxu0 0.0
    %3181 = vmatpush.msra.mxu0 0.0
    %3182 = vmatpush.msra.mxu0 0.0
    %3183 = vmatpush.msra.mxu0 0.0
    %3184 = vmatpush.msra.mxu0 0.0
    %3185 = vmatpush.msra.mxu0 0.0
    %3186 = vmatpush.msra.mxu0 0.0
    %3187 = vmatpush.msra.mxu0 %v3172
    %3188 = vmatpush.msra.mxu0 %v3156
    %3189 = vmatpush.msra.mxu0 %v3140
    %3190 = vmatpush.msra.mxu0 %v3124
    %3191 = vmatpush.msra.mxu0 %v3108
    %3192 = vmatpush.msra.mxu0 %v3104
    %3193 = vmatpush.msra.mxu0 %v3088
    %3194 = vmatpush.msra.mxu0 %v3072
    %3195 = vmatpush.msra.mxu0 %v3056
    %3196 = vmatmul.f32.gmra.mxu0 %v3178
    %v3197 = vpop.f32.mrf.mxu0
    %v3198 = vadd.f32 0.0, %v3197
    %3199 = vdwg.mxu0
    %3200 = vmatpush.msra.mxu0 0.0
    %3201 = vmatpush.msra.mxu0 0.0
    %3202 = vmatpush.msra.mxu0 0.0
    %3203 = vmatpush.msra.mxu0 0.0
    %3204 = vmatpush.msra.mxu0 0.0
    %3205 = vmatpush.msra.mxu0 0.0
    %3206 = vmatpush.msra.mxu0 0.0
    %3207 = vmatpush.msra.mxu0 %v3173
    %3208 = vmatpush.msra.mxu0 %v3157
    %3209 = vmatpush.msra.mxu0 %v3141
    %3210 = vmatpush.msra.mxu0 %v3125
    %3211 = vmatpush.msra.mxu0 %v3109
    %3212 = vmatpush.msra.mxu0 %v3105
    %3213 = vmatpush.msra.mxu0 %v3089
    %3214 = vmatpush.msra.mxu0 %v3073
    %3215 = vmatpush.msra.mxu0 %v3057
    %3216 = vmatmul.f32.gmra.mxu0 %v3178
    %v3217 = vpop.f32.mrf.mxu0
    %v3218 = vadd.f32 0.0, %v3217
    %3219 = vdwg.mxu0
    %3220 = vmatpush.msra.mxu0 0.0
    %3221 = vmatpush.msra.mxu0 0.0
    %3222 = vmatpush.msra.mxu0 0.0
    %3223 = vmatpush.msra.mxu0 0.0
    %3224 = vmatpush.msra.mxu0 0.0
    %3225 = vmatpush.msra.mxu0 0.0
    %3226 = vmatpush.msra.mxu0 0.0
    %3227 = vmatpush.msra.mxu0 %v3174
    %3228 = vmatpush.msra.mxu0 %v3158
    %3229 = vmatpush.msra.mxu0 %v3142
    %3230 = vmatpush.msra.mxu0 %v3126
    %3231 = vmatpush.msra.mxu0 %v3110
    %3232 = vmatpush.msra.mxu0 %v3106
    %3233 = vmatpush.msra.mxu0 %v3090
    %3234 = vmatpush.msra.mxu0 %v3074
    %3235 = vmatpush.msra.mxu0 %v3058
    %3236 = vmatmul.f32.gmra.mxu0 %v3178
    %v3237 = vpop.f32.mrf.mxu0
    %v3238 = vadd.f32 0.0, %v3237
    %3239 = vdwg.mxu0
    %3240 = vmatpush.msra.mxu0 0.0
    %3241 = vmatpush.msra.mxu0 0.0
    %3242 = vmatpush.msra.mxu0 0.0
    %3243 = vmatpush.msra.mxu0 0.0
    %3244 = vmatpush.msra.mxu0 0.0
    %3245 = vmatpush.msra.mxu0 0.0
    %3246 = vmatpush.msra.mxu0 0.0
    %3247 = vmatpush.msra.mxu0 %v3175
    %3248 = vmatpush.msra.mxu0 %v3159
    %3249 = vmatpush.msra.mxu0 %v3143
    %3250 = vmatpush.msra.mxu0 %v3127
    %3251 = vmatpush.msra.mxu0 %v3111
    %3252 = vmatpush.msra.mxu0 %v3107
    %3253 = vmatpush.msra.mxu0 %v3091
    %3254 = vmatpush.msra.mxu0 %v3075
    %3255 = vmatpush.msra.mxu0 %v3059
    %3256 = vmatmul.f32.gmra.mxu0 %v3178
    %v3257 = vpop.f32.mrf.mxu0
    %v3258 = vadd.f32 0.0, %v3257
    %3259 = vdwg.mxu0
    %v3260 = vld [vmem:[%s75] sm:$0xff]
    %3262 = vset.pattern.permute.xlu0 0
    %3263 = vperm.xlu0 %3262, %v3260
    %v3264 = vpop.permute.xlu0 %3263
    %v3266 = vmul.f32 %v3198, %v3264
    %v3267 = vmul.f32 %v3218, %v3264
    %v3268 = vmul.f32 %v3238, %v3264
    %v3269 = vmul.f32 %v3258, %v3264
    %v3270 = vld [vmem:[%s71] sm:$0xff]
    %3272 = vset.pattern.permute.xlu0 0
    %3273 = vperm.xlu0 %3272, %v3270
    %v3274 = vpop.permute.xlu0 %3273
    %v3276 = vadd.f32 %v3266, %v3274
    %v3277 = vadd.f32 %v3267, %v3274
    %v3278 = vadd.f32 %v3268, %v3274
    %v3279 = vadd.f32 %v3269, %v3274
    %v3280 = vmax.f32 %v3276, 0.0
    %v3281 = vmax.f32 %v3277, 0.0
    %v3282 = vmax.f32 %v3278, 0.0
    %v3283 = vmax.f32 %v3279, 0.0
    %v3284 = vld [vmem:[%s41] sm:$0x1]
    %v3285 = vld [vmem:[#allocation2] sm:$0x1]
    %3287 = vset.pattern.permute.xlu0 0
    %3288 = vperm.xlu0 %3287, %v3285
    %v3289 = vpop.permute.xlu0 %3288
    %v3291 = vperm.slane %v3289, 0
    %vm3292 = vcmask 64512
    %v3294 = vsel %vm3292, %v3284, 0
    %3296 = vmatpush.msra.mxu0 0.0
    %3297 = vmatpush.msra.mxu0 0.0
    %3298 = vmatpush.msra.mxu0 0.0
    %3299 = vmatpush.msra.mxu0 0.0
    %3300 = vmatpush.msra.mxu0 0.0
    %3301 = vmatpush.msra.mxu0 0.0
    %3302 = vmatpush.msra.mxu0 0.0
    %3303 = vmatpush.msra.mxu0 0.0
    %3304 = vmatpush.msra.mxu0 0.0
    %3305 = vmatpush.msra.mxu0 0.0
    %3306 = vmatpush.msra.mxu0 0.0
    %3307 = vmatpush.msra.mxu0 0.0
    %3308 = vmatpush.msra.mxu0 0.0
    %3309 = vmatpush.msra.mxu0 0.0
    %3310 = vmatpush.msra.mxu0 0.0
    %3311 = vmatpush.msra.mxu0 %v3280
    %3312 = vmatmul.f32.gmra.mxu0 %v3294
    %v3313 = vpop.f32.mrf.mxu0
    %v3314 = vadd.f32 %v3291, %v3313
    %3315 = vdwg.mxu0
    %3316 = vmatpush.msra.mxu0 0.0
    %3317 = vmatpush.msra.mxu0 0.0
    %3318 = vmatpush.msra.mxu0 0.0
    %3319 = vmatpush.msra.mxu0 0.0
    %3320 = vmatpush.msra.mxu0 0.0
    %3321 = vmatpush.msra.mxu0 0.0
    %3322 = vmatpush.msra.mxu0 0.0
    %3323 = vmatpush.msra.mxu0 0.0
    %3324 = vmatpush.msra.mxu0 0.0
    %3325 = vmatpush.msra.mxu0 0.0
    %3326 = vmatpush.msra.mxu0 0.0
    %3327 = vmatpush.msra.mxu0 0.0
    %3328 = vmatpush.msra.mxu0 0.0
    %3329 = vmatpush.msra.mxu0 0.0
    %3330 = vmatpush.msra.mxu0 0.0
    %3331 = vmatpush.msra.mxu0 %v3281
    %3332 = vmatmul.f32.gmra.mxu0 %v3294
    %v3333 = vpop.f32.mrf.mxu0
    %v3334 = vadd.f32 %v3291, %v3333
    %3335 = vdwg.mxu0
    %3336 = vmatpush.msra.mxu0 0.0
    %3337 = vmatpush.msra.mxu0 0.0
    %3338 = vmatpush.msra.mxu0 0.0
    %3339 = vmatpush.msra.mxu0 0.0
    %3340 = vmatpush.msra.mxu0 0.0
    %3341 = vmatpush.msra.mxu0 0.0
    %3342 = vmatpush.msra.mxu0 0.0
    %3343 = vmatpush.msra.mxu0 0.0
    %3344 = vmatpush.msra.mxu0 0.0
    %3345 = vmatpush.msra.mxu0 0.0
    %3346 = vmatpush.msra.mxu0 0.0
    %3347 = vmatpush.msra.mxu0 0.0
    %3348 = vmatpush.msra.mxu0 0.0
    %3349 = vmatpush.msra.mxu0 0.0
    %3350 = vmatpush.msra.mxu0 0.0
    %3351 = vmatpush.msra.mxu0 %v3282
    %3352 = vmatmul.f32.gmra.mxu0 %v3294
    %v3353 = vpop.f32.mrf.mxu0
    %v3354 = vadd.f32 %v3291, %v3353
    %3355 = vdwg.mxu0
    %3356 = vmatpush.msra.mxu0 0.0
    %3357 = vmatpush.msra.mxu0 0.0
    %3358 = vmatpush.msra.mxu0 0.0
    %3359 = vmatpush.msra.mxu0 0.0
    %3360 = vmatpush.msra.mxu0 0.0
    %3361 = vmatpush.msra.mxu0 0.0
    %3362 = vmatpush.msra.mxu0 0.0
    %3363 = vmatpush.msra.mxu0 0.0
    %3364 = vmatpush.msra.mxu0 0.0
    %3365 = vmatpush.msra.mxu0 0.0
    %3366 = vmatpush.msra.mxu0 0.0
    %3367 = vmatpush.msra.mxu0 0.0
    %3368 = vmatpush.msra.mxu0 0.0
    %3369 = vmatpush.msra.mxu0 0.0
    %3370 = vmatpush.msra.mxu0 0.0
    %3371 = vmatpush.msra.mxu0 %v3283
    %3372 = vmatmul.f32.gmra.mxu0 %v3294
    %v3373 = vpop.f32.mrf.mxu0
    %v3374 = vadd.f32 %v3291, %v3373
    %3375 = vdwg.mxu0
    %v3380 = vrot.slane %v3334, 7
    %v3381 = vrot.slane %v3354, 6
    %v3382 = vrot.slane %v3374, 5
    %vm3383 = vcmask 1040384
    %v3384 = vsel %vm3383, %v3314, %v3380
    %vm3385 = vcmask 1042434
    %v3386 = vsel %vm3385, %v3381, %v3382
    %vm3387 = vcmask 1041408
    %v3388 = vsel %vm3387, %v3384, %v3386
    %v3390 = vlaneseq
    %vm3391 = vcmp.ge.s32.totalorder %v3390, 0
    %vm3392 = vcmp.lt.s32.totalorder %v3390, 512
    %vm3393 = vmand %vm3391, %vm3392
    %3394 = vst.msk [vmem:[%s85] sm:$0xf] %vm3393, %v3388
    // Predicated region
    $region178: #{multi_depth_unet_forward.1} parent=1 // pred_check
      _
    $region179: #{multi_depth_unet_forward.1} parent=1 // pred_check_branch
      %3396 = sbr.rel (0) target = $region181
    $region180: #{multi_depth_unet_forward.1} parent=1 // pred_region
      _
    $region181: #{multi_depth_unet_forward.1} parent=1 // pred_fallthru
      _
    // Predicated region
    $region182: #{multi_depth_unet_forward.1} parent=1 // pred_check
      _
    $region183: #{multi_depth_unet_forward.1} parent=1 // pred_check_branch
      %3398 = sbr.rel (0) target = $region185
    $region184: #{multi_depth_unet_forward.1} parent=1 // pred_region
      _
    $region185: #{multi_depth_unet_forward.1} parent=1 // pred_fallthru
      _
    %3399 = vsyncpa [#allocation4], 1
    %3400 = vsyncpa [#allocation6], 1

</llo_original>
